<compile_context>
chip_gen: v7x
topology: tpu7x:2x2x1
jax: 0.10.0
libtpu: 0.0.40
codegen_flags: <defaults>
</compile_context>

<pallas_src>
import functools

import numpy as np
import jax
import jax.numpy as jnp
from jax.experimental import pallas as pl
from jax.experimental.pallas import tpu as pltpu


BN_EPS = 1e-3
C_PAD = 128      # every channel dim is zero-padded to one lane width
K_PAD = 128      # padded im2col K for the first conv (9 real taps)


# ----------------------------- small helpers --------------------------------

def _make_divisible(v, divisor=8, min_value=None):
    if min_value is None:
        min_value = divisor
    new_v = max(min_value, int(v + divisor / 2) // divisor * divisor)
    if new_v < 0.9 * v:
        new_v += divisor
    return new_v


def _hardswish(x):
    return x * jnp.clip(x / 6.0 + 0.5, 0.0, 1.0)


def _hardsigmoid(x):
    return jnp.clip(x / 6.0 + 0.5, 0.0, 1.0)


def _act(x, kind):
    if kind == "relu":
        return jnp.maximum(x, 0.0)
    if kind == "hardswish":
        return _hardswish(x)
    if kind == "none":
        return x
    raise ValueError(kind)


def _dot_bf16(x, w):
    # bf16 MXU operands (native on v5e/v6e/v7x), f32 accumulation.
    return jnp.dot(x.astype(jnp.bfloat16), w, preferred_element_type=jnp.float32)


# ------------------------ model config (small demo) --------------------------

CNFS = [
    dict(in_ch=8, exp_ch=16, out_ch=8, use_se=True, use_hs=True, stride=1),
    dict(in_ch=8, exp_ch=16, out_ch=16, use_se=False, use_hs=False, stride=2),
]
LAST_CH_OUT = 6 * CNFS[-1]["out_ch"]          # lastconv_output_channels = 96


# --------------------------- fused Pallas kernel ------------------------------

def _mobilenetv3_kernel(cnfs, b_blk, h0, w0, pw_pad,
                        xcol_ref, matw_ref, bias_ref, dww_ref, *rest):
    """Whole MobileNetV3 forward for B_BLK batch elements, fully VMEM-resident.

    Inputs (slabs):
      xcol_ref : (b_blk, h0*w0, K_PAD) bf16   im2col patches of the first conv
      matw_ref : (n_mat, 128, 128)     bf16   all 1x1-style matmul weights
      bias_ref : (n_bias, 128)         f32    all folded-BN / conv biases
      dww_ref  : (n_dw, 9, 128)        f32    depthwise 3x3 weights
      rest     : [sel_k ...] (one per stride-2 block, f32 block-diag 0/1),
                 o_ref (b_blk, 128) f32, pad_scr VMEM scratch
    """
    n_sel = sum(1 for c in cnfs if c["stride"] == 2)
    sel_refs = rest[:n_sel]
    o_ref = rest[n_sel]
    pad_scr = rest[n_sel + 1]          # (b_blk, ph_max+2, pw_pad, C_PAD) f32

    mi = bi = di = si = 0              # static python indices into the slabs

    # ---- features[0]: Conv2d(1, c0, k=3, s=2, p=1) + BN(folded) + Hardswish ----
    # One lane-dense (b*h0*w0, 128) x (128, 128) MXU matmul over im2col patches.
    x = jnp.dot(xcol_ref[...].reshape(b_blk * h0 * w0, K_PAD), matw_ref[mi],
                preferred_element_type=jnp.float32)
    x = _act(x + bias_ref[bi][None, :], "hardswish")
    mi += 1
    bi += 1

    ph, pw = h0, w0
    zeroed = None                       # spatial size whose borders are zeroed
    for cnf in cnfs:
        kind = "hardswish" if cnf["use_hs"] else "relu"
        s = cnf["stride"]
        oh, ow = (ph - 1) // s + 1, (pw - 1) // s + 1
        x_in = x                        # (b*ph*pw, C_PAD)

        # -- expand 1x1 + BN(folded) + act : 128-wide bf16 MXU matmul --
        if cnf["exp_ch"] != cnf["in_ch"]:
            x = _act(_dot_bf16(x, matw_ref[mi]) + bias_ref[bi][None, :], kind)
            mi += 1
            bi += 1

        # -- depthwise 3x3 + BN(folded) + act (vectorized over batch+spatial) --
        # Only the 1-element border of the pad buffer must be zero; the interior
        # is always overwritten.  Borders are re-zeroed only when the spatial
        # size changes (per-grid-step safe; no cross-step state).
        if zeroed != (ph, pw):
            z_row = jnp.zeros((b_blk, 1, pw_pad, C_PAD), jnp.float32)
            pad_scr[:, 0:1, :, :] = z_row
            pad_scr[:, ph + 1:ph + 2, :, :] = z_row
            z_col = jnp.zeros((b_blk, ph, 1, C_PAD), jnp.float32)
            pad_scr[:, 1:ph + 1, 0:1, :] = z_col
            pad_scr[:, 1:ph + 1, pw + 1:pw + 2, :] = z_col
            zeroed = (ph, pw)
        pad_scr[:, 1:ph + 1, 1:pw + 1, :] = x.reshape(b_blk, ph, pw, C_PAD)

        d = jnp.zeros((b_blk, ph, pw, C_PAD), jnp.float32)
        for kh in range(3):
            for kw in range(3):
                d = d + (pad_scr[:, kh:kh + ph, kw:kw + pw, :]
                         * dww_ref[di, kh * 3 + kw, :][None, None, None, :])
        d = _act(d + bias_ref[bi][None, None, None, :], kind)
        bi += 1
        di += 1

        x = d.reshape(b_blk * ph * pw, C_PAD)
        if s == 2:
            # Stride folded in after the dense 9-tap conv: one small block-
            # diagonal 0/1 selection matmul picks the (oh, ow) grid (lane-dense,
            # replaces the old per-pixel scalar loops + dw_scr scratch).
            x = jnp.dot(sel_refs[si][...], x, preferred_element_type=jnp.float32)
            si += 1

        # -- fused SqueezeExcitation: avgpool -> fc1 -> ReLU -> fc2 -> Hardsigmoid --
        if cnf["use_se"]:
            x3 = x.reshape(b_blk, oh * ow, C_PAD)
            se = jnp.mean(x3, axis=1)                                   # (b, C)
            se = jnp.maximum(_dot_bf16(se, matw_ref[mi]) + bias_ref[bi][None, :], 0.0)
            mi += 1
            bi += 1
            se = _hardsigmoid(_dot_bf16(se, matw_ref[mi]) + bias_ref[bi][None, :])
            mi += 1
            bi += 1
            x = (x3 * se[:, None, :]).reshape(b_blk * oh * ow, C_PAD)

        # -- project 1x1 + BN(folded), no activation; then residual --
        x = _dot_bf16(x, matw_ref[mi]) + bias_ref[bi][None, :]
        mi += 1
        bi += 1
        if s == 1 and cnf["in_ch"] == cnf["out_ch"]:
            x = x + x_in
        ph, pw = oh, ow

    # ---- last Conv2dNormActivation (1x1 + BN + Hardswish), fused with the head ----
    z = _act(_dot_bf16(x, matw_ref[mi]) + bias_ref[bi][None, :], "hardswish")

    # ---- head (classifier = nn.Identity()): mean over H, then max(W) + mean(W) ----
    z4 = z.reshape(b_blk, ph, pw, C_PAD)
    col = jnp.mean(z4, axis=1)                                   # (b, pw, C)
    o_ref[...] = jnp.max(col, axis=1) + jnp.mean(col, axis=1)    # (b, C)


# --------------------------- parameters (padded) ------------------------------

def _fold_bn(w, cout):
    # BN(eval) with torch init: gamma=1, beta=0, running_mean=0, running_var=1.
    gamma = jnp.ones((cout,), jnp.float32)
    beta = jnp.zeros((cout,), jnp.float32)
    mean = jnp.zeros((cout,), jnp.float32)
    var = jnp.ones((cout,), jnp.float32)
    scale = gamma / jnp.sqrt(var + BN_EPS)
    return w * scale, beta - mean * scale


def _pad_mat(w):                                   # (cin, cout) -> (C_PAD, C_PAD)
    return jnp.zeros((C_PAD, C_PAD), jnp.float32).at[:w.shape[0], :w.shape[1]].set(w)


def _pad_rows(w):                                  # (r, cout) -> (r, C_PAD)
    return jnp.zeros((w.shape[0], C_PAD), jnp.float32).at[:, :w.shape[1]].set(w)


def _pad_vec(b):                                   # (c,) -> (C_PAD,)
    return jnp.zeros((C_PAD,), jnp.float32).at[:b.shape[0]].set(b)


def init_params(key):
    def kaiming(k, shape, fan_out):
        return jax.random.normal(k, shape, jnp.float32) * jnp.sqrt(2.0 / fan_out)

    keys = iter(jax.random.split(key, 64))
    params = {}

    c0 = CNFS[0]["in_ch"]
    w, b = _fold_bn(kaiming(next(keys), (9, c0), fan_out=c0 * 9), c0)
    params["first_w"] = jnp.zeros((K_PAD, C_PAD), jnp.float32).at[:9, :c0].set(w)
    params["first_b"] = _pad_vec(b)

    blocks = []
    for cnf in CNFS:
        p = {}
        cin, cexp, cout = cnf["in_ch"], cnf["exp_ch"], cnf["out_ch"]
        if cexp != cin:
            w, b = _fold_bn(kaiming(next(keys), (cin, cexp), fan_out=cexp), cexp)
            p["exp_w"], p["exp_b"] = _pad_mat(w), _pad_vec(b)
        w, b = _fold_bn(kaiming(next(keys), (9, cexp), fan_out=9), cexp)
        p["dw_w"], p["dw_b"] = _pad_rows(w), _pad_vec(b)
        if cnf["use_se"]:
            csq = _make_divisible(cexp // 4, 8)
            p["se_w1"] = _pad_mat(kaiming(next(keys), (cexp, csq), fan_out=csq))
            p["se_b1"] = _pad_vec(jnp.zeros((csq,), jnp.float32))   # torch: zeros_ bias
            p["se_w2"] = _pad_mat(kaiming(next(keys), (csq, cexp), fan_out=cexp))
            p["se_b2"] = _pad_vec(jnp.zeros((cexp,), jnp.float32))
        w, b = _fold_bn(kaiming(next(keys), (cexp, cout), fan_out=cout), cout)
        p["proj_w"], p["proj_b"] = _pad_mat(w), _pad_vec(b)
        blocks.append(p)
    params["blocks"] = blocks

    w, b = _fold_bn(kaiming(next(keys), (CNFS[-1]["out_ch"], LAST_CH_OUT),
                            fan_out=LAST_CH_OUT), LAST_CH_OUT)
    params["last_w"], params["last_b"] = _pad_mat(w), _pad_vec(b)
    return params


def _pack_params(params):
    """Collapse all weights into 3 slabs, in the kernel's consumption order."""
    mats, biases, dws = [], [], []
    mats.append(params["first_w"]); biases.append(params["first_b"])
    for p, cnf in zip(params["blocks"], CNFS):
        if cnf["exp_ch"] != cnf["in_ch"]:
            mats.append(p["exp_w"]); biases.append(p["exp_b"])
        dws.append(p["dw_w"]); biases.append(p["dw_b"])
        if cnf["use_se"]:
            mats.append(p["se_w1"]); biases.append(p["se_b1"])
            mats.append(p["se_w2"]); biases.append(p["se_b2"])
        mats.append(p["proj_w"]); biases.append(p["proj_b"])
    mats.append(params["last_w"]); biases.append(params["last_b"])
    matw = jnp.stack(mats).astype(jnp.bfloat16)        # (n_mat, 128, 128)
    bias = jnp.stack(biases)                           # (n_bias, 128) f32
    dww = jnp.stack(dws)                               # (n_dw, 9, 128) f32
    return matw, bias, dww


def _make_sel(b_blk, ph, pw, s):
    """Block-diagonal 0/1 selection: (b*oh*ow, b*ph*pw) stride-s subsample."""
    oh, ow = (ph - 1) // s + 1, (pw - 1) // s + 1
    m_out, m_in = b_blk * oh * ow, b_blk * ph * pw
    r = np.arange(m_out)
    b = r // (oh * ow)
    p = r % (oh * ow)
    tgt = b * (ph * pw) + (p // ow) * (s * pw) + (p % ow) * s
    sel = np.zeros((m_out, m_in), np.float32)
    sel[np.arange(m_out), tgt] = 1.0
    return jnp.asarray(sel)


# -------------------------------- forward -------------------------------------

def mobilenetv3_forward(params, x_nchw, b_blk=None):
    n, c_in, hin, win = x_nchw.shape
    assert c_in == 1, "first conv is Conv2d(1, c0, k=3, s=2, p=1)"
    h0 = (hin + 2 - 3) // 2 + 1
    w0 = (win + 2 - 3) // 2 + 1

    if b_blk is None:
        b_blk = n if n <= 8 else 8            # batch-block the grid (review item)
    n_pad = (-(-n // b_blk)) * b_blk

    # -- host-side im2col for the first conv (pure XLA data movement) --
    xp = jnp.pad(x_nchw[:, 0].astype(jnp.float32), ((0, 0), (1, 1), (1, 1)))
    taps = [xp[:, kh:kh + 2 * h0:2, kw:kw + 2 * w0:2]
            for kh in range(3) for kw in range(3)]
    xcol = jnp.stack(taps, axis=-1).reshape(n, h0 * w0, 9)
    xcol = jnp.pad(xcol, ((0, n_pad - n), (0, 0), (0, K_PAD - 9))).astype(jnp.bfloat16)

    matw, bias, dww = _pack_params(params)

    # per-block spatial sizes + subsample selection matrices for stride-2 blocks
    sels, dw_shapes = [], []
    ph, pw = h0, w0
    for cnf in CNFS:
        dw_shapes.append((ph, pw))
        s = cnf["stride"]
        if s == 2:
            sels.append(_make_sel(b_blk, ph, pw, s))
        ph, pw = (ph - 1) // s + 1, (pw - 1) // s + 1
    ph_max = max(p for p, _ in dw_shapes)
    pw_max = max(q for _, q in dw_shapes)
    pw_pad = (-(-(pw_max + 2) // 8)) * 8       # sublane-aligned pad-buffer width

    args = [xcol, matw, bias, dww, *sels]

    def const_spec(a):                          # grid-invariant slab
        return pl.BlockSpec(a.shape, lambda i, nd=a.ndim: (0,) * nd)

    in_specs = [pl.BlockSpec((b_blk, h0 * w0, K_PAD), lambda i: (i, 0, 0))]
    in_specs += [const_spec(a) for a in args[1:]]

    out = pl.pallas_call(
        functools.partial(_mobilenetv3_kernel, CNFS, b_blk, h0, w0, pw_pad),
        out_shape=jax.ShapeDtypeStruct((n_pad, C_PAD), jnp.float32),
        grid_spec=pltpu.PrefetchScalarGridSpec(
            num_scalar_prefetch=0,
            grid=(n_pad // b_blk,),
            in_specs=in_specs,
            out_specs=pl.BlockSpec((b_blk, C_PAD), lambda i: (i, 0)),
            scratch_shapes=[
                pltpu.VMEM((b_blk, ph_max + 2, pw_pad, C_PAD), jnp.float32),
            ]),
        compiler_params=pltpu.CompilerParams(
            dimension_semantics=("parallel",),          # batch-blocks across TCs
            vmem_limit_bytes=32 * 1024 * 1024),         # usage ~1 MiB at demo shapes
    )(*args)

    # drop batch padding and the zero-padded channel lanes (exact math)
    return out[:n, :LAST_CH_OUT]


if __name__ == "__main__":
    key = jax.random.PRNGKey(0)
    pkey, xkey = jax.random.split(key)
    params = init_params(pkey)
    # Input is NCHW with 1 channel (first conv is Conv2d(1, c0, k=3, s=2, p=1)).
    x = jax.random.normal(xkey, (2, 1, 16, 16), jnp.float32)
    out = jax.jit(mobilenetv3_forward)(params, x)
    jax.block_until_ready(out)
    assert out.shape == (2, LAST_CH_OUT) and out.dtype == jnp.float32
    print("KERNEL_OK")
</pallas_src>

<mosaic_0001>
module attributes {stable_mosaic.version = 11 : i64} {
  func.func @_mobilenetv3_kernel(%arg0: i32, %arg1: memref<2x64x128xbf16, #tpu.memory_space<vmem>>, %arg2: memref<8x128x128xbf16, #tpu.memory_space<vmem>>, %arg3: memref<10x128xf32, #tpu.memory_space<vmem>>, %arg4: memref<2x9x128xf32, #tpu.memory_space<vmem>>, %arg5: memref<32x128xf32, #tpu.memory_space<vmem>>, %arg6: memref<2x128xf32, #tpu.memory_space<vmem>>, %arg7: memref<2x10x16x128xf32, #tpu.memory_space<vmem>>) attributes {dimension_semantics = [#tpu.dimension_semantics<parallel>], iteration_bounds = array<i64: 1>, scalar_prefetch = 0 : i64, scratch_operands = 1 : i64, tpu.core_type = #tpu.core_type<tc>, window_params = [{transform_indices = @transform_0, window_bounds = array<i64: 2, 64, 128>}, {pipeline_mode = #tpu.pipeline_mode<synchronous>, transform_indices = @transform_1, window_bounds = array<i64: 8, 128, 128>}, {pipeline_mode = #tpu.pipeline_mode<synchronous>, transform_indices = @transform_2, window_bounds = array<i64: 10, 128>}, {pipeline_mode = #tpu.pipeline_mode<synchronous>, transform_indices = @transform_3, window_bounds = array<i64: 2, 9, 128>}, {pipeline_mode = #tpu.pipeline_mode<synchronous>, transform_indices = @transform_4, window_bounds = array<i64: 32, 128>}, {transform_indices = @transform_5, window_bounds = array<i64: 2, 128>}]} {
    %c0 = arith.constant 0 : index
    %c0_0 = arith.constant 0 : index
    %c0_1 = arith.constant 0 : index
    %0 = vector.load %arg1[%c0, %c0_0, %c0_1] : memref<2x64x128xbf16, #tpu.memory_space<vmem>>, vector<2x64x128xbf16>
    %1 = vector.shape_cast %0 : vector<2x64x128xbf16> to vector<128x128xbf16>
    %c0_2 = arith.constant 0 : index
    %c0_3 = arith.constant 0 : index
    %c0_4 = arith.constant 0 : index
    %2 = vector.load %arg2[%c0_2, %c0_3, %c0_4] : memref<8x128x128xbf16, #tpu.memory_space<vmem>>, vector<1x128x128xbf16>
    %3 = vector.shape_cast %2 : vector<1x128x128xbf16> to vector<128x128xbf16>
    %cst = arith.constant dense<0.000000e+00> : vector<128x128xf32>
    %4 = tpu.matmul %1, %3, %cst {dimension_numbers = #tpu.dot_dimension_numbers<[1], [0], [0], [1], [0, 0, 1, 1], [], []>} : vector<128x128xbf16>, vector<128x128xbf16>, vector<128x128xf32> -> vector<128x128xf32>
    %c0_5 = arith.constant 0 : index
    %c0_6 = arith.constant 0 : index
    %5 = vector.load %arg3[%c0_5, %c0_6] : memref<10x128xf32, #tpu.memory_space<vmem>>, vector<1x128xf32>
    %6 = vector.shape_cast %5 : vector<1x128xf32> to vector<128xf32>
    %7 = vector.shape_cast %6 : vector<128xf32> to vector<1x128xf32>
    %8 = vector.broadcast %7 : vector<1x128xf32> to vector<128x128xf32>
    %9 = arith.addf %4, %8 : vector<128x128xf32>
    %cst_7 = arith.constant 6.000000e+00 : f32
    %10 = vector.broadcast %cst_7 : f32 to vector<128x128xf32>
    %11 = arith.divf %9, %10 : vector<128x128xf32>
    %cst_8 = arith.constant 5.000000e-01 : f32
    %12 = vector.broadcast %cst_8 : f32 to vector<128x128xf32>
    %13 = arith.addf %11, %12 : vector<128x128xf32>
    %cst_9 = arith.constant 0.000000e+00 : f32
    %cst_10 = arith.constant 1.000000e+00 : f32
    %14 = vector.broadcast %cst_9 : f32 to vector<128x128xf32>
    %15 = arith.maximumf %14, %13 : vector<128x128xf32>
    %16 = vector.broadcast %cst_10 : f32 to vector<128x128xf32>
    %17 = arith.minimumf %16, %15 : vector<128x128xf32>
    %18 = arith.mulf %9, %17 : vector<128x128xf32>
    %c1 = arith.constant 1 : index
    %c0_11 = arith.constant 0 : index
    %c0_12 = arith.constant 0 : index
    %19 = vector.load %arg2[%c1, %c0_11, %c0_12] : memref<8x128x128xbf16, #tpu.memory_space<vmem>>, vector<1x128x128xbf16>
    %20 = vector.shape_cast %19 : vector<1x128x128xbf16> to vector<128x128xbf16>
    %21 = arith.truncf %18 : vector<128x128xf32> to vector<128x128xbf16>
    %cst_13 = arith.constant dense<0.000000e+00> : vector<128x128xf32>
    %22 = tpu.matmul %21, %20, %cst_13 {dimension_numbers = #tpu.dot_dimension_numbers<[1], [0], [0], [1], [0, 0, 1, 1], [], []>} : vector<128x128xbf16>, vector<128x128xbf16>, vector<128x128xf32> -> vector<128x128xf32>
    %c1_14 = arith.constant 1 : index
    %c0_15 = arith.constant 0 : index
    %23 = vector.load %arg3[%c1_14, %c0_15] : memref<10x128xf32, #tpu.memory_space<vmem>>, vector<1x128xf32>
    %24 = vector.shape_cast %23 : vector<1x128xf32> to vector<128xf32>
    %25 = vector.shape_cast %24 : vector<128xf32> to vector<1x128xf32>
    %26 = vector.broadcast %25 : vector<1x128xf32> to vector<128x128xf32>
    %27 = arith.addf %22, %26 : vector<128x128xf32>
    %cst_16 = arith.constant 6.000000e+00 : f32
    %28 = vector.broadcast %cst_16 : f32 to vector<128x128xf32>
    %29 = arith.divf %27, %28 : vector<128x128xf32>
    %cst_17 = arith.constant 5.000000e-01 : f32
    %30 = vector.broadcast %cst_17 : f32 to vector<128x128xf32>
    %31 = arith.addf %29, %30 : vector<128x128xf32>
    %cst_18 = arith.constant 0.000000e+00 : f32
    %cst_19 = arith.constant 1.000000e+00 : f32
    %32 = vector.broadcast %cst_18 : f32 to vector<128x128xf32>
    %33 = arith.maximumf %32, %31 : vector<128x128xf32>
    %34 = vector.broadcast %cst_19 : f32 to vector<128x128xf32>
    %35 = arith.minimumf %34, %33 : vector<128x128xf32>
    %36 = arith.mulf %27, %35 : vector<128x128xf32>
    %cst_20 = arith.constant 0.000000e+00 : f32
    %37 = vector.broadcast %cst_20 : f32 to vector<2x1x16x128xf32>
    %c0_21 = arith.constant 0 : index
    %c0_22 = arith.constant 0 : index
    %c0_23 = arith.constant 0 : index
    %c0_24 = arith.constant 0 : index
    %38 = vector.load %arg7[%c0_21, %c0_22, %c0_23, %c0_24] : memref<2x10x16x128xf32, #tpu.memory_space<vmem>>, vector<2x1x16x128xf32>
    tpu.vector_store %arg7[%c0_21, %c0_22, %c0_23, %c0_24], %37 {strides = array<i32>} : memref<2x10x16x128xf32, #tpu.memory_space<vmem>>, vector<2x1x16x128xf32>,
    %c0_25 = arith.constant 0 : index
    %c9 = arith.constant 9 : index
    %c0_26 = arith.constant 0 : index
    %c0_27 = arith.constant 0 : index
    %39 = vector.load %arg7[%c0_25, %c9, %c0_26, %c0_27] : memref<2x10x16x128xf32, #tpu.memory_space<vmem>>, vector<2x1x16x128xf32>
    tpu.vector_store %arg7[%c0_25, %c9, %c0_26, %c0_27], %37 {strides = array<i32>} : memref<2x10x16x128xf32, #tpu.memory_space<vmem>>, vector<2x1x16x128xf32>,
    %cst_28 = arith.constant 0.000000e+00 : f32
    %40 = vector.broadcast %cst_28 : f32 to vector<2x8x1x128xf32>
    %c0_29 = arith.constant 0 : index
    %c1_30 = arith.constant 1 : index
    %c0_31 = arith.constant 0 : index
    %c0_32 = arith.constant 0 : index
    %41 = vector.load %arg7[%c0_29, %c1_30, %c0_31, %c0_32] : memref<2x10x16x128xf32, #tpu.memory_space<vmem>>, vector<2x8x1x128xf32>
    tpu.vector_store %arg7[%c0_29, %c1_30, %c0_31, %c0_32], %40 {strides = array<i32>} : memref<2x10x16x128xf32, #tpu.memory_space<vmem>>, vector<2x8x1x128xf32>,
    %c0_33 = arith.constant 0 : index
    %c1_34 = arith.constant 1 : index
    %c9_35 = arith.constant 9 : index
    %c0_36 = arith.constant 0 : index
    %42 = vector.load %arg7[%c0_33, %c1_34, %c9_35, %c0_36] : memref<2x10x16x128xf32, #tpu.memory_space<vmem>>, vector<2x8x1x128xf32>
    tpu.vector_store %arg7[%c0_33, %c1_34, %c9_35, %c0_36], %40 {strides = array<i32>} : memref<2x10x16x128xf32, #tpu.memory_space<vmem>>, vector<2x8x1x128xf32>,
    %43 = vector.shape_cast %36 : vector<128x128xf32> to vector<2x8x8x128xf32>
    %c0_37 = arith.constant 0 : index
    %c1_38 = arith.constant 1 : index
    %c1_39 = arith.constant 1 : index
    %c0_40 = arith.constant 0 : index
    %44 = vector.load %arg7[%c0_37, %c1_38, %c1_39, %c0_40] : memref<2x10x16x128xf32, #tpu.memory_space<vmem>>, vector<2x8x8x128xf32>
    tpu.vector_store %arg7[%c0_37, %c1_38, %c1_39, %c0_40], %43 {strides = array<i32>} : memref<2x10x16x128xf32, #tpu.memory_space<vmem>>, vector<2x8x8x128xf32>,
    %cst_41 = arith.constant 0.000000e+00 : f32
    %45 = vector.broadcast %cst_41 : f32 to vector<2x8x8x128xf32>
    %c0_42 = arith.constant 0 : index
    %c0_43 = arith.constant 0 : index
    %c0_44 = arith.constant 0 : index
    %c0_45 = arith.constant 0 : index
    %46 = vector.load %arg7[%c0_42, %c0_43, %c0_44, %c0_45] : memref<2x10x16x128xf32, #tpu.memory_space<vmem>>, vector<2x8x8x128xf32>
    %c0_46 = arith.constant 0 : index
    %c0_47 = arith.constant 0 : index
    %c0_48 = arith.constant 0 : index
    %47 = vector.load %arg4[%c0_46, %c0_47, %c0_48] : memref<2x9x128xf32, #tpu.memory_space<vmem>>, vector<1x1x128xf32>
    %48 = vector.shape_cast %47 : vector<1x1x128xf32> to vector<128xf32>
    %49 = vector.shape_cast %48 : vector<128xf32> to vector<1x1x1x128xf32>
    %50 = vector.broadcast %49 : vector<1x1x1x128xf32> to vector<2x8x8x128xf32>
    %51 = arith.mulf %46, %50 : vector<2x8x8x128xf32>
    %52 = arith.addf %45, %51 : vector<2x8x8x128xf32>
    %c0_49 = arith.constant 0 : index
    %c0_50 = arith.constant 0 : index
    %c1_51 = arith.constant 1 : index
    %c0_52 = arith.constant 0 : index
    %53 = vector.load %arg7[%c0_49, %c0_50, %c1_51, %c0_52] : memref<2x10x16x128xf32, #tpu.memory_space<vmem>>, vector<2x8x8x128xf32>
    %c0_53 = arith.constant 0 : index
    %c1_54 = arith.constant 1 : index
    %c0_55 = arith.constant 0 : index
    %54 = vector.load %arg4[%c0_53, %c1_54, %c0_55] : memref<2x9x128xf32, #tpu.memory_space<vmem>>, vector<1x1x128xf32>
    %55 = vector.shape_cast %54 : vector<1x1x128xf32> to vector<128xf32>
    %56 = vector.shape_cast %55 : vector<128xf32> to vector<1x1x1x128xf32>
    %57 = vector.broadcast %56 : vector<1x1x1x128xf32> to vector<2x8x8x128xf32>
    %58 = arith.mulf %53, %57 : vector<2x8x8x128xf32>
    %59 = arith.addf %52, %58 : vector<2x8x8x128xf32>
    %c0_56 = arith.constant 0 : index
    %c0_57 = arith.constant 0 : index
    %c2 = arith.constant 2 : index
    %c0_58 = arith.constant 0 : index
    %60 = vector.load %arg7[%c0_56, %c0_57, %c2, %c0_58] : memref<2x10x16x128xf32, #tpu.memory_space<vmem>>, vector<2x8x8x128xf32>
    %c0_59 = arith.constant 0 : index
    %c2_60 = arith.constant 2 : index
    %c0_61 = arith.constant 0 : index
    %61 = vector.load %arg4[%c0_59, %c2_60, %c0_61] : memref<2x9x128xf32, #tpu.memory_space<vmem>>, vector<1x1x128xf32>
    %62 = vector.shape_cast %61 : vector<1x1x128xf32> to vector<128xf32>
    %63 = vector.shape_cast %62 : vector<128xf32> to vector<1x1x1x128xf32>
    %64 = vector.broadcast %63 : vector<1x1x1x128xf32> to vector<2x8x8x128xf32>
    %65 = arith.mulf %60, %64 : vector<2x8x8x128xf32>
    %66 = arith.addf %59, %65 : vector<2x8x8x128xf32>
    %c0_62 = arith.constant 0 : index
    %c1_63 = arith.constant 1 : index
    %c0_64 = arith.constant 0 : index
    %c0_65 = arith.constant 0 : index
    %67 = vector.load %arg7[%c0_62, %c1_63, %c0_64, %c0_65] : memref<2x10x16x128xf32, #tpu.memory_space<vmem>>, vector<2x8x8x128xf32>
    %c0_66 = arith.constant 0 : index
    %c3 = arith.constant 3 : index
    %c0_67 = arith.constant 0 : index
    %68 = vector.load %arg4[%c0_66, %c3, %c0_67] : memref<2x9x128xf32, #tpu.memory_space<vmem>>, vector<1x1x128xf32>
    %69 = vector.shape_cast %68 : vector<1x1x128xf32> to vector<128xf32>
    %70 = vector.shape_cast %69 : vector<128xf32> to vector<1x1x1x128xf32>
    %71 = vector.broadcast %70 : vector<1x1x1x128xf32> to vector<2x8x8x128xf32>
    %72 = arith.mulf %67, %71 : vector<2x8x8x128xf32>
    %73 = arith.addf %66, %72 : vector<2x8x8x128xf32>
    %c0_68 = arith.constant 0 : index
    %c1_69 = arith.constant 1 : index
    %c1_70 = arith.constant 1 : index
    %c0_71 = arith.constant 0 : index
    %74 = vector.load %arg7[%c0_68, %c1_69, %c1_70, %c0_71] : memref<2x10x16x128xf32, #tpu.memory_space<vmem>>, vector<2x8x8x128xf32>
    %c0_72 = arith.constant 0 : index
    %c4 = arith.constant 4 : index
    %c0_73 = arith.constant 0 : index
    %75 = vector.load %arg4[%c0_72, %c4, %c0_73] : memref<2x9x128xf32, #tpu.memory_space<vmem>>, vector<1x1x128xf32>
    %76 = vector.shape_cast %75 : vector<1x1x128xf32> to vector<128xf32>
    %77 = vector.shape_cast %76 : vector<128xf32> to vector<1x1x1x128xf32>
    %78 = vector.broadcast %77 : vector<1x1x1x128xf32> to vector<2x8x8x128xf32>
    %79 = arith.mulf %74, %78 : vector<2x8x8x128xf32>
    %80 = arith.addf %73, %79 : vector<2x8x8x128xf32>
    %c0_74 = arith.constant 0 : index
    %c1_75 = arith.constant 1 : index
    %c2_76 = arith.constant 2 : index
    %c0_77 = arith.constant 0 : index
    %81 = vector.load %arg7[%c0_74, %c1_75, %c2_76, %c0_77] : memref<2x10x16x128xf32, #tpu.memory_space<vmem>>, vector<2x8x8x128xf32>
    %c0_78 = arith.constant 0 : index
    %c5 = arith.constant 5 : index
    %c0_79 = arith.constant 0 : index
    %82 = vector.load %arg4[%c0_78, %c5, %c0_79] : memref<2x9x128xf32, #tpu.memory_space<vmem>>, vector<1x1x128xf32>
    %83 = vector.shape_cast %82 : vector<1x1x128xf32> to vector<128xf32>
    %84 = vector.shape_cast %83 : vector<128xf32> to vector<1x1x1x128xf32>
    %85 = vector.broadcast %84 : vector<1x1x1x128xf32> to vector<2x8x8x128xf32>
    %86 = arith.mulf %81, %85 : vector<2x8x8x128xf32>
    %87 = arith.addf %80, %86 : vector<2x8x8x128xf32>
    %c0_80 = arith.constant 0 : index
    %c2_81 = arith.constant 2 : index
    %c0_82 = arith.constant 0 : index
    %c0_83 = arith.constant 0 : index
    %88 = vector.load %arg7[%c0_80, %c2_81, %c0_82, %c0_83] : memref<2x10x16x128xf32, #tpu.memory_space<vmem>>, vector<2x8x8x128xf32>
    %c0_84 = arith.constant 0 : index
    %c6 = arith.constant 6 : index
    %c0_85 = arith.constant 0 : index
    %89 = vector.load %arg4[%c0_84, %c6, %c0_85] : memref<2x9x128xf32, #tpu.memory_space<vmem>>, vector<1x1x128xf32>
    %90 = vector.shape_cast %89 : vector<1x1x128xf32> to vector<128xf32>
    %91 = vector.shape_cast %90 : vector<128xf32> to vector<1x1x1x128xf32>
    %92 = vector.broadcast %91 : vector<1x1x1x128xf32> to vector<2x8x8x128xf32>
    %93 = arith.mulf %88, %92 : vector<2x8x8x128xf32>
    %94 = arith.addf %87, %93 : vector<2x8x8x128xf32>
    %c0_86 = arith.constant 0 : index
    %c2_87 = arith.constant 2 : index
    %c1_88 = arith.constant 1 : index
    %c0_89 = arith.constant 0 : index
    %95 = vector.load %arg7[%c0_86, %c2_87, %c1_88, %c0_89] : memref<2x10x16x128xf32, #tpu.memory_space<vmem>>, vector<2x8x8x128xf32>
    %c0_90 = arith.constant 0 : index
    %c7 = arith.constant 7 : index
    %c0_91 = arith.constant 0 : index
    %96 = vector.load %arg4[%c0_90, %c7, %c0_91] : memref<2x9x128xf32, #tpu.memory_space<vmem>>, vector<1x1x128xf32>
    %97 = vector.shape_cast %96 : vector<1x1x128xf32> to vector<128xf32>
    %98 = vector.shape_cast %97 : vector<128xf32> to vector<1x1x1x128xf32>
    %99 = vector.broadcast %98 : vector<1x1x1x128xf32> to vector<2x8x8x128xf32>
    %100 = arith.mulf %95, %99 : vector<2x8x8x128xf32>
    %101 = arith.addf %94, %100 : vector<2x8x8x128xf32>
    %c0_92 = arith.constant 0 : index
    %c2_93 = arith.constant 2 : index
    %c2_94 = arith.constant 2 : index
    %c0_95 = arith.constant 0 : index
    %102 = vector.load %arg7[%c0_92, %c2_93, %c2_94, %c0_95] : memref<2x10x16x128xf32, #tpu.memory_space<vmem>>, vector<2x8x8x128xf32>
    %c0_96 = arith.constant 0 : index
    %c8 = arith.constant 8 : index
    %c0_97 = arith.constant 0 : index
    %103 = vector.load %arg4[%c0_96, %c8, %c0_97] : memref<2x9x128xf32, #tpu.memory_space<vmem>>, vector<1x1x128xf32>
    %104 = vector.shape_cast %103 : vector<1x1x128xf32> to vector<128xf32>
    %105 = vector.shape_cast %104 : vector<128xf32> to vector<1x1x1x128xf32>
    %106 = vector.broadcast %105 : vector<1x1x1x128xf32> to vector<2x8x8x128xf32>
    %107 = arith.mulf %102, %106 : vector<2x8x8x128xf32>
    %108 = arith.addf %101, %107 : vector<2x8x8x128xf32>
    %c2_98 = arith.constant 2 : index
    %c0_99 = arith.constant 0 : index
    %109 = vector.load %arg3[%c2_98, %c0_99] : memref<10x128xf32, #tpu.memory_space<vmem>>, vector<1x128xf32>
    %110 = vector.shape_cast %109 : vector<1x128xf32> to vector<128xf32>
    %111 = vector.shape_cast %110 : vector<128xf32> to vector<1x1x1x128xf32>
    %112 = vector.broadcast %111 : vector<1x1x1x128xf32> to vector<2x8x8x128xf32>
    %113 = arith.addf %108, %112 : vector<2x8x8x128xf32>
    %cst_100 = arith.constant 6.000000e+00 : f32
    %114 = vector.broadcast %cst_100 : f32 to vector<2x8x8x128xf32>
    %115 = arith.divf %113, %114 : vector<2x8x8x128xf32>
    %cst_101 = arith.constant 5.000000e-01 : f32
    %116 = vector.broadcast %cst_101 : f32 to vector<2x8x8x128xf32>
    %117 = arith.addf %115, %116 : vector<2x8x8x128xf32>
    %cst_102 = arith.constant 0.000000e+00 : f32
    %cst_103 = arith.constant 1.000000e+00 : f32
    %118 = vector.broadcast %cst_102 : f32 to vector<2x8x8x128xf32>
    %119 = arith.maximumf %118, %117 : vector<2x8x8x128xf32>
    %120 = vector.broadcast %cst_103 : f32 to vector<2x8x8x128xf32>
    %121 = arith.minimumf %120, %119 : vector<2x8x8x128xf32>
    %122 = arith.mulf %113, %121 : vector<2x8x8x128xf32>
    %123 = vector.shape_cast %122 : vector<2x8x8x128xf32> to vector<128x128xf32>
    %124 = vector.shape_cast %123 : vector<128x128xf32> to vector<2x64x128xf32>
    %cst_104 = arith.constant dense<0.000000e+00> : vector<2x128xf32>
    %125 = vector.multi_reduction <add>, %124, %cst_104 [1] : vector<2x64x128xf32> to vector<2x128xf32>
    %cst_105 = arith.constant 6.400000e+01 : f32
    %126 = vector.broadcast %cst_105 : f32 to vector<2x128xf32>
    %127 = arith.divf %125, %126 : vector<2x128xf32>
    %c2_106 = arith.constant 2 : index
    %c0_107 = arith.constant 0 : index
    %c0_108 = arith.constant 0 : index
    %128 = vector.load %arg2[%c2_106, %c0_107, %c0_108] : memref<8x128x128xbf16, #tpu.memory_space<vmem>>, vector<1x128x128xbf16>
    %129 = vector.shape_cast %128 : vector<1x128x128xbf16> to vector<128x128xbf16>
    %130 = arith.truncf %127 : vector<2x128xf32> to vector<2x128xbf16>
    %cst_109 = arith.constant dense<0.000000e+00> : vector<2x128xf32>
    %131 = tpu.matmul %130, %129, %cst_109 {dimension_numbers = #tpu.dot_dimension_numbers<[1], [0], [0], [1], [0, 0, 1, 1], [], []>} : vector<2x128xbf16>, vector<128x128xbf16>, vector<2x128xf32> -> vector<2x128xf32>
    %c3_110 = arith.constant 3 : index
    %c0_111 = arith.constant 0 : index
    %132 = vector.load %arg3[%c3_110, %c0_111] : memref<10x128xf32, #tpu.memory_space<vmem>>, vector<1x128xf32>
    %133 = vector.shape_cast %132 : vector<1x128xf32> to vector<128xf32>
    %134 = vector.shape_cast %133 : vector<128xf32> to vector<1x128xf32>
    %135 = vector.broadcast %134 : vector<1x128xf32> to vector<2x128xf32>
    %136 = arith.addf %131, %135 : vector<2x128xf32>
    %cst_112 = arith.constant 0.000000e+00 : f32
    %137 = vector.broadcast %cst_112 : f32 to vector<2x128xf32>
    %138 = arith.maximumf %136, %137 : vector<2x128xf32>
    %c3_113 = arith.constant 3 : index
    %c0_114 = arith.constant 0 : index
    %c0_115 = arith.constant 0 : index
    %139 = vector.load %arg2[%c3_113, %c0_114, %c0_115] : memref<8x128x128xbf16, #tpu.memory_space<vmem>>, vector<1x128x128xbf16>
    %140 = vector.shape_cast %139 : vector<1x128x128xbf16> to vector<128x128xbf16>
    %141 = arith.truncf %138 : vector<2x128xf32> to vector<2x128xbf16>
    %cst_116 = arith.constant dense<0.000000e+00> : vector<2x128xf32>
    %142 = tpu.matmul %141, %140, %cst_116 {dimension_numbers = #tpu.dot_dimension_numbers<[1], [0], [0], [1], [0, 0, 1, 1], [], []>} : vector<2x128xbf16>, vector<128x128xbf16>, vector<2x128xf32> -> vector<2x128xf32>
    %c4_117 = arith.constant 4 : index
    %c0_118 = arith.constant 0 : index
    %143 = vector.load %arg3[%c4_117, %c0_118] : memref<10x128xf32, #tpu.memory_space<vmem>>, vector<1x128xf32>
    %144 = vector.shape_cast %143 : vector<1x128xf32> to vector<128xf32>
    %145 = vector.shape_cast %144 : vector<128xf32> to vector<1x128xf32>
    %146 = vector.broadcast %145 : vector<1x128xf32> to vector<2x128xf32>
    %147 = arith.addf %142, %146 : vector<2x128xf32>
    %cst_119 = arith.constant 6.000000e+00 : f32
    %148 = vector.broadcast %cst_119 : f32 to vector<2x128xf32>
    %149 = arith.divf %147, %148 : vector<2x128xf32>
    %cst_120 = arith.constant 5.000000e-01 : f32
    %150 = vector.broadcast %cst_120 : f32 to vector<2x128xf32>
    %151 = arith.addf %149, %150 : vector<2x128xf32>
    %cst_121 = arith.constant 0.000000e+00 : f32
    %cst_122 = arith.constant 1.000000e+00 : f32
    %152 = vector.broadcast %cst_121 : f32 to vector<2x128xf32>
    %153 = arith.maximumf %152, %151 : vector<2x128xf32>
    %154 = vector.broadcast %cst_122 : f32 to vector<2x128xf32>
    %155 = arith.minimumf %154, %153 : vector<2x128xf32>
    %156 = vector.shape_cast %155 : vector<2x128xf32> to vector<2x1x128xf32>
    %157 = vector.broadcast %156 : vector<2x1x128xf32> to vector<2x64x128xf32>
    %158 = arith.mulf %124, %157 : vector<2x64x128xf32>
    %159 = vector.shape_cast %158 : vector<2x64x128xf32> to vector<128x128xf32>
    %c4_123 = arith.constant 4 : index
    %c0_124 = arith.constant 0 : index
    %c0_125 = arith.constant 0 : index
    %160 = vector.load %arg2[%c4_123, %c0_124, %c0_125] : memref<8x128x128xbf16, #tpu.memory_space<vmem>>, vector<1x128x128xbf16>
    %161 = vector.shape_cast %160 : vector<1x128x128xbf16> to vector<128x128xbf16>
    %162 = arith.truncf %159 : vector<128x128xf32> to vector<128x128xbf16>
    %cst_126 = arith.constant dense<0.000000e+00> : vector<128x128xf32>
    %163 = tpu.matmul %162, %161, %cst_126 {dimension_numbers = #tpu.dot_dimension_numbers<[1], [0], [0], [1], [0, 0, 1, 1], [], []>} : vector<128x128xbf16>, vector<128x128xbf16>, vector<128x128xf32> -> vector<128x128xf32>
    %c5_127 = arith.constant 5 : index
    %c0_128 = arith.constant 0 : index
    %164 = vector.load %arg3[%c5_127, %c0_128] : memref<10x128xf32, #tpu.memory_space<vmem>>, vector<1x128xf32>
    %165 = vector.shape_cast %164 : vector<1x128xf32> to vector<128xf32>
    %166 = vector.shape_cast %165 : vector<128xf32> to vector<1x128xf32>
    %167 = vector.broadcast %166 : vector<1x128xf32> to vector<128x128xf32>
    %168 = arith.addf %163, %167 : vector<128x128xf32>
    %169 = arith.addf %168, %18 : vector<128x128xf32>
    %c5_129 = arith.constant 5 : index
    %c0_130 = arith.constant 0 : index
    %c0_131 = arith.constant 0 : index
    %170 = vector.load %arg2[%c5_129, %c0_130, %c0_131] : memref<8x128x128xbf16, #tpu.memory_space<vmem>>, vector<1x128x128xbf16>
    %171 = vector.shape_cast %170 : vector<1x128x128xbf16> to vector<128x128xbf16>
    %172 = arith.truncf %169 : vector<128x128xf32> to vector<128x128xbf16>
    %cst_132 = arith.constant dense<0.000000e+00> : vector<128x128xf32>
    %173 = tpu.matmul %172, %171, %cst_132 {dimension_numbers = #tpu.dot_dimension_numbers<[1], [0], [0], [1], [0, 0, 1, 1], [], []>} : vector<128x128xbf16>, vector<128x128xbf16>, vector<128x128xf32> -> vector<128x128xf32>
    %c6_133 = arith.constant 6 : index
    %c0_134 = arith.constant 0 : index
    %174 = vector.load %arg3[%c6_133, %c0_134] : memref<10x128xf32, #tpu.memory_space<vmem>>, vector<1x128xf32>
    %175 = vector.shape_cast %174 : vector<1x128xf32> to vector<128xf32>
    %176 = vector.shape_cast %175 : vector<128xf32> to vector<1x128xf32>
    %177 = vector.broadcast %176 : vector<1x128xf32> to vector<128x128xf32>
    %178 = arith.addf %173, %177 : vector<128x128xf32>
    %cst_135 = arith.constant 0.000000e+00 : f32
    %179 = vector.broadcast %cst_135 : f32 to vector<128x128xf32>
    %180 = arith.maximumf %178, %179 : vector<128x128xf32>
    %181 = vector.shape_cast %180 : vector<128x128xf32> to vector<2x8x8x128xf32>
    %c0_136 = arith.constant 0 : index
    %c1_137 = arith.constant 1 : index
    %c1_138 = arith.constant 1 : index
    %c0_139 = arith.constant 0 : index
    %182 = vector.load %arg7[%c0_136, %c1_137, %c1_138, %c0_139] : memref<2x10x16x128xf32, #tpu.memory_space<vmem>>, vector<2x8x8x128xf32>
    tpu.vector_store %arg7[%c0_136, %c1_137, %c1_138, %c0_139], %181 {strides = array<i32>} : memref<2x10x16x128xf32, #tpu.memory_space<vmem>>, vector<2x8x8x128xf32>,
    %cst_140 = arith.constant 0.000000e+00 : f32
    %183 = vector.broadcast %cst_140 : f32 to vector<2x8x8x128xf32>
    %c0_141 = arith.constant 0 : index
    %c0_142 = arith.constant 0 : index
    %c0_143 = arith.constant 0 : index
    %c0_144 = arith.constant 0 : index
    %184 = vector.load %arg7[%c0_141, %c0_142, %c0_143, %c0_144] : memref<2x10x16x128xf32, #tpu.memory_space<vmem>>, vector<2x8x8x128xf32>
    %c1_145 = arith.constant 1 : index
    %c0_146 = arith.constant 0 : index
    %c0_147 = arith.constant 0 : index
    %185 = vector.load %arg4[%c1_145, %c0_146, %c0_147] : memref<2x9x128xf32, #tpu.memory_space<vmem>>, vector<1x1x128xf32>
    %186 = vector.shape_cast %185 : vector<1x1x128xf32> to vector<128xf32>
    %187 = vector.shape_cast %186 : vector<128xf32> to vector<1x1x1x128xf32>
    %188 = vector.broadcast %187 : vector<1x1x1x128xf32> to vector<2x8x8x128xf32>
    %189 = arith.mulf %184, %188 : vector<2x8x8x128xf32>
    %190 = arith.addf %183, %189 : vector<2x8x8x128xf32>
    %c0_148 = arith.constant 0 : index
    %c0_149 = arith.constant 0 : index
    %c1_150 = arith.constant 1 : index
    %c0_151 = arith.constant 0 : index
    %191 = vector.load %arg7[%c0_148, %c0_149, %c1_150, %c0_151] : memref<2x10x16x128xf32, #tpu.memory_space<vmem>>, vector<2x8x8x128xf32>
    %c1_152 = arith.constant 1 : index
    %c1_153 = arith.constant 1 : index
    %c0_154 = arith.constant 0 : index
    %192 = vector.load %arg4[%c1_152, %c1_153, %c0_154] : memref<2x9x128xf32, #tpu.memory_space<vmem>>, vector<1x1x128xf32>
    %193 = vector.shape_cast %192 : vector<1x1x128xf32> to vector<128xf32>
    %194 = vector.shape_cast %193 : vector<128xf32> to vector<1x1x1x128xf32>
    %195 = vector.broadcast %194 : vector<1x1x1x128xf32> to vector<2x8x8x128xf32>
    %196 = arith.mulf %191, %195 : vector<2x8x8x128xf32>
    %197 = arith.addf %190, %196 : vector<2x8x8x128xf32>
    %c0_155 = arith.constant 0 : index
    %c0_156 = arith.constant 0 : index
    %c2_157 = arith.constant 2 : index
    %c0_158 = arith.constant 0 : index
    %198 = vector.load %arg7[%c0_155, %c0_156, %c2_157, %c0_158] : memref<2x10x16x128xf32, #tpu.memory_space<vmem>>, vector<2x8x8x128xf32>
    %c1_159 = arith.constant 1 : index
    %c2_160 = arith.constant 2 : index
    %c0_161 = arith.constant 0 : index
    %199 = vector.load %arg4[%c1_159, %c2_160, %c0_161] : memref<2x9x128xf32, #tpu.memory_space<vmem>>, vector<1x1x128xf32>
    %200 = vector.shape_cast %199 : vector<1x1x128xf32> to vector<128xf32>
    %201 = vector.shape_cast %200 : vector<128xf32> to vector<1x1x1x128xf32>
    %202 = vector.broadcast %201 : vector<1x1x1x128xf32> to vector<2x8x8x128xf32>
    %203 = arith.mulf %198, %202 : vector<2x8x8x128xf32>
    %204 = arith.addf %197, %203 : vector<2x8x8x128xf32>
    %c0_162 = arith.constant 0 : index
    %c1_163 = arith.constant 1 : index
    %c0_164 = arith.constant 0 : index
    %c0_165 = arith.constant 0 : index
    %205 = vector.load %arg7[%c0_162, %c1_163, %c0_164, %c0_165] : memref<2x10x16x128xf32, #tpu.memory_space<vmem>>, vector<2x8x8x128xf32>
    %c1_166 = arith.constant 1 : index
    %c3_167 = arith.constant 3 : index
    %c0_168 = arith.constant 0 : index
    %206 = vector.load %arg4[%c1_166, %c3_167, %c0_168] : memref<2x9x128xf32, #tpu.memory_space<vmem>>, vector<1x1x128xf32>
    %207 = vector.shape_cast %206 : vector<1x1x128xf32> to vector<128xf32>
    %208 = vector.shape_cast %207 : vector<128xf32> to vector<1x1x1x128xf32>
    %209 = vector.broadcast %208 : vector<1x1x1x128xf32> to vector<2x8x8x128xf32>
    %210 = arith.mulf %205, %209 : vector<2x8x8x128xf32>
    %211 = arith.addf %204, %210 : vector<2x8x8x128xf32>
    %c0_169 = arith.constant 0 : index
    %c1_170 = arith.constant 1 : index
    %c1_171 = arith.constant 1 : index
    %c0_172 = arith.constant 0 : index
    %212 = vector.load %arg7[%c0_169, %c1_170, %c1_171, %c0_172] : memref<2x10x16x128xf32, #tpu.memory_space<vmem>>, vector<2x8x8x128xf32>
    %c1_173 = arith.constant 1 : index
    %c4_174 = arith.constant 4 : index
    %c0_175 = arith.constant 0 : index
    %213 = vector.load %arg4[%c1_173, %c4_174, %c0_175] : memref<2x9x128xf32, #tpu.memory_space<vmem>>, vector<1x1x128xf32>
    %214 = vector.shape_cast %213 : vector<1x1x128xf32> to vector<128xf32>
    %215 = vector.shape_cast %214 : vector<128xf32> to vector<1x1x1x128xf32>
    %216 = vector.broadcast %215 : vector<1x1x1x128xf32> to vector<2x8x8x128xf32>
    %217 = arith.mulf %212, %216 : vector<2x8x8x128xf32>
    %218 = arith.addf %211, %217 : vector<2x8x8x128xf32>
    %c0_176 = arith.constant 0 : index
    %c1_177 = arith.constant 1 : index
    %c2_178 = arith.constant 2 : index
    %c0_179 = arith.constant 0 : index
    %219 = vector.load %arg7[%c0_176, %c1_177, %c2_178, %c0_179] : memref<2x10x16x128xf32, #tpu.memory_space<vmem>>, vector<2x8x8x128xf32>
    %c1_180 = arith.constant 1 : index
    %c5_181 = arith.constant 5 : index
    %c0_182 = arith.constant 0 : index
    %220 = vector.load %arg4[%c1_180, %c5_181, %c0_182] : memref<2x9x128xf32, #tpu.memory_space<vmem>>, vector<1x1x128xf32>
    %221 = vector.shape_cast %220 : vector<1x1x128xf32> to vector<128xf32>
    %222 = vector.shape_cast %221 : vector<128xf32> to vector<1x1x1x128xf32>
    %223 = vector.broadcast %222 : vector<1x1x1x128xf32> to vector<2x8x8x128xf32>
    %224 = arith.mulf %219, %223 : vector<2x8x8x128xf32>
    %225 = arith.addf %218, %224 : vector<2x8x8x128xf32>
    %c0_183 = arith.constant 0 : index
    %c2_184 = arith.constant 2 : index
    %c0_185 = arith.constant 0 : index
    %c0_186 = arith.constant 0 : index
    %226 = vector.load %arg7[%c0_183, %c2_184, %c0_185, %c0_186] : memref<2x10x16x128xf32, #tpu.memory_space<vmem>>, vector<2x8x8x128xf32>
    %c1_187 = arith.constant 1 : index
    %c6_188 = arith.constant 6 : index
    %c0_189 = arith.constant 0 : index
    %227 = vector.load %arg4[%c1_187, %c6_188, %c0_189] : memref<2x9x128xf32, #tpu.memory_space<vmem>>, vector<1x1x128xf32>
    %228 = vector.shape_cast %227 : vector<1x1x128xf32> to vector<128xf32>
    %229 = vector.shape_cast %228 : vector<128xf32> to vector<1x1x1x128xf32>
    %230 = vector.broadcast %229 : vector<1x1x1x128xf32> to vector<2x8x8x128xf32>
    %231 = arith.mulf %226, %230 : vector<2x8x8x128xf32>
    %232 = arith.addf %225, %231 : vector<2x8x8x128xf32>
    %c0_190 = arith.constant 0 : index
    %c2_191 = arith.constant 2 : index
    %c1_192 = arith.constant 1 : index
    %c0_193 = arith.constant 0 : index
    %233 = vector.load %arg7[%c0_190, %c2_191, %c1_192, %c0_193] : memref<2x10x16x128xf32, #tpu.memory_space<vmem>>, vector<2x8x8x128xf32>
    %c1_194 = arith.constant 1 : index
    %c7_195 = arith.constant 7 : index
    %c0_196 = arith.constant 0 : index
    %234 = vector.load %arg4[%c1_194, %c7_195, %c0_196] : memref<2x9x128xf32, #tpu.memory_space<vmem>>, vector<1x1x128xf32>
    %235 = vector.shape_cast %234 : vector<1x1x128xf32> to vector<128xf32>
    %236 = vector.shape_cast %235 : vector<128xf32> to vector<1x1x1x128xf32>
    %237 = vector.broadcast %236 : vector<1x1x1x128xf32> to vector<2x8x8x128xf32>
    %238 = arith.mulf %233, %237 : vector<2x8x8x128xf32>
    %239 = arith.addf %232, %238 : vector<2x8x8x128xf32>
    %c0_197 = arith.constant 0 : index
    %c2_198 = arith.constant 2 : index
    %c2_199 = arith.constant 2 : index
    %c0_200 = arith.constant 0 : index
    %240 = vector.load %arg7[%c0_197, %c2_198, %c2_199, %c0_200] : memref<2x10x16x128xf32, #tpu.memory_space<vmem>>, vector<2x8x8x128xf32>
    %c1_201 = arith.constant 1 : index
    %c8_202 = arith.constant 8 : index
    %c0_203 = arith.constant 0 : index
    %241 = vector.load %arg4[%c1_201, %c8_202, %c0_203] : memref<2x9x128xf32, #tpu.memory_space<vmem>>, vector<1x1x128xf32>
    %242 = vector.shape_cast %241 : vector<1x1x128xf32> to vector<128xf32>
    %243 = vector.shape_cast %242 : vector<128xf32> to vector<1x1x1x128xf32>
    %244 = vector.broadcast %243 : vector<1x1x1x128xf32> to vector<2x8x8x128xf32>
    %245 = arith.mulf %240, %244 : vector<2x8x8x128xf32>
    %246 = arith.addf %239, %245 : vector<2x8x8x128xf32>
    %c7_204 = arith.constant 7 : index
    %c0_205 = arith.constant 0 : index
    %247 = vector.load %arg3[%c7_204, %c0_205] : memref<10x128xf32, #tpu.memory_space<vmem>>, vector<1x128xf32>
    %248 = vector.shape_cast %247 : vector<1x128xf32> to vector<128xf32>
    %249 = vector.shape_cast %248 : vector<128xf32> to vector<1x1x1x128xf32>
    %250 = vector.broadcast %249 : vector<1x1x1x128xf32> to vector<2x8x8x128xf32>
    %251 = arith.addf %246, %250 : vector<2x8x8x128xf32>
    %cst_206 = arith.constant 0.000000e+00 : f32
    %252 = vector.broadcast %cst_206 : f32 to vector<2x8x8x128xf32>
    %253 = arith.maximumf %251, %252 : vector<2x8x8x128xf32>
    %254 = vector.shape_cast %253 : vector<2x8x8x128xf32> to vector<128x128xf32>
    %c0_207 = arith.constant 0 : index
    %c0_208 = arith.constant 0 : index
    %255 = vector.load %arg5[%c0_207, %c0_208] : memref<32x128xf32, #tpu.memory_space<vmem>>, vector<32x128xf32>
    %cst_209 = arith.constant dense<0.000000e+00> : vector<32x128xf32>
    %256 = tpu.matmul %255, %254, %cst_209 {dimension_numbers = #tpu.dot_dimension_numbers<[1], [0], [0], [1], [0, 0, 1, 1], [], []>} : vector<32x128xf32>, vector<128x128xf32>, vector<32x128xf32> -> vector<32x128xf32>
    %c6_210 = arith.constant 6 : index
    %c0_211 = arith.constant 0 : index
    %c0_212 = arith.constant 0 : index
    %257 = vector.load %arg2[%c6_210, %c0_211, %c0_212] : memref<8x128x128xbf16, #tpu.memory_space<vmem>>, vector<1x128x128xbf16>
    %258 = vector.shape_cast %257 : vector<1x128x128xbf16> to vector<128x128xbf16>
    %259 = arith.truncf %256 : vector<32x128xf32> to vector<32x128xbf16>
    %cst_213 = arith.constant dense<0.000000e+00> : vector<32x128xf32>
    %260 = tpu.matmul %259, %258, %cst_213 {dimension_numbers = #tpu.dot_dimension_numbers<[1], [0], [0], [1], [0, 0, 1, 1], [], []>} : vector<32x128xbf16>, vector<128x128xbf16>, vector<32x128xf32> -> vector<32x128xf32>
    %c8_214 = arith.constant 8 : index
    %c0_215 = arith.constant 0 : index
    %261 = vector.load %arg3[%c8_214, %c0_215] : memref<10x128xf32, #tpu.memory_space<vmem>>, vector<1x128xf32>
    %262 = vector.shape_cast %261 : vector<1x128xf32> to vector<128xf32>
    %263 = vector.shape_cast %262 : vector<128xf32> to vector<1x128xf32>
    %264 = vector.broadcast %263 : vector<1x128xf32> to vector<32x128xf32>
    %265 = arith.addf %260, %264 : vector<32x128xf32>
    %c7_216 = arith.constant 7 : index
    %c0_217 = arith.constant 0 : index
    %c0_218 = arith.constant 0 : index
    %266 = vector.load %arg2[%c7_216, %c0_217, %c0_218] : memref<8x128x128xbf16, #tpu.memory_space<vmem>>, vector<1x128x128xbf16>
    %267 = vector.shape_cast %266 : vector<1x128x128xbf16> to vector<128x128xbf16>
    %268 = arith.truncf %265 : vector<32x128xf32> to vector<32x128xbf16>
    %cst_219 = arith.constant dense<0.000000e+00> : vector<32x128xf32>
    %269 = tpu.matmul %268, %267, %cst_219 {dimension_numbers = #tpu.dot_dimension_numbers<[1], [0], [0], [1], [0, 0, 1, 1], [], []>} : vector<32x128xbf16>, vector<128x128xbf16>, vector<32x128xf32> -> vector<32x128xf32>
    %c9_220 = arith.constant 9 : index
    %c0_221 = arith.constant 0 : index
    %270 = vector.load %arg3[%c9_220, %c0_221] : memref<10x128xf32, #tpu.memory_space<vmem>>, vector<1x128xf32>
    %271 = vector.shape_cast %270 : vector<1x128xf32> to vector<128xf32>
    %272 = vector.shape_cast %271 : vector<128xf32> to vector<1x128xf32>
    %273 = vector.broadcast %272 : vector<1x128xf32> to vector<32x128xf32>
    %274 = arith.addf %269, %273 : vector<32x128xf32>
    %cst_222 = arith.constant 6.000000e+00 : f32
    %275 = vector.broadcast %cst_222 : f32 to vector<32x128xf32>
    %276 = arith.divf %274, %275 : vector<32x128xf32>
    %cst_223 = arith.constant 5.000000e-01 : f32
    %277 = vector.broadcast %cst_223 : f32 to vector<32x128xf32>
    %278 = arith.addf %276, %277 : vector<32x128xf32>
    %cst_224 = arith.constant 0.000000e+00 : f32
    %cst_225 = arith.constant 1.000000e+00 : f32
    %279 = vector.broadcast %cst_224 : f32 to vector<32x128xf32>
    %280 = arith.maximumf %279, %278 : vector<32x128xf32>
    %281 = vector.broadcast %cst_225 : f32 to vector<32x128xf32>
    %282 = arith.minimumf %281, %280 : vector<32x128xf32>
    %283 = arith.mulf %274, %282 : vector<32x128xf32>
    %284 = vector.shape_cast %283 : vector<32x128xf32> to vector<2x4x4x128xf32>
    %cst_226 = arith.constant dense<0.000000e+00> : vector<2x4x128xf32>
    %285 = vector.multi_reduction <add>, %284, %cst_226 [1] : vector<2x4x4x128xf32> to vector<2x4x128xf32>
    %cst_227 = arith.constant 4.000000e+00 : f32
    %286 = vector.broadcast %cst_227 : f32 to vector<2x4x128xf32>
    %287 = arith.divf %285, %286 : vector<2x4x128xf32>
    %cst_228 = arith.constant dense<0xFF800000> : vector<2x128xf32>
    %288 = vector.multi_reduction <maximumf>, %287, %cst_228 [1] : vector<2x4x128xf32> to vector<2x128xf32>
    %cst_229 = arith.constant dense<0.000000e+00> : vector<2x128xf32>
    %289 = vector.multi_reduction <add>, %287, %cst_229 [1] : vector<2x4x128xf32> to vector<2x128xf32>
    %cst_230 = arith.constant 4.000000e+00 : f32
    %290 = vector.broadcast %cst_230 : f32 to vector<2x128xf32>
    %291 = arith.divf %289, %290 : vector<2x128xf32>
    %292 = arith.addf %288, %291 : vector<2x128xf32>
    %c0_231 = arith.constant 0 : index
    %c0_232 = arith.constant 0 : index
    %293 = vector.load %arg6[%c0_231, %c0_232] : memref<2x128xf32, #tpu.memory_space<vmem>>, vector<2x128xf32>
    tpu.vector_store %arg6[%c0_231, %c0_232], %292 {strides = array<i32>} : memref<2x128xf32, #tpu.memory_space<vmem>>, vector<2x128xf32>,
    return
  }
  func.func @transform_0(%arg0: i32) -> (i32, i32, i32) {
    %c0_i32 = arith.constant 0 : i32
    %c0_i32_0 = arith.constant 0 : i32
    %c0_i32_1 = arith.constant 0 : i32
    return %arg0, %c0_i32, %c0_i32_0 : i32, i32, i32
  }
  func.func @transform_1(%arg0: i32) -> (i32, i32, i32) {
    %c0_i32 = arith.constant 0 : i32
    %c0_i32_0 = arith.constant 0 : i32
    %c0_i32_1 = arith.constant 0 : i32
    %c0_i32_2 = arith.constant 0 : i32
    return %c0_i32, %c0_i32_0, %c0_i32_1 : i32, i32, i32
  }
  func.func @transform_2(%arg0: i32) -> (i32, i32) {
    %c0_i32 = arith.constant 0 : i32
    %c0_i32_0 = arith.constant 0 : i32
    %c0_i32_1 = arith.constant 0 : i32
    return %c0_i32, %c0_i32_0 : i32, i32
  }
  func.func @transform_3(%arg0: i32) -> (i32, i32, i32) {
    %c0_i32 = arith.constant 0 : i32
    %c0_i32_0 = arith.constant 0 : i32
    %c0_i32_1 = arith.constant 0 : i32
    %c0_i32_2 = arith.constant 0 : i32
    return %c0_i32, %c0_i32_0, %c0_i32_1 : i32, i32, i32
  }
  func.func @transform_4(%arg0: i32) -> (i32, i32) {
    %c0_i32 = arith.constant 0 : i32
    %c0_i32_0 = arith.constant 0 : i32
    %c0_i32_1 = arith.constant 0 : i32
    return %c0_i32, %c0_i32_0 : i32, i32
  }
  func.func @transform_5(%arg0: i32) -> (i32, i32) {
    %c0_i32 = arith.constant 0 : i32
    %c0_i32_0 = arith.constant 0 : i32
    return %arg0, %c0_i32 : i32, i32
  }
}

</mosaic_0001>

<llo_original>
// kernel: mobilenetv3_forward.1
$region0: #{mobilenetv3_forward.1}
  #allocation0 [shape = 'u32[]', space=smem, size = 0x4, offset = 0x4, fixed_abs, tag = 'smem constant byte address 0x4 - core index']
  #allocation1 [shape = 'u32[144,128]{1,0:T(1,128)}', space=vmem, size = 0x12000, scoped, tag = 'internal scratch']
  #allocation2 [shape = 'f32[2,10,16,128]{3,2,1,0:T(8,128)}', space=vmem, size = 0x28000, scoped, tag = 'scratch operand']
  %s0 = inlined_call_operand.vmem [shape: bf16[2,64,128], index: 0, kind: input, shape index: {}]
  %s1 = inlined_call_operand.vmem [shape: bf16[8,128,128], index: 1, kind: input, shape index: {}]
  %s2 = inlined_call_operand.vmem [shape: f32[10,128], index: 2, kind: input, shape index: {}]
  %s3 = inlined_call_operand.vmem [shape: f32[2,9,128], index: 3, kind: input, shape index: {}]
  %s4 = inlined_call_operand.vmem [shape: f32[32,128], index: 4, kind: input, shape index: {}]
  %s5 = inlined_call_operand.hbm [shape: f32[2,128], index: 5, kind: output, shape index: {}]
  %s6 = sld [smem:[#allocation0]]
  $region30: #{mobilenetv3_forward.1} parent=0
    _
  %s8 = ssub.s32 1, %s6
  %s9 = scalar_select 0, %s8, %s6
  $region1: #{mobilenetv3_forward.1} parent=0
    #allocation3 [shape = 'u8[1024]{0}', space=vmem, size = 0x400, scoped, tag = 'output window, operand 0, single buffered']
    #allocation4 [shape = 's32[1]{0}', space=sflag, size = 0x4, scoped, tag = 'scoped memory for mobilenetv3_forward.1']
    %10 = vsyncpa [#allocation4], 0
    // Predicated region
    $region2: #{mobilenetv3_forward.1} parent=1 // pred_check
      _
    $region3: #{mobilenetv3_forward.1} parent=1 // pred_check_branch
      %12 = sbr.rel (0) target = $region5
    $region4: #{mobilenetv3_forward.1} parent=1 // pred_region
      _
    $region5: #{mobilenetv3_forward.1} parent=1 // pred_fallthru
      _
    // Predicated region
    $region6: #{mobilenetv3_forward.1} parent=1 // pred_check
      _
    $region7: #{mobilenetv3_forward.1} parent=1 // pred_check_branch
      %14 = sbr.rel (0) target = $region9
    $region8: #{mobilenetv3_forward.1} parent=1 // pred_region
      _
    $region9: #{mobilenetv3_forward.1} parent=1 // pred_fallthru
      _
    // Predicated region
    $region10: #{mobilenetv3_forward.1} parent=1 // pred_check
      _
    $region11: #{mobilenetv3_forward.1} parent=1 // pred_check_branch
      %16 = sbr.rel (0) target = $region13
    $region12: #{mobilenetv3_forward.1} parent=1 // pred_region
      _
    $region13: #{mobilenetv3_forward.1} parent=1 // pred_fallthru
      _
    // Predicated region
    $region14: #{mobilenetv3_forward.1} parent=1 // pred_check
      _
    $region15: #{mobilenetv3_forward.1} parent=1 // pred_check_branch
      %18 = sbr.rel (0) target = $region17
    $region16: #{mobilenetv3_forward.1} parent=1 // pred_region
      _
    $region17: #{mobilenetv3_forward.1} parent=1 // pred_fallthru
      _
    // Predicated region
    $region18: #{mobilenetv3_forward.1} parent=1 // pred_check
      _
    $region19: #{mobilenetv3_forward.1} parent=1 // pred_check_branch
      %20 = sbr.rel (0) target = $region21
    $region20: #{mobilenetv3_forward.1} parent=1 // pred_region
      _
    $region21: #{mobilenetv3_forward.1} parent=1 // pred_fallthru
      _
    %v22 = vld [vmem:[%s0] sm:$0xf]
    %v23 = vld [vmem:[%s0 + $0x4] sm:$0xf]
    %v24 = vld [vmem:[%s0 + $0x8] sm:$0xf]
    %v25 = vld [vmem:[%s0 + $0xc] sm:$0xf]
    %v26 = vld [vmem:[%s0 + $0x10] sm:$0xf]
    %v27 = vld [vmem:[%s0 + $0x14] sm:$0xf]
    %v28 = vld [vmem:[%s0 + $0x18] sm:$0xf]
    %v29 = vld [vmem:[%s0 + $0x1c] sm:$0xf]
    %v30 = vld [vmem:[%s0 + $0x20] sm:$0xf]
    %v31 = vld [vmem:[%s0 + $0x24] sm:$0xf]
    %v32 = vld [vmem:[%s0 + $0x28] sm:$0xf]
    %v33 = vld [vmem:[%s0 + $0x2c] sm:$0xf]
    %v34 = vld [vmem:[%s0 + $0x30] sm:$0xf]
    %v35 = vld [vmem:[%s0 + $0x34] sm:$0xf]
    %v36 = vld [vmem:[%s0 + $0x38] sm:$0xf]
    %v37 = vld [vmem:[%s0 + $0x3c] sm:$0xf]
    %v38 = vld [vmem:[%s1] sm:$0xf]
    %v39 = vld [vmem:[%s1 + $0x4] sm:$0xf]
    %v40 = vld [vmem:[%s1 + $0x8] sm:$0xf]
    %v41 = vld [vmem:[%s1 + $0xc] sm:$0xf]
    %v42 = vld [vmem:[%s1 + $0x10] sm:$0xf]
    %v43 = vld [vmem:[%s1 + $0x14] sm:$0xf]
    %v44 = vld [vmem:[%s1 + $0x18] sm:$0xf]
    %v45 = vld [vmem:[%s1 + $0x1c] sm:$0xf]
    %v46 = vld [vmem:[%s1 + $0x20] sm:$0xf]
    %v47 = vld [vmem:[%s1 + $0x24] sm:$0xf]
    %v48 = vld [vmem:[%s1 + $0x28] sm:$0xf]
    %v49 = vld [vmem:[%s1 + $0x2c] sm:$0xf]
    %v50 = vld [vmem:[%s1 + $0x30] sm:$0xf]
    %v51 = vld [vmem:[%s1 + $0x34] sm:$0xf]
    %v52 = vld [vmem:[%s1 + $0x38] sm:$0xf]
    %v53 = vld [vmem:[%s1 + $0x3c] sm:$0xf]
    %v54 = vld [vmem:[%s2] sm:$0x1]
    %v55 = vlaneseq
    %v56 = vshrl.u32 %v55, 7
    %v57 = vsub.s32 0, %v56
    %v58 = vrot.slane %v54, %v57
    %v75 = vunpack.c.l.b16 %v22
    %v76 = vunpack.c.l.b16 %v23
    %v77 = vunpack.c.l.b16 %v24
    %v78 = vunpack.c.l.b16 %v25
    %v79 = vunpack.c.l.b16 %v26
    %v80 = vunpack.c.l.b16 %v27
    %v81 = vunpack.c.l.b16 %v28
    %v82 = vunpack.c.l.b16 %v29
    %v83 = vunpack.c.l.b16 %v30
    %v84 = vunpack.c.l.b16 %v31
    %v85 = vunpack.c.l.b16 %v32
    %v86 = vunpack.c.l.b16 %v33
    %v87 = vunpack.c.l.b16 %v34
    %v88 = vunpack.c.l.b16 %v35
    %v89 = vunpack.c.l.b16 %v36
    %v90 = vunpack.c.l.b16 %v37
    %v91 = vpack.c.b16 %v76, %v75
    %v92 = vpack.c.b16 %v78, %v77
    %v93 = vpack.c.b16 %v80, %v79
    %v94 = vpack.c.b16 %v82, %v81
    %v95 = vpack.c.b16 %v84, %v83
    %v96 = vpack.c.b16 %v86, %v85
    %v97 = vpack.c.b16 %v88, %v87
    %v98 = vpack.c.b16 %v90, %v89
    %v123 = vunpack.c.l.b16 %v38
    %v124 = vunpack.c.l.b16 %v39
    %v125 = vunpack.c.l.b16 %v40
    %v126 = vunpack.c.l.b16 %v41
    %v127 = vunpack.c.l.b16 %v42
    %v128 = vunpack.c.l.b16 %v43
    %v129 = vunpack.c.l.b16 %v44
    %v130 = vunpack.c.l.b16 %v45
    %v131 = vunpack.c.l.b16 %v46
    %v132 = vunpack.c.l.b16 %v47
    %v133 = vunpack.c.l.b16 %v48
    %v134 = vunpack.c.l.b16 %v49
    %v135 = vunpack.c.l.b16 %v50
    %v136 = vunpack.c.l.b16 %v51
    %v137 = vunpack.c.l.b16 %v52
    %v138 = vunpack.c.l.b16 %v53
    %v139 = vpack.c.b16 %v124, %v123
    %v140 = vpack.c.b16 %v126, %v125
    %v141 = vpack.c.b16 %v128, %v127
    %v142 = vpack.c.b16 %v130, %v129
    %v143 = vpack.c.b16 %v132, %v131
    %v144 = vpack.c.b16 %v134, %v133
    %v145 = vpack.c.b16 %v136, %v135
    %v146 = vpack.c.b16 %v138, %v137
    %155 = vmatprep.subr.bf16.mxu0 0
    %156 = vmatpush1.bf16.msra.mxu0 %v139
    %157 = vmatprep.subr.bf16.mxu0 0
    %158 = vmatpush1.bf16.msra.mxu0 %v140
    %159 = vmatprep.subr.bf16.mxu0 0
    %160 = vmatpush1.bf16.msra.mxu0 %v141
    %161 = vmatprep.subr.bf16.mxu0 0
    %162 = vmatpush1.bf16.msra.mxu0 %v142
    %163 = vmatprep.subr.bf16.mxu0 0
    %164 = vmatpush1.bf16.msra.mxu0 %v143
    %165 = vmatprep.subr.bf16.mxu0 0
    %166 = vmatpush1.bf16.msra.mxu0 %v144
    %167 = vmatprep.subr.bf16.mxu0 0
    %168 = vmatpush1.bf16.msra.mxu0 %v145
    %169 = vmatprep.subr.bf16.mxu0 0
    %170 = vmatpush1.bf16.msra.mxu0 %v146
    %171 = vmatprep.subr.bf16.mxu0 0
    %172 = vmatpush1.bf16.msra.mxu0 0
    %173 = vmatprep.subr.bf16.mxu0 0
    %174 = vmatpush1.bf16.msra.mxu0 0
    %175 = vmatprep.subr.bf16.mxu0 0
    %176 = vmatpush1.bf16.msra.mxu0 0
    %177 = vmatprep.subr.bf16.mxu0 0
    %178 = vmatpush1.bf16.msra.mxu0 0
    %179 = vmatprep.subr.bf16.mxu0 0
    %180 = vmatpush1.bf16.msra.mxu0 0
    %181 = vmatprep.subr.bf16.mxu0 0
    %182 = vmatpush1.bf16.msra.mxu0 0
    %183 = vmatprep.subr.bf16.mxu0 0
    %184 = vmatpush1.bf16.msra.mxu0 0
    %185 = vmatprep.subr.bf16.mxu0 0
    %186 = vmatpush1.bf16.msra.mxu0 0
    %187 = vmatprep.mubr.bf16.mxu0 0
    %188 = vmatmul.mubr.bf16.gmra.mrb[0].mxu0 %v91
    %v189 = vpop.f32.mrb[0].mxu0
    %v190 = vadd.f32 %v58, %v189
    %v191 = vpop.f32.mrb[0].mxu0
    %v192 = vpop.f32.mrb[0].mxu0
    %v193 = vadd.f32 %v58, %v192
    %v194 = vpop.f32.mrb[0].mxu0
    %195 = vmatprep.mubr.bf16.mxu0 0
    %196 = vmatmul.mubr.bf16.gmra.mrb[0].mxu0 %v92
    %v197 = vpop.f32.mrb[0].mxu0
    %v198 = vadd.f32 %v58, %v197
    %v199 = vpop.f32.mrb[0].mxu0
    %v200 = vpop.f32.mrb[0].mxu0
    %v201 = vadd.f32 %v58, %v200
    %v202 = vpop.f32.mrb[0].mxu0
    %203 = vmatprep.mubr.bf16.mxu0 0
    %204 = vmatmul.mubr.bf16.gmra.mrb[0].mxu0 %v93
    %v205 = vpop.f32.mrb[0].mxu0
    %v206 = vadd.f32 %v58, %v205
    %v207 = vpop.f32.mrb[0].mxu0
    %v208 = vpop.f32.mrb[0].mxu0
    %v209 = vadd.f32 %v58, %v208
    %v210 = vpop.f32.mrb[0].mxu0
    %211 = vmatprep.mubr.bf16.mxu0 0
    %212 = vmatmul.mubr.bf16.gmra.mrb[0].mxu0 %v94
    %v213 = vpop.f32.mrb[0].mxu0
    %v214 = vadd.f32 %v58, %v213
    %v215 = vpop.f32.mrb[0].mxu0
    %v216 = vpop.f32.mrb[0].mxu0
    %v217 = vadd.f32 %v58, %v216
    %v218 = vpop.f32.mrb[0].mxu0
    %219 = vmatprep.mubr.bf16.mxu0 0
    %220 = vmatmul.mubr.bf16.gmra.mrb[0].mxu0 %v95
    %v221 = vpop.f32.mrb[0].mxu0
    %v222 = vadd.f32 %v58, %v221
    %v223 = vpop.f32.mrb[0].mxu0
    %v224 = vpop.f32.mrb[0].mxu0
    %v225 = vadd.f32 %v58, %v224
    %v226 = vpop.f32.mrb[0].mxu0
    %227 = vmatprep.mubr.bf16.mxu0 0
    %228 = vmatmul.mubr.bf16.gmra.mrb[0].mxu0 %v96
    %v229 = vpop.f32.mrb[0].mxu0
    %v230 = vadd.f32 %v58, %v229
    %v231 = vpop.f32.mrb[0].mxu0
    %v232 = vpop.f32.mrb[0].mxu0
    %v233 = vadd.f32 %v58, %v232
    %v234 = vpop.f32.mrb[0].mxu0
    %235 = vmatprep.mubr.bf16.mxu0 0
    %236 = vmatmul.mubr.bf16.gmra.mrb[0].mxu0 %v97
    %v237 = vpop.f32.mrb[0].mxu0
    %v238 = vadd.f32 %v58, %v237
    %v239 = vpop.f32.mrb[0].mxu0
    %v240 = vpop.f32.mrb[0].mxu0
    %v241 = vadd.f32 %v58, %v240
    %v242 = vpop.f32.mrb[0].mxu0
    %243 = vmatprep.mubr.bf16.mxu0 0
    %244 = vmatmul.mubr.bf16.gmra.mrb[0].mxu0 %v98
    %v245 = vpop.f32.mrb[0].mxu0
    %v246 = vadd.f32 %v58, %v245
    %v247 = vpop.f32.mrb[0].mxu0
    %v248 = vpop.f32.mrb[0].mxu0
    %v249 = vadd.f32 %v58, %v248
    %v250 = vpop.f32.mrb[0].mxu0
    %251 = vdwg.mxu0
    %v252 = vrcp.pop 6.0
    %v253 = vmul.f32 %v190, %v252
    %v254 = vmul.f32 %v193, %v252
    %v255 = vmul.f32 %v198, %v252
    %v256 = vmul.f32 %v201, %v252
    %v257 = vmul.f32 %v206, %v252
    %v258 = vmul.f32 %v209, %v252
    %v259 = vmul.f32 %v214, %v252
    %v260 = vmul.f32 %v217, %v252
    %v261 = vmul.f32 %v222, %v252
    %v262 = vmul.f32 %v225, %v252
    %v263 = vmul.f32 %v230, %v252
    %v264 = vmul.f32 %v233, %v252
    %v265 = vmul.f32 %v238, %v252
    %v266 = vmul.f32 %v241, %v252
    %v267 = vmul.f32 %v246, %v252
    %v268 = vmul.f32 %v249, %v252
    %v269 = vadd.f32 %v253, 0.5
    %v270 = vadd.f32 %v254, 0.5
    %v271 = vadd.f32 %v255, 0.5
    %v272 = vadd.f32 %v256, 0.5
    %v273 = vadd.f32 %v257, 0.5
    %v274 = vadd.f32 %v258, 0.5
    %v275 = vadd.f32 %v259, 0.5
    %v276 = vadd.f32 %v260, 0.5
    %v277 = vadd.f32 %v261, 0.5
    %v278 = vadd.f32 %v262, 0.5
    %v279 = vadd.f32 %v263, 0.5
    %v280 = vadd.f32 %v264, 0.5
    %v281 = vadd.f32 %v265, 0.5
    %v282 = vadd.f32 %v266, 0.5
    %v283 = vadd.f32 %v267, 0.5
    %v284 = vadd.f32 %v268, 0.5
    %v285 = vmax.f32 %v269, 0.0
    %v286 = vmax.f32 %v270, 0.0
    %v287 = vmax.f32 %v271, 0.0
    %v288 = vmax.f32 %v272, 0.0
    %v289 = vmax.f32 %v273, 0.0
    %v290 = vmax.f32 %v274, 0.0
    %v291 = vmax.f32 %v275, 0.0
    %v292 = vmax.f32 %v276, 0.0
    %v293 = vmax.f32 %v277, 0.0
    %v294 = vmax.f32 %v278, 0.0
    %v295 = vmax.f32 %v279, 0.0
    %v296 = vmax.f32 %v280, 0.0
    %v297 = vmax.f32 %v281, 0.0
    %v298 = vmax.f32 %v282, 0.0
    %v299 = vmax.f32 %v283, 0.0
    %v300 = vmax.f32 %v284, 0.0
    %v301 = vmin.f32 %v285, 1.0
    %v302 = vmin.f32 %v286, 1.0
    %v303 = vmin.f32 %v287, 1.0
    %v304 = vmin.f32 %v288, 1.0
    %v305 = vmin.f32 %v289, 1.0
    %v306 = vmin.f32 %v290, 1.0
    %v307 = vmin.f32 %v291, 1.0
    %v308 = vmin.f32 %v292, 1.0
    %v309 = vmin.f32 %v293, 1.0
    %v310 = vmin.f32 %v294, 1.0
    %v311 = vmin.f32 %v295, 1.0
    %v312 = vmin.f32 %v296, 1.0
    %v313 = vmin.f32 %v297, 1.0
    %v314 = vmin.f32 %v298, 1.0
    %v315 = vmin.f32 %v299, 1.0
    %v316 = vmin.f32 %v300, 1.0
    %v317 = vmul.f32 %v190, %v301
    %v318 = vmul.f32 %v193, %v302
    %v319 = vmul.f32 %v198, %v303
    %v320 = vmul.f32 %v201, %v304
    %v321 = vmul.f32 %v206, %v305
    %v322 = vmul.f32 %v209, %v306
    %v323 = vmul.f32 %v214, %v307
    %v324 = vmul.f32 %v217, %v308
    %v325 = vmul.f32 %v222, %v309
    %v326 = vmul.f32 %v225, %v310
    %v327 = vmul.f32 %v230, %v311
    %v328 = vmul.f32 %v233, %v312
    %v329 = vmul.f32 %v238, %v313
    %v330 = vmul.f32 %v241, %v314
    %v331 = vmul.f32 %v246, %v315
    %v332 = vmul.f32 %v249, %v316
    %s333 = scalar_lea.vmem %s1, 64
    %v334 = vld [vmem:[%s333] sm:$0xf]
    %v335 = vld [vmem:[%s333 + $0x4] sm:$0xf]
    %v336 = vld [vmem:[%s333 + $0x8] sm:$0xf]
    %v337 = vld [vmem:[%s333 + $0xc] sm:$0xf]
    %v338 = vld [vmem:[%s333 + $0x10] sm:$0xf]
    %v339 = vld [vmem:[%s333 + $0x14] sm:$0xf]
    %v340 = vld [vmem:[%s333 + $0x18] sm:$0xf]
    %v341 = vld [vmem:[%s333 + $0x1c] sm:$0xf]
    %v342 = vld [vmem:[%s333 + $0x20] sm:$0xf]
    %v343 = vld [vmem:[%s333 + $0x24] sm:$0xf]
    %v344 = vld [vmem:[%s333 + $0x28] sm:$0xf]
    %v345 = vld [vmem:[%s333 + $0x2c] sm:$0xf]
    %v346 = vld [vmem:[%s333 + $0x30] sm:$0xf]
    %v347 = vld [vmem:[%s333 + $0x34] sm:$0xf]
    %v348 = vld [vmem:[%s333 + $0x38] sm:$0xf]
    %v349 = vld [vmem:[%s333 + $0x3c] sm:$0xf]
    %v350 = vpack.c.bf16 %v318, %v317
    %v351 = vpack.c.bf16 %v320, %v319
    %v352 = vpack.c.bf16 %v322, %v321
    %v353 = vpack.c.bf16 %v324, %v323
    %v354 = vpack.c.bf16 %v326, %v325
    %v355 = vpack.c.bf16 %v328, %v327
    %v356 = vpack.c.bf16 %v330, %v329
    %v357 = vpack.c.bf16 %v332, %v331
    %v358 = vld [vmem:[%s2 + $0x1] sm:$0x1]
    %v359 = vlaneseq
    %v360 = vshrl.u32 %v359, 7
    %v361 = vsub.s32 0, %v360
    %v362 = vrot.slane %v358, %v361
    %v379 = vunpack.c.l.b16 %v334
    %v380 = vunpack.c.l.b16 %v335
    %v381 = vunpack.c.l.b16 %v336
    %v382 = vunpack.c.l.b16 %v337
    %v383 = vunpack.c.l.b16 %v338
    %v384 = vunpack.c.l.b16 %v339
    %v385 = vunpack.c.l.b16 %v340
    %v386 = vunpack.c.l.b16 %v341
    %v387 = vunpack.c.l.b16 %v342
    %v388 = vunpack.c.l.b16 %v343
    %v389 = vunpack.c.l.b16 %v344
    %v390 = vunpack.c.l.b16 %v345
    %v391 = vunpack.c.l.b16 %v346
    %v392 = vunpack.c.l.b16 %v347
    %v393 = vunpack.c.l.b16 %v348
    %v394 = vunpack.c.l.b16 %v349
    %v395 = vpack.c.b16 %v380, %v379
    %v396 = vpack.c.b16 %v382, %v381
    %v397 = vpack.c.b16 %v384, %v383
    %v398 = vpack.c.b16 %v386, %v385
    %v399 = vpack.c.b16 %v388, %v387
    %v400 = vpack.c.b16 %v390, %v389
    %v401 = vpack.c.b16 %v392, %v391
    %v402 = vpack.c.b16 %v394, %v393
    %411 = vmatprep.subr.bf16.mxu0 0
    %412 = vmatpush1.bf16.msra.mxu0 %v395
    %413 = vmatprep.subr.bf16.mxu0 0
    %414 = vmatpush1.bf16.msra.mxu0 %v396
    %415 = vmatprep.subr.bf16.mxu0 0
    %416 = vmatpush1.bf16.msra.mxu0 %v397
    %417 = vmatprep.subr.bf16.mxu0 0
    %418 = vmatpush1.bf16.msra.mxu0 %v398
    %419 = vmatprep.subr.bf16.mxu0 0
    %420 = vmatpush1.bf16.msra.mxu0 %v399
    %421 = vmatprep.subr.bf16.mxu0 0
    %422 = vmatpush1.bf16.msra.mxu0 %v400
    %423 = vmatprep.subr.bf16.mxu0 0
    %424 = vmatpush1.bf16.msra.mxu0 %v401
    %425 = vmatprep.subr.bf16.mxu0 0
    %426 = vmatpush1.bf16.msra.mxu0 %v402
    %427 = vmatprep.subr.bf16.mxu0 0
    %428 = vmatpush1.bf16.msra.mxu0 0
    %429 = vmatprep.subr.bf16.mxu0 0
    %430 = vmatpush1.bf16.msra.mxu0 0
    %431 = vmatprep.subr.bf16.mxu0 0
    %432 = vmatpush1.bf16.msra.mxu0 0
    %433 = vmatprep.subr.bf16.mxu0 0
    %434 = vmatpush1.bf16.msra.mxu0 0
    %435 = vmatprep.subr.bf16.mxu0 0
    %436 = vmatpush1.bf16.msra.mxu0 0
    %437 = vmatprep.subr.bf16.mxu0 0
    %438 = vmatpush1.bf16.msra.mxu0 0
    %439 = vmatprep.subr.bf16.mxu0 0
    %440 = vmatpush1.bf16.msra.mxu0 0
    %441 = vmatprep.subr.bf16.mxu0 0
    %442 = vmatpush1.bf16.msra.mxu0 0
    %443 = vmatprep.mubr.bf16.mxu0 0
    %444 = vmatmul.mubr.bf16.gmra.mrb[0].mxu0 %v350
    %v445 = vpop.f32.mrb[0].mxu0
    %v446 = vadd.f32 %v362, %v445
    %v447 = vpop.f32.mrb[0].mxu0
    %v448 = vpop.f32.mrb[0].mxu0
    %v449 = vadd.f32 %v362, %v448
    %v450 = vpop.f32.mrb[0].mxu0
    %451 = vmatprep.mubr.bf16.mxu0 0
    %452 = vmatmul.mubr.bf16.gmra.mrb[0].mxu0 %v351
    %v453 = vpop.f32.mrb[0].mxu0
    %v454 = vadd.f32 %v362, %v453
    %v455 = vpop.f32.mrb[0].mxu0
    %v456 = vpop.f32.mrb[0].mxu0
    %v457 = vadd.f32 %v362, %v456
    %v458 = vpop.f32.mrb[0].mxu0
    %459 = vmatprep.mubr.bf16.mxu0 0
    %460 = vmatmul.mubr.bf16.gmra.mrb[0].mxu0 %v352
    %v461 = vpop.f32.mrb[0].mxu0
    %v462 = vadd.f32 %v362, %v461
    %v463 = vpop.f32.mrb[0].mxu0
    %v464 = vpop.f32.mrb[0].mxu0
    %v465 = vadd.f32 %v362, %v464
    %v466 = vpop.f32.mrb[0].mxu0
    %467 = vmatprep.mubr.bf16.mxu0 0
    %468 = vmatmul.mubr.bf16.gmra.mrb[0].mxu0 %v353
    %v469 = vpop.f32.mrb[0].mxu0
    %v470 = vadd.f32 %v362, %v469
    %v471 = vpop.f32.mrb[0].mxu0
    %v472 = vpop.f32.mrb[0].mxu0
    %v473 = vadd.f32 %v362, %v472
    %v474 = vpop.f32.mrb[0].mxu0
    %475 = vmatprep.mubr.bf16.mxu0 0
    %476 = vmatmul.mubr.bf16.gmra.mrb[0].mxu0 %v354
    %v477 = vpop.f32.mrb[0].mxu0
    %v478 = vadd.f32 %v362, %v477
    %v479 = vpop.f32.mrb[0].mxu0
    %v480 = vpop.f32.mrb[0].mxu0
    %v481 = vadd.f32 %v362, %v480
    %v482 = vpop.f32.mrb[0].mxu0
    %483 = vmatprep.mubr.bf16.mxu0 0
    %484 = vmatmul.mubr.bf16.gmra.mrb[0].mxu0 %v355
    %v485 = vpop.f32.mrb[0].mxu0
    %v486 = vadd.f32 %v362, %v485
    %v487 = vpop.f32.mrb[0].mxu0
    %v488 = vpop.f32.mrb[0].mxu0
    %v489 = vadd.f32 %v362, %v488
    %v490 = vpop.f32.mrb[0].mxu0
    %491 = vmatprep.mubr.bf16.mxu0 0
    %492 = vmatmul.mubr.bf16.gmra.mrb[0].mxu0 %v356
    %v493 = vpop.f32.mrb[0].mxu0
    %v494 = vadd.f32 %v362, %v493
    %v495 = vpop.f32.mrb[0].mxu0
    %v496 = vpop.f32.mrb[0].mxu0
    %v497 = vadd.f32 %v362, %v496
    %v498 = vpop.f32.mrb[0].mxu0
    %499 = vmatprep.mubr.bf16.mxu0 0
    %500 = vmatmul.mubr.bf16.gmra.mrb[0].mxu0 %v357
    %v501 = vpop.f32.mrb[0].mxu0
    %v502 = vadd.f32 %v362, %v501
    %v503 = vpop.f32.mrb[0].mxu0
    %v504 = vpop.f32.mrb[0].mxu0
    %v505 = vadd.f32 %v362, %v504
    %v506 = vpop.f32.mrb[0].mxu0
    %507 = vdwg.mxu0
    %v508 = vmul.f32 %v446, %v252
    %v509 = vmul.f32 %v449, %v252
    %v510 = vmul.f32 %v454, %v252
    %v511 = vmul.f32 %v457, %v252
    %v512 = vmul.f32 %v462, %v252
    %v513 = vmul.f32 %v465, %v252
    %v514 = vmul.f32 %v470, %v252
    %v515 = vmul.f32 %v473, %v252
    %v516 = vmul.f32 %v478, %v252
    %v517 = vmul.f32 %v481, %v252
    %v518 = vmul.f32 %v486, %v252
    %v519 = vmul.f32 %v489, %v252
    %v520 = vmul.f32 %v494, %v252
    %v521 = vmul.f32 %v497, %v252
    %v522 = vmul.f32 %v502, %v252
    %v523 = vmul.f32 %v505, %v252
    %v524 = vadd.f32 %v508, 0.5
    %v525 = vadd.f32 %v509, 0.5
    %v526 = vadd.f32 %v510, 0.5
    %v527 = vadd.f32 %v511, 0.5
    %v528 = vadd.f32 %v512, 0.5
    %v529 = vadd.f32 %v513, 0.5
    %v530 = vadd.f32 %v514, 0.5
    %v531 = vadd.f32 %v515, 0.5
    %v532 = vadd.f32 %v516, 0.5
    %v533 = vadd.f32 %v517, 0.5
    %v534 = vadd.f32 %v518, 0.5
    %v535 = vadd.f32 %v519, 0.5
    %v536 = vadd.f32 %v520, 0.5
    %v537 = vadd.f32 %v521, 0.5
    %v538 = vadd.f32 %v522, 0.5
    %v539 = vadd.f32 %v523, 0.5
    %v540 = vmax.f32 %v524, 0.0
    %v541 = vmax.f32 %v525, 0.0
    %v542 = vmax.f32 %v526, 0.0
    %v543 = vmax.f32 %v527, 0.0
    %v544 = vmax.f32 %v528, 0.0
    %v545 = vmax.f32 %v529, 0.0
    %v546 = vmax.f32 %v530, 0.0
    %v547 = vmax.f32 %v531, 0.0
    %v548 = vmax.f32 %v532, 0.0
    %v549 = vmax.f32 %v533, 0.0
    %v550 = vmax.f32 %v534, 0.0
    %v551 = vmax.f32 %v535, 0.0
    %v552 = vmax.f32 %v536, 0.0
    %v553 = vmax.f32 %v537, 0.0
    %v554 = vmax.f32 %v538, 0.0
    %v555 = vmax.f32 %v539, 0.0
    %v556 = vmin.f32 %v540, 1.0
    %v557 = vmin.f32 %v541, 1.0
    %v558 = vmin.f32 %v542, 1.0
    %v559 = vmin.f32 %v543, 1.0
    %v560 = vmin.f32 %v544, 1.0
    %v561 = vmin.f32 %v545, 1.0
    %v562 = vmin.f32 %v546, 1.0
    %v563 = vmin.f32 %v547, 1.0
    %v564 = vmin.f32 %v548, 1.0
    %v565 = vmin.f32 %v549, 1.0
    %v566 = vmin.f32 %v550, 1.0
    %v567 = vmin.f32 %v551, 1.0
    %v568 = vmin.f32 %v552, 1.0
    %v569 = vmin.f32 %v553, 1.0
    %v570 = vmin.f32 %v554, 1.0
    %v571 = vmin.f32 %v555, 1.0
    %v572 = vmul.f32 %v446, %v556
    %v573 = vmul.f32 %v449, %v557
    %v574 = vmul.f32 %v454, %v558
    %v575 = vmul.f32 %v457, %v559
    %v576 = vmul.f32 %v462, %v560
    %v577 = vmul.f32 %v465, %v561
    %v578 = vmul.f32 %v470, %v562
    %v579 = vmul.f32 %v473, %v563
    %v580 = vmul.f32 %v478, %v564
    %v581 = vmul.f32 %v481, %v565
    %v582 = vmul.f32 %v486, %v566
    %v583 = vmul.f32 %v489, %v567
    %v584 = vmul.f32 %v494, %v568
    %v585 = vmul.f32 %v497, %v569
    %v586 = vmul.f32 %v502, %v570
    %v587 = vmul.f32 %v505, %v571
    %588 = vst [vmem:[#allocation2] sm:$0xff] 0.0
    %589 = vst [vmem:[#allocation2 + $0x8] sm:$0xff] 0.0
    %590 = vst [vmem:[#allocation2 + $0xa0] sm:$0xff] 0.0
    %591 = vst [vmem:[#allocation2 + $0xa8] sm:$0xff] 0.0
    %s592 = scalar_lea.vmem [#allocation2], 144
    %593 = vst [vmem:[%s592] sm:$0xff] 0.0
    %594 = vst [vmem:[%s592 + $0x8] sm:$0xff] 0.0
    %595 = vst [vmem:[%s592 + $0xa0] sm:$0xff] 0.0
    %596 = vst [vmem:[%s592 + $0xa8] sm:$0xff] 0.0
    %s597 = scalar_lea.vmem [#allocation2], 16
    %598 = vst [vmem:[%s597] sm:$0x1] 0.0
    %599 = vst [vmem:[%s597 + $0x10] sm:$0x1] 0.0
    %600 = vst [vmem:[%s597 + $0x20] sm:$0x1] 0.0
    %601 = vst [vmem:[%s597 + $0x30] sm:$0x1] 0.0
    %602 = vst [vmem:[%s597 + $0x40] sm:$0x1] 0.0
    %603 = vst [vmem:[%s597 + $0x50] sm:$0x1] 0.0
    %604 = vst [vmem:[%s597 + $0x60] sm:$0x1] 0.0
    %605 = vst [vmem:[%s597 + $0x70] sm:$0x1] 0.0
    %606 = vst [vmem:[%s597 + $0xa0] sm:$0x1] 0.0
    %607 = vst [vmem:[%s597 + $0xb0] sm:$0x1] 0.0
    %608 = vst [vmem:[%s597 + $0xc0] sm:$0x1] 0.0
    %609 = vst [vmem:[%s597 + $0xd0] sm:$0x1] 0.0
    %610 = vst [vmem:[%s597 + $0xe0] sm:$0x1] 0.0
    %611 = vst [vmem:[%s597 + $0xf0] sm:$0x1] 0.0
    %612 = vst [vmem:[%s597 + $0x100] sm:$0x1] 0.0
    %613 = vst [vmem:[%s597 + $0x110] sm:$0x1] 0.0
    %614 = vst [vmem:[%s597 + $0x9] sm:$0x1] 0.0
    %615 = vst [vmem:[%s597 + $0x19] sm:$0x1] 0.0
    %616 = vst [vmem:[%s597 + $0x29] sm:$0x1] 0.0
    %617 = vst [vmem:[%s597 + $0x39] sm:$0x1] 0.0
    %618 = vst [vmem:[%s597 + $0x49] sm:$0x1] 0.0
    %619 = vst [vmem:[%s597 + $0x59] sm:$0x1] 0.0
    %620 = vst [vmem:[%s597 + $0x69] sm:$0x1] 0.0
    %621 = vst [vmem:[%s597 + $0x79] sm:$0x1] 0.0
    %622 = vst [vmem:[%s597 + $0xa9] sm:$0x1] 0.0
    %623 = vst [vmem:[%s597 + $0xb9] sm:$0x1] 0.0
    %624 = vst [vmem:[%s597 + $0xc9] sm:$0x1] 0.0
    %625 = vst [vmem:[%s597 + $0xd9] sm:$0x1] 0.0
    %626 = vst [vmem:[%s597 + $0xe9] sm:$0x1] 0.0
    %627 = vst [vmem:[%s597 + $0xf9] sm:$0x1] 0.0
    %628 = vst [vmem:[%s597 + $0x109] sm:$0x1] 0.0
    %629 = vst [vmem:[%s597 + $0x119] sm:$0x1] 0.0
    %630 = vst [vmem:[%s597 + $0x1] sm:$0xff] %v572
    %631 = vst [vmem:[%s597 + $0x11] sm:$0xff] %v573
    %632 = vst [vmem:[%s597 + $0x21] sm:$0xff] %v574
    %633 = vst [vmem:[%s597 + $0x31] sm:$0xff] %v575
    %634 = vst [vmem:[%s597 + $0x41] sm:$0xff] %v576
    %635 = vst [vmem:[%s597 + $0x51] sm:$0xff] %v577
    %636 = vst [vmem:[%s597 + $0x61] sm:$0xff] %v578
    %637 = vst [vmem:[%s597 + $0x71] sm:$0xff] %v579
    %638 = vst [vmem:[%s597 + $0xa1] sm:$0xff] %v580
    %639 = vst [vmem:[%s597 + $0xb1] sm:$0xff] %v581
    %640 = vst [vmem:[%s597 + $0xc1] sm:$0xff] %v582
    %641 = vst [vmem:[%s597 + $0xd1] sm:$0xff] %v583
    %642 = vst [vmem:[%s597 + $0xe1] sm:$0xff] %v584
    %643 = vst [vmem:[%s597 + $0xf1] sm:$0xff] %v585
    %644 = vst [vmem:[%s597 + $0x101] sm:$0xff] %v586
    %645 = vst [vmem:[%s597 + $0x111] sm:$0xff] %v587
    %v646 = vld [vmem:[#allocation2] sm:$0xff]
    %v647 = vld [vmem:[#allocation2 + $0x10] sm:$0xff]
    %v648 = vld [vmem:[#allocation2 + $0x20] sm:$0xff]
    %v649 = vld [vmem:[#allocation2 + $0x30] sm:$0xff]
    %v650 = vld [vmem:[#allocation2 + $0x40] sm:$0xff]
    %v651 = vld [vmem:[#allocation2 + $0x50] sm:$0xff]
    %v652 = vld [vmem:[#allocation2 + $0x60] sm:$0xff]
    %v653 = vld [vmem:[#allocation2 + $0x70] sm:$0xff]
    %v654 = vld [vmem:[#allocation2 + $0xa0] sm:$0xff]
    %v655 = vld [vmem:[#allocation2 + $0xb0] sm:$0xff]
    %v656 = vld [vmem:[#allocation2 + $0xc0] sm:$0xff]
    %v657 = vld [vmem:[#allocation2 + $0xd0] sm:$0xff]
    %v658 = vld [vmem:[#allocation2 + $0xe0] sm:$0xff]
    %v659 = vld [vmem:[#allocation2 + $0xf0] sm:$0xff]
    %v660 = vld [vmem:[#allocation2 + $0x100] sm:$0xff]
    %v661 = vld [vmem:[#allocation2 + $0x110] sm:$0xff]
    %v662 = vld [vmem:[%s3] sm:$0x1]
    %v663 = vlaneseq
    %v664 = vshrl.u32 %v663, 7
    %v665 = vsub.s32 0, %v664
    %v666 = vrot.slane %v662, %v665
    %v667 = vmul.f32 %v646, %v666
    %v668 = vmul.f32 %v647, %v666
    %v669 = vmul.f32 %v648, %v666
    %v670 = vmul.f32 %v649, %v666
    %v671 = vmul.f32 %v650, %v666
    %v672 = vmul.f32 %v651, %v666
    %v673 = vmul.f32 %v652, %v666
    %v674 = vmul.f32 %v653, %v666
    %v675 = vmul.f32 %v654, %v666
    %v676 = vmul.f32 %v655, %v666
    %v677 = vmul.f32 %v656, %v666
    %v678 = vmul.f32 %v657, %v666
    %v679 = vmul.f32 %v658, %v666
    %v680 = vmul.f32 %v659, %v666
    %v681 = vmul.f32 %v660, %v666
    %v682 = vmul.f32 %v661, %v666
    %v683 = vadd.f32 %v667, 0.0
    %v684 = vadd.f32 %v668, 0.0
    %v685 = vadd.f32 %v669, 0.0
    %v686 = vadd.f32 %v670, 0.0
    %v687 = vadd.f32 %v671, 0.0
    %v688 = vadd.f32 %v672, 0.0
    %v689 = vadd.f32 %v673, 0.0
    %v690 = vadd.f32 %v674, 0.0
    %v691 = vadd.f32 %v675, 0.0
    %v692 = vadd.f32 %v676, 0.0
    %v693 = vadd.f32 %v677, 0.0
    %v694 = vadd.f32 %v678, 0.0
    %v695 = vadd.f32 %v679, 0.0
    %v696 = vadd.f32 %v680, 0.0
    %v697 = vadd.f32 %v681, 0.0
    %v698 = vadd.f32 %v682, 0.0
    %v699 = vld [vmem:[#allocation2 + $0x1] sm:$0xff]
    %v700 = vld [vmem:[#allocation2 + $0x11] sm:$0xff]
    %v701 = vld [vmem:[#allocation2 + $0x21] sm:$0xff]
    %v702 = vld [vmem:[#allocation2 + $0x31] sm:$0xff]
    %v703 = vld [vmem:[#allocation2 + $0x41] sm:$0xff]
    %v704 = vld [vmem:[#allocation2 + $0x51] sm:$0xff]
    %v705 = vld [vmem:[#allocation2 + $0x61] sm:$0xff]
    %v706 = vld [vmem:[#allocation2 + $0x71] sm:$0xff]
    %v707 = vld [vmem:[#allocation2 + $0xa1] sm:$0xff]
    %v708 = vld [vmem:[#allocation2 + $0xb1] sm:$0xff]
    %v709 = vld [vmem:[#allocation2 + $0xc1] sm:$0xff]
    %v710 = vld [vmem:[#allocation2 + $0xd1] sm:$0xff]
    %v711 = vld [vmem:[#allocation2 + $0xe1] sm:$0xff]
    %v712 = vld [vmem:[#allocation2 + $0xf1] sm:$0xff]
    %v713 = vld [vmem:[#allocation2 + $0x101] sm:$0xff]
    %v714 = vld [vmem:[#allocation2 + $0x111] sm:$0xff]
    %v715 = vld [vmem:[%s3 + $0x1] sm:$0x1]
    %v716 = vlaneseq
    %v717 = vshrl.u32 %v716, 7
    %v718 = vsub.s32 0, %v717
    %v719 = vrot.slane %v715, %v718
    %v720 = vmul.f32 %v699, %v719
    %v721 = vmul.f32 %v700, %v719
    %v722 = vmul.f32 %v701, %v719
    %v723 = vmul.f32 %v702, %v719
    %v724 = vmul.f32 %v703, %v719
    %v725 = vmul.f32 %v704, %v719
    %v726 = vmul.f32 %v705, %v719
    %v727 = vmul.f32 %v706, %v719
    %v728 = vmul.f32 %v707, %v719
    %v729 = vmul.f32 %v708, %v719
    %v730 = vmul.f32 %v709, %v719
    %v731 = vmul.f32 %v710, %v719
    %v732 = vmul.f32 %v711, %v719
    %v733 = vmul.f32 %v712, %v719
    %v734 = vmul.f32 %v713, %v719
    %v735 = vmul.f32 %v714, %v719
    %v736 = vadd.f32 %v683, %v720
    %v737 = vadd.f32 %v684, %v721
    %v738 = vadd.f32 %v685, %v722
    %v739 = vadd.f32 %v686, %v723
    %v740 = vadd.f32 %v687, %v724
    %v741 = vadd.f32 %v688, %v725
    %v742 = vadd.f32 %v689, %v726
    %v743 = vadd.f32 %v690, %v727
    %v744 = vadd.f32 %v691, %v728
    %v745 = vadd.f32 %v692, %v729
    %v746 = vadd.f32 %v693, %v730
    %v747 = vadd.f32 %v694, %v731
    %v748 = vadd.f32 %v695, %v732
    %v749 = vadd.f32 %v696, %v733
    %v750 = vadd.f32 %v697, %v734
    %v751 = vadd.f32 %v698, %v735
    %v752 = vld [vmem:[#allocation2 + $0x2] sm:$0xff]
    %v753 = vld [vmem:[#allocation2 + $0x12] sm:$0xff]
    %v754 = vld [vmem:[#allocation2 + $0x22] sm:$0xff]
    %v755 = vld [vmem:[#allocation2 + $0x32] sm:$0xff]
    %v756 = vld [vmem:[#allocation2 + $0x42] sm:$0xff]
    %v757 = vld [vmem:[#allocation2 + $0x52] sm:$0xff]
    %v758 = vld [vmem:[#allocation2 + $0x62] sm:$0xff]
    %v759 = vld [vmem:[#allocation2 + $0x72] sm:$0xff]
    %v760 = vld [vmem:[#allocation2 + $0xa2] sm:$0xff]
    %v761 = vld [vmem:[#allocation2 + $0xb2] sm:$0xff]
    %v762 = vld [vmem:[#allocation2 + $0xc2] sm:$0xff]
    %v763 = vld [vmem:[#allocation2 + $0xd2] sm:$0xff]
    %v764 = vld [vmem:[#allocation2 + $0xe2] sm:$0xff]
    %v765 = vld [vmem:[#allocation2 + $0xf2] sm:$0xff]
    %v766 = vld [vmem:[#allocation2 + $0x102] sm:$0xff]
    %v767 = vld [vmem:[#allocation2 + $0x112] sm:$0xff]
    %v768 = vld [vmem:[%s3 + $0x2] sm:$0x1]
    %v769 = vlaneseq
    %v770 = vshrl.u32 %v769, 7
    %v771 = vsub.s32 0, %v770
    %v772 = vrot.slane %v768, %v771
    %v773 = vmul.f32 %v752, %v772
    %v774 = vmul.f32 %v753, %v772
    %v775 = vmul.f32 %v754, %v772
    %v776 = vmul.f32 %v755, %v772
    %v777 = vmul.f32 %v756, %v772
    %v778 = vmul.f32 %v757, %v772
    %v779 = vmul.f32 %v758, %v772
    %v780 = vmul.f32 %v759, %v772
    %v781 = vmul.f32 %v760, %v772
    %v782 = vmul.f32 %v761, %v772
    %v783 = vmul.f32 %v762, %v772
    %v784 = vmul.f32 %v763, %v772
    %v785 = vmul.f32 %v764, %v772
    %v786 = vmul.f32 %v765, %v772
    %v787 = vmul.f32 %v766, %v772
    %v788 = vmul.f32 %v767, %v772
    %v789 = vadd.f32 %v736, %v773
    %v790 = vadd.f32 %v737, %v774
    %v791 = vadd.f32 %v738, %v775
    %v792 = vadd.f32 %v739, %v776
    %v793 = vadd.f32 %v740, %v777
    %v794 = vadd.f32 %v741, %v778
    %v795 = vadd.f32 %v742, %v779
    %v796 = vadd.f32 %v743, %v780
    %v797 = vadd.f32 %v744, %v781
    %v798 = vadd.f32 %v745, %v782
    %v799 = vadd.f32 %v746, %v783
    %v800 = vadd.f32 %v747, %v784
    %v801 = vadd.f32 %v748, %v785
    %v802 = vadd.f32 %v749, %v786
    %v803 = vadd.f32 %v750, %v787
    %v804 = vadd.f32 %v751, %v788
    %v805 = vld [vmem:[%s597] sm:$0xff]
    %v806 = vld [vmem:[%s597 + $0x10] sm:$0xff]
    %v807 = vld [vmem:[%s597 + $0x20] sm:$0xff]
    %v808 = vld [vmem:[%s597 + $0x30] sm:$0xff]
    %v809 = vld [vmem:[%s597 + $0x40] sm:$0xff]
    %v810 = vld [vmem:[%s597 + $0x50] sm:$0xff]
    %v811 = vld [vmem:[%s597 + $0x60] sm:$0xff]
    %v812 = vld [vmem:[%s597 + $0x70] sm:$0xff]
    %v813 = vld [vmem:[%s597 + $0xa0] sm:$0xff]
    %v814 = vld [vmem:[%s597 + $0xb0] sm:$0xff]
    %v815 = vld [vmem:[%s597 + $0xc0] sm:$0xff]
    %v816 = vld [vmem:[%s597 + $0xd0] sm:$0xff]
    %v817 = vld [vmem:[%s597 + $0xe0] sm:$0xff]
    %v818 = vld [vmem:[%s597 + $0xf0] sm:$0xff]
    %v819 = vld [vmem:[%s597 + $0x100] sm:$0xff]
    %v820 = vld [vmem:[%s597 + $0x110] sm:$0xff]
    %v821 = vld [vmem:[%s3 + $0x3] sm:$0x1]
    %v822 = vlaneseq
    %v823 = vshrl.u32 %v822, 7
    %v824 = vsub.s32 0, %v823
    %v825 = vrot.slane %v821, %v824
    %v826 = vmul.f32 %v805, %v825
    %v827 = vmul.f32 %v806, %v825
    %v828 = vmul.f32 %v807, %v825
    %v829 = vmul.f32 %v808, %v825
    %v830 = vmul.f32 %v809, %v825
    %v831 = vmul.f32 %v810, %v825
    %v832 = vmul.f32 %v811, %v825
    %v833 = vmul.f32 %v812, %v825
    %v834 = vmul.f32 %v813, %v825
    %v835 = vmul.f32 %v814, %v825
    %v836 = vmul.f32 %v815, %v825
    %v837 = vmul.f32 %v816, %v825
    %v838 = vmul.f32 %v817, %v825
    %v839 = vmul.f32 %v818, %v825
    %v840 = vmul.f32 %v819, %v825
    %v841 = vmul.f32 %v820, %v825
    %v842 = vadd.f32 %v789, %v826
    %v843 = vadd.f32 %v790, %v827
    %v844 = vadd.f32 %v791, %v828
    %v845 = vadd.f32 %v792, %v829
    %v846 = vadd.f32 %v793, %v830
    %v847 = vadd.f32 %v794, %v831
    %v848 = vadd.f32 %v795, %v832
    %v849 = vadd.f32 %v796, %v833
    %v850 = vadd.f32 %v797, %v834
    %v851 = vadd.f32 %v798, %v835
    %v852 = vadd.f32 %v799, %v836
    %v853 = vadd.f32 %v800, %v837
    %v854 = vadd.f32 %v801, %v838
    %v855 = vadd.f32 %v802, %v839
    %v856 = vadd.f32 %v803, %v840
    %v857 = vadd.f32 %v804, %v841
    %v858 = vld [vmem:[%s597 + $0x1] sm:$0xff]
    %v859 = vld [vmem:[%s597 + $0x11] sm:$0xff]
    %v860 = vld [vmem:[%s597 + $0x21] sm:$0xff]
    %v861 = vld [vmem:[%s597 + $0x31] sm:$0xff]
    %v862 = vld [vmem:[%s597 + $0x41] sm:$0xff]
    %v863 = vld [vmem:[%s597 + $0x51] sm:$0xff]
    %v864 = vld [vmem:[%s597 + $0x61] sm:$0xff]
    %v865 = vld [vmem:[%s597 + $0x71] sm:$0xff]
    %v866 = vld [vmem:[%s597 + $0xa1] sm:$0xff]
    %v867 = vld [vmem:[%s597 + $0xb1] sm:$0xff]
    %v868 = vld [vmem:[%s597 + $0xc1] sm:$0xff]
    %v869 = vld [vmem:[%s597 + $0xd1] sm:$0xff]
    %v870 = vld [vmem:[%s597 + $0xe1] sm:$0xff]
    %v871 = vld [vmem:[%s597 + $0xf1] sm:$0xff]
    %v872 = vld [vmem:[%s597 + $0x101] sm:$0xff]
    %v873 = vld [vmem:[%s597 + $0x111] sm:$0xff]
    %v874 = vld [vmem:[%s3 + $0x4] sm:$0x1]
    %v875 = vlaneseq
    %v876 = vshrl.u32 %v875, 7
    %v877 = vsub.s32 0, %v876
    %v878 = vrot.slane %v874, %v877
    %v879 = vmul.f32 %v858, %v878
    %v880 = vmul.f32 %v859, %v878
    %v881 = vmul.f32 %v860, %v878
    %v882 = vmul.f32 %v861, %v878
    %v883 = vmul.f32 %v862, %v878
    %v884 = vmul.f32 %v863, %v878
    %v885 = vmul.f32 %v864, %v878
    %v886 = vmul.f32 %v865, %v878
    %v887 = vmul.f32 %v866, %v878
    %v888 = vmul.f32 %v867, %v878
    %v889 = vmul.f32 %v868, %v878
    %v890 = vmul.f32 %v869, %v878
    %v891 = vmul.f32 %v870, %v878
    %v892 = vmul.f32 %v871, %v878
    %v893 = vmul.f32 %v872, %v878
    %v894 = vmul.f32 %v873, %v878
    %v895 = vadd.f32 %v842, %v879
    %v896 = vadd.f32 %v843, %v880
    %v897 = vadd.f32 %v844, %v881
    %v898 = vadd.f32 %v845, %v882
    %v899 = vadd.f32 %v846, %v883
    %v900 = vadd.f32 %v847, %v884
    %v901 = vadd.f32 %v848, %v885
    %v902 = vadd.f32 %v849, %v886
    %v903 = vadd.f32 %v850, %v887
    %v904 = vadd.f32 %v851, %v888
    %v905 = vadd.f32 %v852, %v889
    %v906 = vadd.f32 %v853, %v890
    %v907 = vadd.f32 %v854, %v891
    %v908 = vadd.f32 %v855, %v892
    %v909 = vadd.f32 %v856, %v893
    %v910 = vadd.f32 %v857, %v894
    %v911 = vld [vmem:[%s597 + $0x2] sm:$0xff]
    %v912 = vld [vmem:[%s597 + $0x12] sm:$0xff]
    %v913 = vld [vmem:[%s597 + $0x22] sm:$0xff]
    %v914 = vld [vmem:[%s597 + $0x32] sm:$0xff]
    %v915 = vld [vmem:[%s597 + $0x42] sm:$0xff]
    %v916 = vld [vmem:[%s597 + $0x52] sm:$0xff]
    %v917 = vld [vmem:[%s597 + $0x62] sm:$0xff]
    %v918 = vld [vmem:[%s597 + $0x72] sm:$0xff]
    %v919 = vld [vmem:[%s597 + $0xa2] sm:$0xff]
    %v920 = vld [vmem:[%s597 + $0xb2] sm:$0xff]
    %v921 = vld [vmem:[%s597 + $0xc2] sm:$0xff]
    %v922 = vld [vmem:[%s597 + $0xd2] sm:$0xff]
    %v923 = vld [vmem:[%s597 + $0xe2] sm:$0xff]
    %v924 = vld [vmem:[%s597 + $0xf2] sm:$0xff]
    %v925 = vld [vmem:[%s597 + $0x102] sm:$0xff]
    %v926 = vld [vmem:[%s597 + $0x112] sm:$0xff]
    %v927 = vld [vmem:[%s3 + $0x5] sm:$0x1]
    %v928 = vlaneseq
    %v929 = vshrl.u32 %v928, 7
    %v930 = vsub.s32 0, %v929
    %v931 = vrot.slane %v927, %v930
    %v932 = vmul.f32 %v911, %v931
    %v933 = vmul.f32 %v912, %v931
    %v934 = vmul.f32 %v913, %v931
    %v935 = vmul.f32 %v914, %v931
    %v936 = vmul.f32 %v915, %v931
    %v937 = vmul.f32 %v916, %v931
    %v938 = vmul.f32 %v917, %v931
    %v939 = vmul.f32 %v918, %v931
    %v940 = vmul.f32 %v919, %v931
    %v941 = vmul.f32 %v920, %v931
    %v942 = vmul.f32 %v921, %v931
    %v943 = vmul.f32 %v922, %v931
    %v944 = vmul.f32 %v923, %v931
    %v945 = vmul.f32 %v924, %v931
    %v946 = vmul.f32 %v925, %v931
    %v947 = vmul.f32 %v926, %v931
    %v948 = vadd.f32 %v895, %v932
    %v949 = vadd.f32 %v896, %v933
    %v950 = vadd.f32 %v897, %v934
    %v951 = vadd.f32 %v898, %v935
    %v952 = vadd.f32 %v899, %v936
    %v953 = vadd.f32 %v900, %v937
    %v954 = vadd.f32 %v901, %v938
    %v955 = vadd.f32 %v902, %v939
    %v956 = vadd.f32 %v903, %v940
    %v957 = vadd.f32 %v904, %v941
    %v958 = vadd.f32 %v905, %v942
    %v959 = vadd.f32 %v906, %v943
    %v960 = vadd.f32 %v907, %v944
    %v961 = vadd.f32 %v908, %v945
    %v962 = vadd.f32 %v909, %v946
    %v963 = vadd.f32 %v910, %v947
    %s964 = scalar_lea.vmem [#allocation2], 32
    %v965 = vld [vmem:[%s964] sm:$0xff]
    %v966 = vld [vmem:[%s964 + $0x10] sm:$0xff]
    %v967 = vld [vmem:[%s964 + $0x20] sm:$0xff]
    %v968 = vld [vmem:[%s964 + $0x30] sm:$0xff]
    %v969 = vld [vmem:[%s964 + $0x40] sm:$0xff]
    %v970 = vld [vmem:[%s964 + $0x50] sm:$0xff]
    %v971 = vld [vmem:[%s964 + $0x60] sm:$0xff]
    %v972 = vld [vmem:[%s964 + $0x70] sm:$0xff]
    %v973 = vld [vmem:[%s964 + $0xa0] sm:$0xff]
    %v974 = vld [vmem:[%s964 + $0xb0] sm:$0xff]
    %v975 = vld [vmem:[%s964 + $0xc0] sm:$0xff]
    %v976 = vld [vmem:[%s964 + $0xd0] sm:$0xff]
    %v977 = vld [vmem:[%s964 + $0xe0] sm:$0xff]
    %v978 = vld [vmem:[%s964 + $0xf0] sm:$0xff]
    %v979 = vld [vmem:[%s964 + $0x100] sm:$0xff]
    %v980 = vld [vmem:[%s964 + $0x110] sm:$0xff]
    %v981 = vld [vmem:[%s3 + $0x6] sm:$0x1]
    %v982 = vlaneseq
    %v983 = vshrl.u32 %v982, 7
    %v984 = vsub.s32 0, %v983
    %v985 = vrot.slane %v981, %v984
    %v986 = vmul.f32 %v965, %v985
    %v987 = vmul.f32 %v966, %v985
    %v988 = vmul.f32 %v967, %v985
    %v989 = vmul.f32 %v968, %v985
    %v990 = vmul.f32 %v969, %v985
    %v991 = vmul.f32 %v970, %v985
    %v992 = vmul.f32 %v971, %v985
    %v993 = vmul.f32 %v972, %v985
    %v994 = vmul.f32 %v973, %v985
    %v995 = vmul.f32 %v974, %v985
    %v996 = vmul.f32 %v975, %v985
    %v997 = vmul.f32 %v976, %v985
    %v998 = vmul.f32 %v977, %v985
    %v999 = vmul.f32 %v978, %v985
    %v1000 = vmul.f32 %v979, %v985
    %v1001 = vmul.f32 %v980, %v985
    %v1002 = vadd.f32 %v948, %v986
    %v1003 = vadd.f32 %v949, %v987
    %v1004 = vadd.f32 %v950, %v988
    %v1005 = vadd.f32 %v951, %v989
    %v1006 = vadd.f32 %v952, %v990
    %v1007 = vadd.f32 %v953, %v991
    %v1008 = vadd.f32 %v954, %v992
    %v1009 = vadd.f32 %v955, %v993
    %v1010 = vadd.f32 %v956, %v994
    %v1011 = vadd.f32 %v957, %v995
    %v1012 = vadd.f32 %v958, %v996
    %v1013 = vadd.f32 %v959, %v997
    %v1014 = vadd.f32 %v960, %v998
    %v1015 = vadd.f32 %v961, %v999
    %v1016 = vadd.f32 %v962, %v1000
    %v1017 = vadd.f32 %v963, %v1001
    %v1018 = vld [vmem:[%s964 + $0x1] sm:$0xff]
    %v1019 = vld [vmem:[%s964 + $0x11] sm:$0xff]
    %v1020 = vld [vmem:[%s964 + $0x21] sm:$0xff]
    %v1021 = vld [vmem:[%s964 + $0x31] sm:$0xff]
    %v1022 = vld [vmem:[%s964 + $0x41] sm:$0xff]
    %v1023 = vld [vmem:[%s964 + $0x51] sm:$0xff]
    %v1024 = vld [vmem:[%s964 + $0x61] sm:$0xff]
    %v1025 = vld [vmem:[%s964 + $0x71] sm:$0xff]
    %v1026 = vld [vmem:[%s964 + $0xa1] sm:$0xff]
    %v1027 = vld [vmem:[%s964 + $0xb1] sm:$0xff]
    %v1028 = vld [vmem:[%s964 + $0xc1] sm:$0xff]
    %v1029 = vld [vmem:[%s964 + $0xd1] sm:$0xff]
    %v1030 = vld [vmem:[%s964 + $0xe1] sm:$0xff]
    %v1031 = vld [vmem:[%s964 + $0xf1] sm:$0xff]
    %v1032 = vld [vmem:[%s964 + $0x101] sm:$0xff]
    %v1033 = vld [vmem:[%s964 + $0x111] sm:$0xff]
    %v1034 = vld [vmem:[%s3 + $0x7] sm:$0x1]
    %v1035 = vlaneseq
    %v1036 = vshrl.u32 %v1035, 7
    %v1037 = vsub.s32 0, %v1036
    %v1038 = vrot.slane %v1034, %v1037
    %v1039 = vmul.f32 %v1018, %v1038
    %v1040 = vmul.f32 %v1019, %v1038
    %v1041 = vmul.f32 %v1020, %v1038
    %v1042 = vmul.f32 %v1021, %v1038
    %v1043 = vmul.f32 %v1022, %v1038
    %v1044 = vmul.f32 %v1023, %v1038
    %v1045 = vmul.f32 %v1024, %v1038
    %v1046 = vmul.f32 %v1025, %v1038
    %v1047 = vmul.f32 %v1026, %v1038
    %v1048 = vmul.f32 %v1027, %v1038
    %v1049 = vmul.f32 %v1028, %v1038
    %v1050 = vmul.f32 %v1029, %v1038
    %v1051 = vmul.f32 %v1030, %v1038
    %v1052 = vmul.f32 %v1031, %v1038
    %v1053 = vmul.f32 %v1032, %v1038
    %v1054 = vmul.f32 %v1033, %v1038
    %v1055 = vadd.f32 %v1002, %v1039
    %v1056 = vadd.f32 %v1003, %v1040
    %v1057 = vadd.f32 %v1004, %v1041
    %v1058 = vadd.f32 %v1005, %v1042
    %v1059 = vadd.f32 %v1006, %v1043
    %v1060 = vadd.f32 %v1007, %v1044
    %v1061 = vadd.f32 %v1008, %v1045
    %v1062 = vadd.f32 %v1009, %v1046
    %v1063 = vadd.f32 %v1010, %v1047
    %v1064 = vadd.f32 %v1011, %v1048
    %v1065 = vadd.f32 %v1012, %v1049
    %v1066 = vadd.f32 %v1013, %v1050
    %v1067 = vadd.f32 %v1014, %v1051
    %v1068 = vadd.f32 %v1015, %v1052
    %v1069 = vadd.f32 %v1016, %v1053
    %v1070 = vadd.f32 %v1017, %v1054
    %v1071 = vld [vmem:[%s964 + $0x2] sm:$0xff]
    %v1072 = vld [vmem:[%s964 + $0x12] sm:$0xff]
    %v1073 = vld [vmem:[%s964 + $0x22] sm:$0xff]
    %v1074 = vld [vmem:[%s964 + $0x32] sm:$0xff]
    %v1075 = vld [vmem:[%s964 + $0x42] sm:$0xff]
    %v1076 = vld [vmem:[%s964 + $0x52] sm:$0xff]
    %v1077 = vld [vmem:[%s964 + $0x62] sm:$0xff]
    %v1078 = vld [vmem:[%s964 + $0x72] sm:$0xff]
    %v1079 = vld [vmem:[%s964 + $0xa2] sm:$0xff]
    %v1080 = vld [vmem:[%s964 + $0xb2] sm:$0xff]
    %v1081 = vld [vmem:[%s964 + $0xc2] sm:$0xff]
    %v1082 = vld [vmem:[%s964 + $0xd2] sm:$0xff]
    %v1083 = vld [vmem:[%s964 + $0xe2] sm:$0xff]
    %v1084 = vld [vmem:[%s964 + $0xf2] sm:$0xff]
    %v1085 = vld [vmem:[%s964 + $0x102] sm:$0xff]
    %v1086 = vld [vmem:[%s964 + $0x112] sm:$0xff]
    %v1087 = vld [vmem:[%s3 + $0x8] sm:$0x1]
    %v1088 = vlaneseq
    %v1089 = vshrl.u32 %v1088, 7
    %v1090 = vsub.s32 0, %v1089
    %v1091 = vrot.slane %v1087, %v1090
    %v1092 = vmul.f32 %v1071, %v1091
    %v1093 = vmul.f32 %v1072, %v1091
    %v1094 = vmul.f32 %v1073, %v1091
    %v1095 = vmul.f32 %v1074, %v1091
    %v1096 = vmul.f32 %v1075, %v1091
    %v1097 = vmul.f32 %v1076, %v1091
    %v1098 = vmul.f32 %v1077, %v1091
    %v1099 = vmul.f32 %v1078, %v1091
    %v1100 = vmul.f32 %v1079, %v1091
    %v1101 = vmul.f32 %v1080, %v1091
    %v1102 = vmul.f32 %v1081, %v1091
    %v1103 = vmul.f32 %v1082, %v1091
    %v1104 = vmul.f32 %v1083, %v1091
    %v1105 = vmul.f32 %v1084, %v1091
    %v1106 = vmul.f32 %v1085, %v1091
    %v1107 = vmul.f32 %v1086, %v1091
    %v1108 = vadd.f32 %v1055, %v1092
    %v1109 = vadd.f32 %v1056, %v1093
    %v1110 = vadd.f32 %v1057, %v1094
    %v1111 = vadd.f32 %v1058, %v1095
    %v1112 = vadd.f32 %v1059, %v1096
    %v1113 = vadd.f32 %v1060, %v1097
    %v1114 = vadd.f32 %v1061, %v1098
    %v1115 = vadd.f32 %v1062, %v1099
    %v1116 = vadd.f32 %v1063, %v1100
    %v1117 = vadd.f32 %v1064, %v1101
    %v1118 = vadd.f32 %v1065, %v1102
    %v1119 = vadd.f32 %v1066, %v1103
    %v1120 = vadd.f32 %v1067, %v1104
    %v1121 = vadd.f32 %v1068, %v1105
    %v1122 = vadd.f32 %v1069, %v1106
    %v1123 = vadd.f32 %v1070, %v1107
    %v1124 = vld [vmem:[%s2 + $0x2] sm:$0x1]
    %v1125 = vlaneseq
    %v1126 = vshrl.u32 %v1125, 7
    %v1127 = vsub.s32 0, %v1126
    %v1128 = vrot.slane %v1124, %v1127
    %v1129 = vadd.f32 %v1108, %v1128
    %v1130 = vadd.f32 %v1109, %v1128
    %v1131 = vadd.f32 %v1110, %v1128
    %v1132 = vadd.f32 %v1111, %v1128
    %v1133 = vadd.f32 %v1112, %v1128
    %v1134 = vadd.f32 %v1113, %v1128
    %v1135 = vadd.f32 %v1114, %v1128
    %v1136 = vadd.f32 %v1115, %v1128
    %v1137 = vadd.f32 %v1116, %v1128
    %v1138 = vadd.f32 %v1117, %v1128
    %v1139 = vadd.f32 %v1118, %v1128
    %v1140 = vadd.f32 %v1119, %v1128
    %v1141 = vadd.f32 %v1120, %v1128
    %v1142 = vadd.f32 %v1121, %v1128
    %v1143 = vadd.f32 %v1122, %v1128
    %v1144 = vadd.f32 %v1123, %v1128
    %v1145 = vmul.f32 %v1129, %v252
    %v1146 = vmul.f32 %v1130, %v252
    %v1147 = vmul.f32 %v1131, %v252
    %v1148 = vmul.f32 %v1132, %v252
    %v1149 = vmul.f32 %v1133, %v252
    %v1150 = vmul.f32 %v1134, %v252
    %v1151 = vmul.f32 %v1135, %v252
    %v1152 = vmul.f32 %v1136, %v252
    %v1153 = vmul.f32 %v1137, %v252
    %v1154 = vmul.f32 %v1138, %v252
    %v1155 = vmul.f32 %v1139, %v252
    %v1156 = vmul.f32 %v1140, %v252
    %v1157 = vmul.f32 %v1141, %v252
    %v1158 = vmul.f32 %v1142, %v252
    %v1159 = vmul.f32 %v1143, %v252
    %v1160 = vmul.f32 %v1144, %v252
    %v1161 = vadd.f32 %v1145, 0.5
    %v1162 = vadd.f32 %v1146, 0.5
    %v1163 = vadd.f32 %v1147, 0.5
    %v1164 = vadd.f32 %v1148, 0.5
    %v1165 = vadd.f32 %v1149, 0.5
    %v1166 = vadd.f32 %v1150, 0.5
    %v1167 = vadd.f32 %v1151, 0.5
    %v1168 = vadd.f32 %v1152, 0.5
    %v1169 = vadd.f32 %v1153, 0.5
    %v1170 = vadd.f32 %v1154, 0.5
    %v1171 = vadd.f32 %v1155, 0.5
    %v1172 = vadd.f32 %v1156, 0.5
    %v1173 = vadd.f32 %v1157, 0.5
    %v1174 = vadd.f32 %v1158, 0.5
    %v1175 = vadd.f32 %v1159, 0.5
    %v1176 = vadd.f32 %v1160, 0.5
    %v1177 = vmax.f32 %v1161, 0.0
    %v1178 = vmax.f32 %v1162, 0.0
    %v1179 = vmax.f32 %v1163, 0.0
    %v1180 = vmax.f32 %v1164, 0.0
    %v1181 = vmax.f32 %v1165, 0.0
    %v1182 = vmax.f32 %v1166, 0.0
    %v1183 = vmax.f32 %v1167, 0.0
    %v1184 = vmax.f32 %v1168, 0.0
    %v1185 = vmax.f32 %v1169, 0.0
    %v1186 = vmax.f32 %v1170, 0.0
    %v1187 = vmax.f32 %v1171, 0.0
    %v1188 = vmax.f32 %v1172, 0.0
    %v1189 = vmax.f32 %v1173, 0.0
    %v1190 = vmax.f32 %v1174, 0.0
    %v1191 = vmax.f32 %v1175, 0.0
    %v1192 = vmax.f32 %v1176, 0.0
    %v1193 = vmin.f32 %v1177, 1.0
    %v1194 = vmin.f32 %v1178, 1.0
    %v1195 = vmin.f32 %v1179, 1.0
    %v1196 = vmin.f32 %v1180, 1.0
    %v1197 = vmin.f32 %v1181, 1.0
    %v1198 = vmin.f32 %v1182, 1.0
    %v1199 = vmin.f32 %v1183, 1.0
    %v1200 = vmin.f32 %v1184, 1.0
    %v1201 = vmin.f32 %v1185, 1.0
    %v1202 = vmin.f32 %v1186, 1.0
    %v1203 = vmin.f32 %v1187, 1.0
    %v1204 = vmin.f32 %v1188, 1.0
    %v1205 = vmin.f32 %v1189, 1.0
    %v1206 = vmin.f32 %v1190, 1.0
    %v1207 = vmin.f32 %v1191, 1.0
    %v1208 = vmin.f32 %v1192, 1.0
    %v1209 = vmul.f32 %v1129, %v1193
    %v1210 = vmul.f32 %v1130, %v1194
    %v1211 = vmul.f32 %v1131, %v1195
    %v1212 = vmul.f32 %v1132, %v1196
    %v1213 = vmul.f32 %v1133, %v1197
    %v1214 = vmul.f32 %v1134, %v1198
    %v1215 = vmul.f32 %v1135, %v1199
    %v1216 = vmul.f32 %v1136, %v1200
    %v1217 = vmul.f32 %v1137, %v1201
    %v1218 = vmul.f32 %v1138, %v1202
    %v1219 = vmul.f32 %v1139, %v1203
    %v1220 = vmul.f32 %v1140, %v1204
    %v1221 = vmul.f32 %v1141, %v1205
    %v1222 = vmul.f32 %v1142, %v1206
    %v1223 = vmul.f32 %v1143, %v1207
    %v1224 = vmul.f32 %v1144, %v1208
    %v1225 = vadd.f32 %v1209, %v1210
    %v1226 = vadd.f32 %v1225, %v1211
    %v1227 = vadd.f32 %v1226, %v1212
    %v1228 = vadd.f32 %v1227, %v1213
    %v1229 = vadd.f32 %v1228, %v1214
    %v1230 = vadd.f32 %v1229, %v1215
    %v1231 = vadd.f32 %v1230, %v1216
    %v1232 = vrot.slane %v1231, 4
    %v1233 = vadd.f32 %v1231, %v1232
    %v1234 = vrot.slane %v1233, 2
    %v1235 = vadd.f32 %v1233, %v1234
    %v1236 = vrot.slane %v1235, 1
    %v1237 = vadd.f32 %v1235, %v1236
    %v1238 = vadd.f32 %v1217, %v1218
    %v1239 = vadd.f32 %v1238, %v1219
    %v1240 = vadd.f32 %v1239, %v1220
    %v1241 = vadd.f32 %v1240, %v1221
    %v1242 = vadd.f32 %v1241, %v1222
    %v1243 = vadd.f32 %v1242, %v1223
    %v1244 = vadd.f32 %v1243, %v1224
    %v1245 = vrot.slane %v1244, 4
    %v1246 = vadd.f32 %v1244, %v1245
    %v1247 = vrot.slane %v1246, 2
    %v1248 = vadd.f32 %v1246, %v1247
    %v1249 = vrot.slane %v1248, 1
    %v1250 = vadd.f32 %v1248, %v1249
    %v1251 = vrcp.pop 64.0
    %v1252 = vmul.f32 %v1237, %v1251
    %v1253 = vmul.f32 %v1250, %v1251
    %s1254 = scalar_lea.vmem %s1, 128
    %v1255 = vld [vmem:[%s1254] sm:$0xf]
    %v1256 = vld [vmem:[%s1254 + $0x4] sm:$0xf]
    %v1257 = vld [vmem:[%s1254 + $0x8] sm:$0xf]
    %v1258 = vld [vmem:[%s1254 + $0xc] sm:$0xf]
    %v1259 = vld [vmem:[%s1254 + $0x10] sm:$0xf]
    %v1260 = vld [vmem:[%s1254 + $0x14] sm:$0xf]
    %v1261 = vld [vmem:[%s1254 + $0x18] sm:$0xf]
    %v1262 = vld [vmem:[%s1254 + $0x1c] sm:$0xf]
    %v1263 = vld [vmem:[%s1254 + $0x20] sm:$0xf]
    %v1264 = vld [vmem:[%s1254 + $0x24] sm:$0xf]
    %v1265 = vld [vmem:[%s1254 + $0x28] sm:$0xf]
    %v1266 = vld [vmem:[%s1254 + $0x2c] sm:$0xf]
    %v1267 = vld [vmem:[%s1254 + $0x30] sm:$0xf]
    %v1268 = vld [vmem:[%s1254 + $0x34] sm:$0xf]
    %v1269 = vld [vmem:[%s1254 + $0x38] sm:$0xf]
    %v1270 = vld [vmem:[%s1254 + $0x3c] sm:$0xf]
    %v1271 = vpack.c.bf16 %v1252, %v1252
    %v1272 = vpack.c.bf16 %v1253, %v1253
    %v1273 = vld [vmem:[%s2 + $0x3] sm:$0x1]
    %v1274 = vlaneseq
    %v1275 = vshrl.u32 %v1274, 7
    %v1276 = vsub.s32 0, %v1275
    %v1277 = vrot.slane %v1273, %v1276
    %v1280 = vunpack.c.l.b16 %v1271
    %v1281 = vunpack.c.l.b16 %v1272
    %vm1282 = vcmask 1041409
    %v1283 = vsel %vm1282, %v1281, %v1280
    %v1284 = vpack.c.b16 %v1283, %v1283
    %v1302 = vunpack.c.l.b16 %v1255
    %v1303 = vunpack.c.l.b16 %v1256
    %v1304 = vunpack.c.l.b16 %v1257
    %v1305 = vunpack.c.l.b16 %v1258
    %v1306 = vunpack.c.l.b16 %v1259
    %v1307 = vunpack.c.l.b16 %v1260
    %v1308 = vunpack.c.l.b16 %v1261
    %v1309 = vunpack.c.l.b16 %v1262
    %v1310 = vunpack.c.l.b16 %v1263
    %v1311 = vunpack.c.l.b16 %v1264
    %v1312 = vunpack.c.l.b16 %v1265
    %v1313 = vunpack.c.l.b16 %v1266
    %v1314 = vunpack.c.l.b16 %v1267
    %v1315 = vunpack.c.l.b16 %v1268
    %v1316 = vunpack.c.l.b16 %v1269
    %v1317 = vunpack.c.l.b16 %v1270
    %v1318 = vpack.c.b16 %v1303, %v1302
    %v1319 = vpack.c.b16 %v1305, %v1304
    %v1320 = vpack.c.b16 %v1307, %v1306
    %v1321 = vpack.c.b16 %v1309, %v1308
    %v1322 = vpack.c.b16 %v1311, %v1310
    %v1323 = vpack.c.b16 %v1313, %v1312
    %v1324 = vpack.c.b16 %v1315, %v1314
    %v1325 = vpack.c.b16 %v1317, %v1316
    %1334 = vmatprep.subr.bf16.mxu0 0
    %1335 = vmatpush1.bf16.msra.mxu0 %v1318
    %1336 = vmatprep.subr.bf16.mxu0 0
    %1337 = vmatpush1.bf16.msra.mxu0 %v1319
    %1338 = vmatprep.subr.bf16.mxu0 0
    %1339 = vmatpush1.bf16.msra.mxu0 %v1320
    %1340 = vmatprep.subr.bf16.mxu0 0
    %1341 = vmatpush1.bf16.msra.mxu0 %v1321
    %1342 = vmatprep.subr.bf16.mxu0 0
    %1343 = vmatpush1.bf16.msra.mxu0 %v1322
    %1344 = vmatprep.subr.bf16.mxu0 0
    %1345 = vmatpush1.bf16.msra.mxu0 %v1323
    %1346 = vmatprep.subr.bf16.mxu0 0
    %1347 = vmatpush1.bf16.msra.mxu0 %v1324
    %1348 = vmatprep.subr.bf16.mxu0 0
    %1349 = vmatpush1.bf16.msra.mxu0 %v1325
    %1350 = vmatprep.subr.bf16.mxu0 0
    %1351 = vmatpush1.bf16.msra.mxu0 0
    %1352 = vmatprep.subr.bf16.mxu0 0
    %1353 = vmatpush1.bf16.msra.mxu0 0
    %1354 = vmatprep.subr.bf16.mxu0 0
    %1355 = vmatpush1.bf16.msra.mxu0 0
    %1356 = vmatprep.subr.bf16.mxu0 0
    %1357 = vmatpush1.bf16.msra.mxu0 0
    %1358 = vmatprep.subr.bf16.mxu0 0
    %1359 = vmatpush1.bf16.msra.mxu0 0
    %1360 = vmatprep.subr.bf16.mxu0 0
    %1361 = vmatpush1.bf16.msra.mxu0 0
    %1362 = vmatprep.subr.bf16.mxu0 0
    %1363 = vmatpush1.bf16.msra.mxu0 0
    %1364 = vmatprep.subr.bf16.mxu0 0
    %1365 = vmatpush1.bf16.msra.mxu0 0
    %1366 = vmatprep.mubr.bf16.mxu0 0
    %1367 = vmatmul.mubr.bf16.gmra.mrb[0].mxu0 %v1284
    %v1368 = vpop.f32.mrb[0].mxu0
    %v1369 = vadd.f32 %v1277, %v1368
    %v1370 = vpop.f32.mrb[0].mxu0
    %v1371 = vpop.f32.mrb[0].mxu0
    %v1372 = vpop.f32.mrb[0].mxu0
    %1373 = vdwg.mxu0
    %v1374 = vmax.f32 %v1369, 0.0
    %s1375 = scalar_lea.vmem %s1, 192
    %v1376 = vld [vmem:[%s1375] sm:$0xf]
    %v1377 = vld [vmem:[%s1375 + $0x4] sm:$0xf]
    %v1378 = vld [vmem:[%s1375 + $0x8] sm:$0xf]
    %v1379 = vld [vmem:[%s1375 + $0xc] sm:$0xf]
    %v1380 = vld [vmem:[%s1375 + $0x10] sm:$0xf]
    %v1381 = vld [vmem:[%s1375 + $0x14] sm:$0xf]
    %v1382 = vld [vmem:[%s1375 + $0x18] sm:$0xf]
    %v1383 = vld [vmem:[%s1375 + $0x1c] sm:$0xf]
    %v1384 = vld [vmem:[%s1375 + $0x20] sm:$0xf]
    %v1385 = vld [vmem:[%s1375 + $0x24] sm:$0xf]
    %v1386 = vld [vmem:[%s1375 + $0x28] sm:$0xf]
    %v1387 = vld [vmem:[%s1375 + $0x2c] sm:$0xf]
    %v1388 = vld [vmem:[%s1375 + $0x30] sm:$0xf]
    %v1389 = vld [vmem:[%s1375 + $0x34] sm:$0xf]
    %v1390 = vld [vmem:[%s1375 + $0x38] sm:$0xf]
    %v1391 = vld [vmem:[%s1375 + $0x3c] sm:$0xf]
    %v1392 = vpack.c.bf16 %v1374, %v1374
    %v1393 = vld [vmem:[%s2 + $0x4] sm:$0x1]
    %v1394 = vlaneseq
    %v1395 = vshrl.u32 %v1394, 7
    %v1396 = vsub.s32 0, %v1395
    %v1397 = vrot.slane %v1393, %v1396
    %v1414 = vunpack.c.l.b16 %v1376
    %v1415 = vunpack.c.l.b16 %v1377
    %v1416 = vunpack.c.l.b16 %v1378
    %v1417 = vunpack.c.l.b16 %v1379
    %v1418 = vunpack.c.l.b16 %v1380
    %v1419 = vunpack.c.l.b16 %v1381
    %v1420 = vunpack.c.l.b16 %v1382
    %v1421 = vunpack.c.l.b16 %v1383
    %v1422 = vunpack.c.l.b16 %v1384
    %v1423 = vunpack.c.l.b16 %v1385
    %v1424 = vunpack.c.l.b16 %v1386
    %v1425 = vunpack.c.l.b16 %v1387
    %v1426 = vunpack.c.l.b16 %v1388
    %v1427 = vunpack.c.l.b16 %v1389
    %v1428 = vunpack.c.l.b16 %v1390
    %v1429 = vunpack.c.l.b16 %v1391
    %v1430 = vpack.c.b16 %v1415, %v1414
    %v1431 = vpack.c.b16 %v1417, %v1416
    %v1432 = vpack.c.b16 %v1419, %v1418
    %v1433 = vpack.c.b16 %v1421, %v1420
    %v1434 = vpack.c.b16 %v1423, %v1422
    %v1435 = vpack.c.b16 %v1425, %v1424
    %v1436 = vpack.c.b16 %v1427, %v1426
    %v1437 = vpack.c.b16 %v1429, %v1428
    %1446 = vmatprep.subr.bf16.mxu0 0
    %1447 = vmatpush1.bf16.msra.mxu0 %v1430
    %1448 = vmatprep.subr.bf16.mxu0 0
    %1449 = vmatpush1.bf16.msra.mxu0 %v1431
    %1450 = vmatprep.subr.bf16.mxu0 0
    %1451 = vmatpush1.bf16.msra.mxu0 %v1432
    %1452 = vmatprep.subr.bf16.mxu0 0
    %1453 = vmatpush1.bf16.msra.mxu0 %v1433
    %1454 = vmatprep.subr.bf16.mxu0 0
    %1455 = vmatpush1.bf16.msra.mxu0 %v1434
    %1456 = vmatprep.subr.bf16.mxu0 0
    %1457 = vmatpush1.bf16.msra.mxu0 %v1435
    %1458 = vmatprep.subr.bf16.mxu0 0
    %1459 = vmatpush1.bf16.msra.mxu0 %v1436
    %1460 = vmatprep.subr.bf16.mxu0 0
    %1461 = vmatpush1.bf16.msra.mxu0 %v1437
    %1462 = vmatprep.subr.bf16.mxu0 0
    %1463 = vmatpush1.bf16.msra.mxu0 0
    %1464 = vmatprep.subr.bf16.mxu0 0
    %1465 = vmatpush1.bf16.msra.mxu0 0
    %1466 = vmatprep.subr.bf16.mxu0 0
    %1467 = vmatpush1.bf16.msra.mxu0 0
    %1468 = vmatprep.subr.bf16.mxu0 0
    %1469 = vmatpush1.bf16.msra.mxu0 0
    %1470 = vmatprep.subr.bf16.mxu0 0
    %1471 = vmatpush1.bf16.msra.mxu0 0
    %1472 = vmatprep.subr.bf16.mxu0 0
    %1473 = vmatpush1.bf16.msra.mxu0 0
    %1474 = vmatprep.subr.bf16.mxu0 0
    %1475 = vmatpush1.bf16.msra.mxu0 0
    %1476 = vmatprep.subr.bf16.mxu0 0
    %1477 = vmatpush1.bf16.msra.mxu0 0
    %1478 = vmatprep.mubr.bf16.mxu0 0
    %1479 = vmatmul.mubr.bf16.gmra.mrb[0].mxu0 %v1392
    %v1480 = vpop.f32.mrb[0].mxu0
    %v1481 = vadd.f32 %v1397, %v1480
    %v1482 = vpop.f32.mrb[0].mxu0
    %v1483 = vpop.f32.mrb[0].mxu0
    %v1484 = vpop.f32.mrb[0].mxu0
    %1485 = vdwg.mxu0
    %v1486 = vmul.f32 %v1481, %v252
    %v1487 = vadd.f32 %v1486, 0.5
    %v1488 = vmax.f32 %v1487, 0.0
    %v1489 = vmin.f32 %v1488, 1.0
    %v1492 = vunpack.c.l.s4 1966171168
    %v1493 = vunpack.c.0.s8 %v1492
    %v1494 = vlaneseq
    %v1495 = vshrl.u32 %v1494, 7
    %v1496 = vsub.s32 %v1493, %v1495
    %v1497 = vrot.slane %v1489, %v1496
    %v1498 = vcombine.high %v1497, %v1497
    %v1500 = vunpack.c.l.s4 1966171168
    %v1501 = vunpack.c.0.s8 %v1500
    %v1502 = vlaneseq
    %v1503 = vshrl.u32 %v1502, 7
    %v1504 = vsub.s32 %v1501, %v1503
    %v1505 = vrot.slane %v1497, %v1504
    %v1507 = vunpack.c.l.s4 1966171168
    %v1508 = vunpack.c.0.s8 %v1507
    %v1509 = vlaneseq
    %v1510 = vshrl.u32 %v1509, 7
    %v1511 = vsub.s32 %v1508, %v1510
    %v1512 = vrot.slane %v1498, %v1511
    %v1513 = vlaneseq
    %v1514 = vshrl.u32 %v1513, 7
    %v1515 = vsub.s32 0, %v1514
    %v1516 = vrot.slane %v1505, %v1515
    %v1517 = vlaneseq
    %v1518 = vshrl.u32 %v1517, 7
    %v1519 = vsub.s32 0, %v1518
    %v1520 = vrot.slane %v1512, %v1519
    %v1523 = vmul.f32 %v1209, %v1516
    %v1524 = vmul.f32 %v1210, %v1516
    %v1525 = vmul.f32 %v1211, %v1516
    %v1526 = vmul.f32 %v1212, %v1516
    %v1527 = vmul.f32 %v1213, %v1516
    %v1528 = vmul.f32 %v1214, %v1516
    %v1529 = vmul.f32 %v1215, %v1516
    %v1530 = vmul.f32 %v1216, %v1516
    %v1531 = vmul.f32 %v1217, %v1520
    %v1532 = vmul.f32 %v1218, %v1520
    %v1533 = vmul.f32 %v1219, %v1520
    %v1534 = vmul.f32 %v1220, %v1520
    %v1535 = vmul.f32 %v1221, %v1520
    %v1536 = vmul.f32 %v1222, %v1520
    %v1537 = vmul.f32 %v1223, %v1520
    %v1538 = vmul.f32 %v1224, %v1520
    %s1539 = scalar_lea.vmem %s1, 256
    %v1540 = vld [vmem:[%s1539] sm:$0xf]
    %v1541 = vld [vmem:[%s1539 + $0x4] sm:$0xf]
    %v1542 = vld [vmem:[%s1539 + $0x8] sm:$0xf]
    %v1543 = vld [vmem:[%s1539 + $0xc] sm:$0xf]
    %v1544 = vld [vmem:[%s1539 + $0x10] sm:$0xf]
    %v1545 = vld [vmem:[%s1539 + $0x14] sm:$0xf]
    %v1546 = vld [vmem:[%s1539 + $0x18] sm:$0xf]
    %v1547 = vld [vmem:[%s1539 + $0x1c] sm:$0xf]
    %v1548 = vld [vmem:[%s1539 + $0x20] sm:$0xf]
    %v1549 = vld [vmem:[%s1539 + $0x24] sm:$0xf]
    %v1550 = vld [vmem:[%s1539 + $0x28] sm:$0xf]
    %v1551 = vld [vmem:[%s1539 + $0x2c] sm:$0xf]
    %v1552 = vld [vmem:[%s1539 + $0x30] sm:$0xf]
    %v1553 = vld [vmem:[%s1539 + $0x34] sm:$0xf]
    %v1554 = vld [vmem:[%s1539 + $0x38] sm:$0xf]
    %v1555 = vld [vmem:[%s1539 + $0x3c] sm:$0xf]
    %v1556 = vpack.c.bf16 %v1524, %v1523
    %v1557 = vpack.c.bf16 %v1526, %v1525
    %v1558 = vpack.c.bf16 %v1528, %v1527
    %v1559 = vpack.c.bf16 %v1530, %v1529
    %v1560 = vpack.c.bf16 %v1532, %v1531
    %v1561 = vpack.c.bf16 %v1534, %v1533
    %v1562 = vpack.c.bf16 %v1536, %v1535
    %v1563 = vpack.c.bf16 %v1538, %v1537
    %v1564 = vld [vmem:[%s2 + $0x5] sm:$0x1]
    %v1565 = vlaneseq
    %v1566 = vshrl.u32 %v1565, 7
    %v1567 = vsub.s32 0, %v1566
    %v1568 = vrot.slane %v1564, %v1567
    %v1585 = vunpack.c.l.b16 %v1540
    %v1586 = vunpack.c.l.b16 %v1541
    %v1587 = vunpack.c.l.b16 %v1542
    %v1588 = vunpack.c.l.b16 %v1543
    %v1589 = vunpack.c.l.b16 %v1544
    %v1590 = vunpack.c.l.b16 %v1545
    %v1591 = vunpack.c.l.b16 %v1546
    %v1592 = vunpack.c.l.b16 %v1547
    %v1593 = vunpack.c.l.b16 %v1548
    %v1594 = vunpack.c.l.b16 %v1549
    %v1595 = vunpack.c.l.b16 %v1550
    %v1596 = vunpack.c.l.b16 %v1551
    %v1597 = vunpack.c.l.b16 %v1552
    %v1598 = vunpack.c.l.b16 %v1553
    %v1599 = vunpack.c.l.b16 %v1554
    %v1600 = vunpack.c.l.b16 %v1555
    %v1601 = vpack.c.b16 %v1586, %v1585
    %v1602 = vpack.c.b16 %v1588, %v1587
    %v1603 = vpack.c.b16 %v1590, %v1589
    %v1604 = vpack.c.b16 %v1592, %v1591
    %v1605 = vpack.c.b16 %v1594, %v1593
    %v1606 = vpack.c.b16 %v1596, %v1595
    %v1607 = vpack.c.b16 %v1598, %v1597
    %v1608 = vpack.c.b16 %v1600, %v1599
    %1617 = vmatprep.subr.bf16.mxu0 0
    %1618 = vmatpush1.bf16.msra.mxu0 %v1601
    %1619 = vmatprep.subr.bf16.mxu0 0
    %1620 = vmatpush1.bf16.msra.mxu0 %v1602
    %1621 = vmatprep.subr.bf16.mxu0 0
    %1622 = vmatpush1.bf16.msra.mxu0 %v1603
    %1623 = vmatprep.subr.bf16.mxu0 0
    %1624 = vmatpush1.bf16.msra.mxu0 %v1604
    %1625 = vmatprep.subr.bf16.mxu0 0
    %1626 = vmatpush1.bf16.msra.mxu0 %v1605
    %1627 = vmatprep.subr.bf16.mxu0 0
    %1628 = vmatpush1.bf16.msra.mxu0 %v1606
    %1629 = vmatprep.subr.bf16.mxu0 0
    %1630 = vmatpush1.bf16.msra.mxu0 %v1607
    %1631 = vmatprep.subr.bf16.mxu0 0
    %1632 = vmatpush1.bf16.msra.mxu0 %v1608
    %1633 = vmatprep.subr.bf16.mxu0 0
    %1634 = vmatpush1.bf16.msra.mxu0 0
    %1635 = vmatprep.subr.bf16.mxu0 0
    %1636 = vmatpush1.bf16.msra.mxu0 0
    %1637 = vmatprep.subr.bf16.mxu0 0
    %1638 = vmatpush1.bf16.msra.mxu0 0
    %1639 = vmatprep.subr.bf16.mxu0 0
    %1640 = vmatpush1.bf16.msra.mxu0 0
    %1641 = vmatprep.subr.bf16.mxu0 0
    %1642 = vmatpush1.bf16.msra.mxu0 0
    %1643 = vmatprep.subr.bf16.mxu0 0
    %1644 = vmatpush1.bf16.msra.mxu0 0
    %1645 = vmatprep.subr.bf16.mxu0 0
    %1646 = vmatpush1.bf16.msra.mxu0 0
    %1647 = vmatprep.subr.bf16.mxu0 0
    %1648 = vmatpush1.bf16.msra.mxu0 0
    %1649 = vmatprep.mubr.bf16.mxu0 0
    %1650 = vmatmul.mubr.bf16.gmra.mrb[0].mxu0 %v1556
    %v1651 = vpop.f32.mrb[0].mxu0
    %v1652 = vadd.f32 %v1568, %v1651
    %v1653 = vpop.f32.mrb[0].mxu0
    %v1654 = vpop.f32.mrb[0].mxu0
    %v1655 = vadd.f32 %v1568, %v1654
    %v1656 = vpop.f32.mrb[0].mxu0
    %1657 = vmatprep.mubr.bf16.mxu0 0
    %1658 = vmatmul.mubr.bf16.gmra.mrb[0].mxu0 %v1557
    %v1659 = vpop.f32.mrb[0].mxu0
    %v1660 = vadd.f32 %v1568, %v1659
    %v1661 = vpop.f32.mrb[0].mxu0
    %v1662 = vpop.f32.mrb[0].mxu0
    %v1663 = vadd.f32 %v1568, %v1662
    %v1664 = vpop.f32.mrb[0].mxu0
    %1665 = vmatprep.mubr.bf16.mxu0 0
    %1666 = vmatmul.mubr.bf16.gmra.mrb[0].mxu0 %v1558
    %v1667 = vpop.f32.mrb[0].mxu0
    %v1668 = vadd.f32 %v1568, %v1667
    %v1669 = vpop.f32.mrb[0].mxu0
    %v1670 = vpop.f32.mrb[0].mxu0
    %v1671 = vadd.f32 %v1568, %v1670
    %v1672 = vpop.f32.mrb[0].mxu0
    %1673 = vmatprep.mubr.bf16.mxu0 0
    %1674 = vmatmul.mubr.bf16.gmra.mrb[0].mxu0 %v1559
    %v1675 = vpop.f32.mrb[0].mxu0
    %v1676 = vadd.f32 %v1568, %v1675
    %v1677 = vpop.f32.mrb[0].mxu0
    %v1678 = vpop.f32.mrb[0].mxu0
    %v1679 = vadd.f32 %v1568, %v1678
    %v1680 = vpop.f32.mrb[0].mxu0
    %1681 = vmatprep.mubr.bf16.mxu0 0
    %1682 = vmatmul.mubr.bf16.gmra.mrb[0].mxu0 %v1560
    %v1683 = vpop.f32.mrb[0].mxu0
    %v1684 = vadd.f32 %v1568, %v1683
    %v1685 = vpop.f32.mrb[0].mxu0
    %v1686 = vpop.f32.mrb[0].mxu0
    %v1687 = vadd.f32 %v1568, %v1686
    %v1688 = vpop.f32.mrb[0].mxu0
    %1689 = vmatprep.mubr.bf16.mxu0 0
    %1690 = vmatmul.mubr.bf16.gmra.mrb[0].mxu0 %v1561
    %v1691 = vpop.f32.mrb[0].mxu0
    %v1692 = vadd.f32 %v1568, %v1691
    %v1693 = vpop.f32.mrb[0].mxu0
    %v1694 = vpop.f32.mrb[0].mxu0
    %v1695 = vadd.f32 %v1568, %v1694
    %v1696 = vpop.f32.mrb[0].mxu0
    %1697 = vmatprep.mubr.bf16.mxu0 0
    %1698 = vmatmul.mubr.bf16.gmra.mrb[0].mxu0 %v1562
    %v1699 = vpop.f32.mrb[0].mxu0
    %v1700 = vadd.f32 %v1568, %v1699
    %v1701 = vpop.f32.mrb[0].mxu0
    %v1702 = vpop.f32.mrb[0].mxu0
    %v1703 = vadd.f32 %v1568, %v1702
    %v1704 = vpop.f32.mrb[0].mxu0
    %1705 = vmatprep.mubr.bf16.mxu0 0
    %1706 = vmatmul.mubr.bf16.gmra.mrb[0].mxu0 %v1563
    %v1707 = vpop.f32.mrb[0].mxu0
    %v1708 = vadd.f32 %v1568, %v1707
    %v1709 = vpop.f32.mrb[0].mxu0
    %v1710 = vpop.f32.mrb[0].mxu0
    %v1711 = vadd.f32 %v1568, %v1710
    %v1712 = vpop.f32.mrb[0].mxu0
    %1713 = vdwg.mxu0
    %v1714 = vadd.f32 %v1652, %v317
    %v1715 = vadd.f32 %v1655, %v318
    %v1716 = vadd.f32 %v1660, %v319
    %v1717 = vadd.f32 %v1663, %v320
    %v1718 = vadd.f32 %v1668, %v321
    %v1719 = vadd.f32 %v1671, %v322
    %v1720 = vadd.f32 %v1676, %v323
    %v1721 = vadd.f32 %v1679, %v324
    %v1722 = vadd.f32 %v1684, %v325
    %v1723 = vadd.f32 %v1687, %v326
    %v1724 = vadd.f32 %v1692, %v327
    %v1725 = vadd.f32 %v1695, %v328
    %v1726 = vadd.f32 %v1700, %v329
    %v1727 = vadd.f32 %v1703, %v330
    %v1728 = vadd.f32 %v1708, %v331
    %v1729 = vadd.f32 %v1711, %v332
    %s1730 = scalar_lea.vmem %s1, 320
    %v1731 = vld [vmem:[%s1730] sm:$0xf]
    %v1732 = vld [vmem:[%s1730 + $0x4] sm:$0xf]
    %v1733 = vld [vmem:[%s1730 + $0x8] sm:$0xf]
    %v1734 = vld [vmem:[%s1730 + $0xc] sm:$0xf]
    %v1735 = vld [vmem:[%s1730 + $0x10] sm:$0xf]
    %v1736 = vld [vmem:[%s1730 + $0x14] sm:$0xf]
    %v1737 = vld [vmem:[%s1730 + $0x18] sm:$0xf]
    %v1738 = vld [vmem:[%s1730 + $0x1c] sm:$0xf]
    %v1739 = vld [vmem:[%s1730 + $0x20] sm:$0xf]
    %v1740 = vld [vmem:[%s1730 + $0x24] sm:$0xf]
    %v1741 = vld [vmem:[%s1730 + $0x28] sm:$0xf]
    %v1742 = vld [vmem:[%s1730 + $0x2c] sm:$0xf]
    %v1743 = vld [vmem:[%s1730 + $0x30] sm:$0xf]
    %v1744 = vld [vmem:[%s1730 + $0x34] sm:$0xf]
    %v1745 = vld [vmem:[%s1730 + $0x38] sm:$0xf]
    %v1746 = vld [vmem:[%s1730 + $0x3c] sm:$0xf]
    %v1747 = vpack.c.bf16 %v1715, %v1714
    %v1748 = vpack.c.bf16 %v1717, %v1716
    %v1749 = vpack.c.bf16 %v1719, %v1718
    %v1750 = vpack.c.bf16 %v1721, %v1720
    %v1751 = vpack.c.bf16 %v1723, %v1722
    %v1752 = vpack.c.bf16 %v1725, %v1724
    %v1753 = vpack.c.bf16 %v1727, %v1726
    %v1754 = vpack.c.bf16 %v1729, %v1728
    %v1755 = vld [vmem:[%s2 + $0x6] sm:$0x1]
    %v1756 = vlaneseq
    %v1757 = vshrl.u32 %v1756, 7
    %v1758 = vsub.s32 0, %v1757
    %v1759 = vrot.slane %v1755, %v1758
    %v1776 = vunpack.c.l.b16 %v1731
    %v1777 = vunpack.c.l.b16 %v1732
    %v1778 = vunpack.c.l.b16 %v1733
    %v1779 = vunpack.c.l.b16 %v1734
    %v1780 = vunpack.c.l.b16 %v1735
    %v1781 = vunpack.c.l.b16 %v1736
    %v1782 = vunpack.c.l.b16 %v1737
    %v1783 = vunpack.c.l.b16 %v1738
    %v1784 = vunpack.c.l.b16 %v1739
    %v1785 = vunpack.c.l.b16 %v1740
    %v1786 = vunpack.c.l.b16 %v1741
    %v1787 = vunpack.c.l.b16 %v1742
    %v1788 = vunpack.c.l.b16 %v1743
    %v1789 = vunpack.c.l.b16 %v1744
    %v1790 = vunpack.c.l.b16 %v1745
    %v1791 = vunpack.c.l.b16 %v1746
    %v1792 = vpack.c.b16 %v1777, %v1776
    %v1793 = vpack.c.b16 %v1779, %v1778
    %v1794 = vpack.c.b16 %v1781, %v1780
    %v1795 = vpack.c.b16 %v1783, %v1782
    %v1796 = vpack.c.b16 %v1785, %v1784
    %v1797 = vpack.c.b16 %v1787, %v1786
    %v1798 = vpack.c.b16 %v1789, %v1788
    %v1799 = vpack.c.b16 %v1791, %v1790
    %1808 = vmatprep.subr.bf16.mxu0 0
    %1809 = vmatpush1.bf16.msra.mxu0 %v1792
    %1810 = vmatprep.subr.bf16.mxu0 0
    %1811 = vmatpush1.bf16.msra.mxu0 %v1793
    %1812 = vmatprep.subr.bf16.mxu0 0
    %1813 = vmatpush1.bf16.msra.mxu0 %v1794
    %1814 = vmatprep.subr.bf16.mxu0 0
    %1815 = vmatpush1.bf16.msra.mxu0 %v1795
    %1816 = vmatprep.subr.bf16.mxu0 0
    %1817 = vmatpush1.bf16.msra.mxu0 %v1796
    %1818 = vmatprep.subr.bf16.mxu0 0
    %1819 = vmatpush1.bf16.msra.mxu0 %v1797
    %1820 = vmatprep.subr.bf16.mxu0 0
    %1821 = vmatpush1.bf16.msra.mxu0 %v1798
    %1822 = vmatprep.subr.bf16.mxu0 0
    %1823 = vmatpush1.bf16.msra.mxu0 %v1799
    %1824 = vmatprep.subr.bf16.mxu0 0
    %1825 = vmatpush1.bf16.msra.mxu0 0
    %1826 = vmatprep.subr.bf16.mxu0 0
    %1827 = vmatpush1.bf16.msra.mxu0 0
    %1828 = vmatprep.subr.bf16.mxu0 0
    %1829 = vmatpush1.bf16.msra.mxu0 0
    %1830 = vmatprep.subr.bf16.mxu0 0
    %1831 = vmatpush1.bf16.msra.mxu0 0
    %1832 = vmatprep.subr.bf16.mxu0 0
    %1833 = vmatpush1.bf16.msra.mxu0 0
    %1834 = vmatprep.subr.bf16.mxu0 0
    %1835 = vmatpush1.bf16.msra.mxu0 0
    %1836 = vmatprep.subr.bf16.mxu0 0
    %1837 = vmatpush1.bf16.msra.mxu0 0
    %1838 = vmatprep.subr.bf16.mxu0 0
    %1839 = vmatpush1.bf16.msra.mxu0 0
    %1840 = vmatprep.mubr.bf16.mxu0 0
    %1841 = vmatmul.mubr.bf16.gmra.mrb[0].mxu0 %v1747
    %v1842 = vpop.f32.mrb[0].mxu0
    %v1843 = vadd.f32 %v1759, %v1842
    %v1844 = vpop.f32.mrb[0].mxu0
    %v1845 = vpop.f32.mrb[0].mxu0
    %v1846 = vadd.f32 %v1759, %v1845
    %v1847 = vpop.f32.mrb[0].mxu0
    %1848 = vmatprep.mubr.bf16.mxu0 0
    %1849 = vmatmul.mubr.bf16.gmra.mrb[0].mxu0 %v1748
    %v1850 = vpop.f32.mrb[0].mxu0
    %v1851 = vadd.f32 %v1759, %v1850
    %v1852 = vpop.f32.mrb[0].mxu0
    %v1853 = vpop.f32.mrb[0].mxu0
    %v1854 = vadd.f32 %v1759, %v1853
    %v1855 = vpop.f32.mrb[0].mxu0
    %1856 = vmatprep.mubr.bf16.mxu0 0
    %1857 = vmatmul.mubr.bf16.gmra.mrb[0].mxu0 %v1749
    %v1858 = vpop.f32.mrb[0].mxu0
    %v1859 = vadd.f32 %v1759, %v1858
    %v1860 = vpop.f32.mrb[0].mxu0
    %v1861 = vpop.f32.mrb[0].mxu0
    %v1862 = vadd.f32 %v1759, %v1861
    %v1863 = vpop.f32.mrb[0].mxu0
    %1864 = vmatprep.mubr.bf16.mxu0 0
    %1865 = vmatmul.mubr.bf16.gmra.mrb[0].mxu0 %v1750
    %v1866 = vpop.f32.mrb[0].mxu0
    %v1867 = vadd.f32 %v1759, %v1866
    %v1868 = vpop.f32.mrb[0].mxu0
    %v1869 = vpop.f32.mrb[0].mxu0
    %v1870 = vadd.f32 %v1759, %v1869
    %v1871 = vpop.f32.mrb[0].mxu0
    %1872 = vmatprep.mubr.bf16.mxu0 0
    %1873 = vmatmul.mubr.bf16.gmra.mrb[0].mxu0 %v1751
    %v1874 = vpop.f32.mrb[0].mxu0
    %v1875 = vadd.f32 %v1759, %v1874
    %v1876 = vpop.f32.mrb[0].mxu0
    %v1877 = vpop.f32.mrb[0].mxu0
    %v1878 = vadd.f32 %v1759, %v1877
    %v1879 = vpop.f32.mrb[0].mxu0
    %1880 = vmatprep.mubr.bf16.mxu0 0
    %1881 = vmatmul.mubr.bf16.gmra.mrb[0].mxu0 %v1752
    %v1882 = vpop.f32.mrb[0].mxu0
    %v1883 = vadd.f32 %v1759, %v1882
    %v1884 = vpop.f32.mrb[0].mxu0
    %v1885 = vpop.f32.mrb[0].mxu0
    %v1886 = vadd.f32 %v1759, %v1885
    %v1887 = vpop.f32.mrb[0].mxu0
    %1888 = vmatprep.mubr.bf16.mxu0 0
    %1889 = vmatmul.mubr.bf16.gmra.mrb[0].mxu0 %v1753
    %v1890 = vpop.f32.mrb[0].mxu0
    %v1891 = vadd.f32 %v1759, %v1890
    %v1892 = vpop.f32.mrb[0].mxu0
    %v1893 = vpop.f32.mrb[0].mxu0
    %v1894 = vadd.f32 %v1759, %v1893
    %v1895 = vpop.f32.mrb[0].mxu0
    %1896 = vmatprep.mubr.bf16.mxu0 0
    %1897 = vmatmul.mubr.bf16.gmra.mrb[0].mxu0 %v1754
    %v1898 = vpop.f32.mrb[0].mxu0
    %v1899 = vadd.f32 %v1759, %v1898
    %v1900 = vpop.f32.mrb[0].mxu0
    %v1901 = vpop.f32.mrb[0].mxu0
    %v1902 = vadd.f32 %v1759, %v1901
    %v1903 = vpop.f32.mrb[0].mxu0
    %1904 = vdwg.mxu0
    %v1905 = vmax.f32 %v1843, 0.0
    %v1906 = vmax.f32 %v1846, 0.0
    %v1907 = vmax.f32 %v1851, 0.0
    %v1908 = vmax.f32 %v1854, 0.0
    %v1909 = vmax.f32 %v1859, 0.0
    %v1910 = vmax.f32 %v1862, 0.0
    %v1911 = vmax.f32 %v1867, 0.0
    %v1912 = vmax.f32 %v1870, 0.0
    %v1913 = vmax.f32 %v1875, 0.0
    %v1914 = vmax.f32 %v1878, 0.0
    %v1915 = vmax.f32 %v1883, 0.0
    %v1916 = vmax.f32 %v1886, 0.0
    %v1917 = vmax.f32 %v1891, 0.0
    %v1918 = vmax.f32 %v1894, 0.0
    %v1919 = vmax.f32 %v1899, 0.0
    %v1920 = vmax.f32 %v1902, 0.0
    %1921 = vst [vmem:[%s597 + $0x1] sm:$0xff] %v1905
    %1922 = vst [vmem:[%s597 + $0x11] sm:$0xff] %v1906
    %1923 = vst [vmem:[%s597 + $0x21] sm:$0xff] %v1907
    %1924 = vst [vmem:[%s597 + $0x31] sm:$0xff] %v1908
    %1925 = vst [vmem:[%s597 + $0x41] sm:$0xff] %v1909
    %1926 = vst [vmem:[%s597 + $0x51] sm:$0xff] %v1910
    %1927 = vst [vmem:[%s597 + $0x61] sm:$0xff] %v1911
    %1928 = vst [vmem:[%s597 + $0x71] sm:$0xff] %v1912
    %1929 = vst [vmem:[%s597 + $0xa1] sm:$0xff] %v1913
    %1930 = vst [vmem:[%s597 + $0xb1] sm:$0xff] %v1914
    %1931 = vst [vmem:[%s597 + $0xc1] sm:$0xff] %v1915
    %1932 = vst [vmem:[%s597 + $0xd1] sm:$0xff] %v1916
    %1933 = vst [vmem:[%s597 + $0xe1] sm:$0xff] %v1917
    %1934 = vst [vmem:[%s597 + $0xf1] sm:$0xff] %v1918
    %1935 = vst [vmem:[%s597 + $0x101] sm:$0xff] %v1919
    %1936 = vst [vmem:[%s597 + $0x111] sm:$0xff] %v1920
    %v1937 = vld [vmem:[#allocation2] sm:$0xff]
    %v1938 = vld [vmem:[#allocation2 + $0x10] sm:$0xff]
    %v1939 = vld [vmem:[#allocation2 + $0x20] sm:$0xff]
    %v1940 = vld [vmem:[#allocation2 + $0x30] sm:$0xff]
    %v1941 = vld [vmem:[#allocation2 + $0x40] sm:$0xff]
    %v1942 = vld [vmem:[#allocation2 + $0x50] sm:$0xff]
    %v1943 = vld [vmem:[#allocation2 + $0x60] sm:$0xff]
    %v1944 = vld [vmem:[#allocation2 + $0x70] sm:$0xff]
    %v1945 = vld [vmem:[#allocation2 + $0xa0] sm:$0xff]
    %v1946 = vld [vmem:[#allocation2 + $0xb0] sm:$0xff]
    %v1947 = vld [vmem:[#allocation2 + $0xc0] sm:$0xff]
    %v1948 = vld [vmem:[#allocation2 + $0xd0] sm:$0xff]
    %v1949 = vld [vmem:[#allocation2 + $0xe0] sm:$0xff]
    %v1950 = vld [vmem:[#allocation2 + $0xf0] sm:$0xff]
    %v1951 = vld [vmem:[#allocation2 + $0x100] sm:$0xff]
    %v1952 = vld [vmem:[#allocation2 + $0x110] sm:$0xff]
    %s1953 = scalar_lea.vmem %s3, 16
    %v1954 = vld [vmem:[%s1953] sm:$0x1]
    %v1955 = vlaneseq
    %v1956 = vshrl.u32 %v1955, 7
    %v1957 = vsub.s32 0, %v1956
    %v1958 = vrot.slane %v1954, %v1957
    %v1959 = vmul.f32 %v1937, %v1958
    %v1960 = vmul.f32 %v1938, %v1958
    %v1961 = vmul.f32 %v1939, %v1958
    %v1962 = vmul.f32 %v1940, %v1958
    %v1963 = vmul.f32 %v1941, %v1958
    %v1964 = vmul.f32 %v1942, %v1958
    %v1965 = vmul.f32 %v1943, %v1958
    %v1966 = vmul.f32 %v1944, %v1958
    %v1967 = vmul.f32 %v1945, %v1958
    %v1968 = vmul.f32 %v1946, %v1958
    %v1969 = vmul.f32 %v1947, %v1958
    %v1970 = vmul.f32 %v1948, %v1958
    %v1971 = vmul.f32 %v1949, %v1958
    %v1972 = vmul.f32 %v1950, %v1958
    %v1973 = vmul.f32 %v1951, %v1958
    %v1974 = vmul.f32 %v1952, %v1958
    %v1975 = vadd.f32 %v1959, 0.0
    %v1976 = vadd.f32 %v1960, 0.0
    %v1977 = vadd.f32 %v1961, 0.0
    %v1978 = vadd.f32 %v1962, 0.0
    %v1979 = vadd.f32 %v1963, 0.0
    %v1980 = vadd.f32 %v1964, 0.0
    %v1981 = vadd.f32 %v1965, 0.0
    %v1982 = vadd.f32 %v1966, 0.0
    %v1983 = vadd.f32 %v1967, 0.0
    %v1984 = vadd.f32 %v1968, 0.0
    %v1985 = vadd.f32 %v1969, 0.0
    %v1986 = vadd.f32 %v1970, 0.0
    %v1987 = vadd.f32 %v1971, 0.0
    %v1988 = vadd.f32 %v1972, 0.0
    %v1989 = vadd.f32 %v1973, 0.0
    %v1990 = vadd.f32 %v1974, 0.0
    %v1991 = vld [vmem:[#allocation2 + $0x1] sm:$0xff]
    %v1992 = vld [vmem:[#allocation2 + $0x11] sm:$0xff]
    %v1993 = vld [vmem:[#allocation2 + $0x21] sm:$0xff]
    %v1994 = vld [vmem:[#allocation2 + $0x31] sm:$0xff]
    %v1995 = vld [vmem:[#allocation2 + $0x41] sm:$0xff]
    %v1996 = vld [vmem:[#allocation2 + $0x51] sm:$0xff]
    %v1997 = vld [vmem:[#allocation2 + $0x61] sm:$0xff]
    %v1998 = vld [vmem:[#allocation2 + $0x71] sm:$0xff]
    %v1999 = vld [vmem:[#allocation2 + $0xa1] sm:$0xff]
    %v2000 = vld [vmem:[#allocation2 + $0xb1] sm:$0xff]
    %v2001 = vld [vmem:[#allocation2 + $0xc1] sm:$0xff]
    %v2002 = vld [vmem:[#allocation2 + $0xd1] sm:$0xff]
    %v2003 = vld [vmem:[#allocation2 + $0xe1] sm:$0xff]
    %v2004 = vld [vmem:[#allocation2 + $0xf1] sm:$0xff]
    %v2005 = vld [vmem:[#allocation2 + $0x101] sm:$0xff]
    %v2006 = vld [vmem:[#allocation2 + $0x111] sm:$0xff]
    %v2007 = vld [vmem:[%s1953 + $0x1] sm:$0x1]
    %v2008 = vlaneseq
    %v2009 = vshrl.u32 %v2008, 7
    %v2010 = vsub.s32 0, %v2009
    %v2011 = vrot.slane %v2007, %v2010
    %v2012 = vmul.f32 %v1991, %v2011
    %v2013 = vmul.f32 %v1992, %v2011
    %v2014 = vmul.f32 %v1993, %v2011
    %v2015 = vmul.f32 %v1994, %v2011
    %v2016 = vmul.f32 %v1995, %v2011
    %v2017 = vmul.f32 %v1996, %v2011
    %v2018 = vmul.f32 %v1997, %v2011
    %v2019 = vmul.f32 %v1998, %v2011
    %v2020 = vmul.f32 %v1999, %v2011
    %v2021 = vmul.f32 %v2000, %v2011
    %v2022 = vmul.f32 %v2001, %v2011
    %v2023 = vmul.f32 %v2002, %v2011
    %v2024 = vmul.f32 %v2003, %v2011
    %v2025 = vmul.f32 %v2004, %v2011
    %v2026 = vmul.f32 %v2005, %v2011
    %v2027 = vmul.f32 %v2006, %v2011
    %v2028 = vadd.f32 %v1975, %v2012
    %v2029 = vadd.f32 %v1976, %v2013
    %v2030 = vadd.f32 %v1977, %v2014
    %v2031 = vadd.f32 %v1978, %v2015
    %v2032 = vadd.f32 %v1979, %v2016
    %v2033 = vadd.f32 %v1980, %v2017
    %v2034 = vadd.f32 %v1981, %v2018
    %v2035 = vadd.f32 %v1982, %v2019
    %v2036 = vadd.f32 %v1983, %v2020
    %v2037 = vadd.f32 %v1984, %v2021
    %v2038 = vadd.f32 %v1985, %v2022
    %v2039 = vadd.f32 %v1986, %v2023
    %v2040 = vadd.f32 %v1987, %v2024
    %v2041 = vadd.f32 %v1988, %v2025
    %v2042 = vadd.f32 %v1989, %v2026
    %v2043 = vadd.f32 %v1990, %v2027
    %v2044 = vld [vmem:[#allocation2 + $0x2] sm:$0xff]
    %v2045 = vld [vmem:[#allocation2 + $0x12] sm:$0xff]
    %v2046 = vld [vmem:[#allocation2 + $0x22] sm:$0xff]
    %v2047 = vld [vmem:[#allocation2 + $0x32] sm:$0xff]
    %v2048 = vld [vmem:[#allocation2 + $0x42] sm:$0xff]
    %v2049 = vld [vmem:[#allocation2 + $0x52] sm:$0xff]
    %v2050 = vld [vmem:[#allocation2 + $0x62] sm:$0xff]
    %v2051 = vld [vmem:[#allocation2 + $0x72] sm:$0xff]
    %v2052 = vld [vmem:[#allocation2 + $0xa2] sm:$0xff]
    %v2053 = vld [vmem:[#allocation2 + $0xb2] sm:$0xff]
    %v2054 = vld [vmem:[#allocation2 + $0xc2] sm:$0xff]
    %v2055 = vld [vmem:[#allocation2 + $0xd2] sm:$0xff]
    %v2056 = vld [vmem:[#allocation2 + $0xe2] sm:$0xff]
    %v2057 = vld [vmem:[#allocation2 + $0xf2] sm:$0xff]
    %v2058 = vld [vmem:[#allocation2 + $0x102] sm:$0xff]
    %v2059 = vld [vmem:[#allocation2 + $0x112] sm:$0xff]
    %v2060 = vld [vmem:[%s1953 + $0x2] sm:$0x1]
    %v2061 = vlaneseq
    %v2062 = vshrl.u32 %v2061, 7
    %v2063 = vsub.s32 0, %v2062
    %v2064 = vrot.slane %v2060, %v2063
    %v2065 = vmul.f32 %v2044, %v2064
    %v2066 = vmul.f32 %v2045, %v2064
    %v2067 = vmul.f32 %v2046, %v2064
    %v2068 = vmul.f32 %v2047, %v2064
    %v2069 = vmul.f32 %v2048, %v2064
    %v2070 = vmul.f32 %v2049, %v2064
    %v2071 = vmul.f32 %v2050, %v2064
    %v2072 = vmul.f32 %v2051, %v2064
    %v2073 = vmul.f32 %v2052, %v2064
    %v2074 = vmul.f32 %v2053, %v2064
    %v2075 = vmul.f32 %v2054, %v2064
    %v2076 = vmul.f32 %v2055, %v2064
    %v2077 = vmul.f32 %v2056, %v2064
    %v2078 = vmul.f32 %v2057, %v2064
    %v2079 = vmul.f32 %v2058, %v2064
    %v2080 = vmul.f32 %v2059, %v2064
    %v2081 = vadd.f32 %v2028, %v2065
    %v2082 = vadd.f32 %v2029, %v2066
    %v2083 = vadd.f32 %v2030, %v2067
    %v2084 = vadd.f32 %v2031, %v2068
    %v2085 = vadd.f32 %v2032, %v2069
    %v2086 = vadd.f32 %v2033, %v2070
    %v2087 = vadd.f32 %v2034, %v2071
    %v2088 = vadd.f32 %v2035, %v2072
    %v2089 = vadd.f32 %v2036, %v2073
    %v2090 = vadd.f32 %v2037, %v2074
    %v2091 = vadd.f32 %v2038, %v2075
    %v2092 = vadd.f32 %v2039, %v2076
    %v2093 = vadd.f32 %v2040, %v2077
    %v2094 = vadd.f32 %v2041, %v2078
    %v2095 = vadd.f32 %v2042, %v2079
    %v2096 = vadd.f32 %v2043, %v2080
    %v2097 = vld [vmem:[%s597] sm:$0xff]
    %v2098 = vld [vmem:[%s597 + $0x10] sm:$0xff]
    %v2099 = vld [vmem:[%s597 + $0x20] sm:$0xff]
    %v2100 = vld [vmem:[%s597 + $0x30] sm:$0xff]
    %v2101 = vld [vmem:[%s597 + $0x40] sm:$0xff]
    %v2102 = vld [vmem:[%s597 + $0x50] sm:$0xff]
    %v2103 = vld [vmem:[%s597 + $0x60] sm:$0xff]
    %v2104 = vld [vmem:[%s597 + $0x70] sm:$0xff]
    %v2105 = vld [vmem:[%s597 + $0xa0] sm:$0xff]
    %v2106 = vld [vmem:[%s597 + $0xb0] sm:$0xff]
    %v2107 = vld [vmem:[%s597 + $0xc0] sm:$0xff]
    %v2108 = vld [vmem:[%s597 + $0xd0] sm:$0xff]
    %v2109 = vld [vmem:[%s597 + $0xe0] sm:$0xff]
    %v2110 = vld [vmem:[%s597 + $0xf0] sm:$0xff]
    %v2111 = vld [vmem:[%s597 + $0x100] sm:$0xff]
    %v2112 = vld [vmem:[%s597 + $0x110] sm:$0xff]
    %v2113 = vld [vmem:[%s1953 + $0x3] sm:$0x1]
    %v2114 = vlaneseq
    %v2115 = vshrl.u32 %v2114, 7
    %v2116 = vsub.s32 0, %v2115
    %v2117 = vrot.slane %v2113, %v2116
    %v2118 = vmul.f32 %v2097, %v2117
    %v2119 = vmul.f32 %v2098, %v2117
    %v2120 = vmul.f32 %v2099, %v2117
    %v2121 = vmul.f32 %v2100, %v2117
    %v2122 = vmul.f32 %v2101, %v2117
    %v2123 = vmul.f32 %v2102, %v2117
    %v2124 = vmul.f32 %v2103, %v2117
    %v2125 = vmul.f32 %v2104, %v2117
    %v2126 = vmul.f32 %v2105, %v2117
    %v2127 = vmul.f32 %v2106, %v2117
    %v2128 = vmul.f32 %v2107, %v2117
    %v2129 = vmul.f32 %v2108, %v2117
    %v2130 = vmul.f32 %v2109, %v2117
    %v2131 = vmul.f32 %v2110, %v2117
    %v2132 = vmul.f32 %v2111, %v2117
    %v2133 = vmul.f32 %v2112, %v2117
    %v2134 = vadd.f32 %v2081, %v2118
    %v2135 = vadd.f32 %v2082, %v2119
    %v2136 = vadd.f32 %v2083, %v2120
    %v2137 = vadd.f32 %v2084, %v2121
    %v2138 = vadd.f32 %v2085, %v2122
    %v2139 = vadd.f32 %v2086, %v2123
    %v2140 = vadd.f32 %v2087, %v2124
    %v2141 = vadd.f32 %v2088, %v2125
    %v2142 = vadd.f32 %v2089, %v2126
    %v2143 = vadd.f32 %v2090, %v2127
    %v2144 = vadd.f32 %v2091, %v2128
    %v2145 = vadd.f32 %v2092, %v2129
    %v2146 = vadd.f32 %v2093, %v2130
    %v2147 = vadd.f32 %v2094, %v2131
    %v2148 = vadd.f32 %v2095, %v2132
    %v2149 = vadd.f32 %v2096, %v2133
    %v2150 = vld [vmem:[%s597 + $0x1] sm:$0xff]
    %v2151 = vld [vmem:[%s597 + $0x11] sm:$0xff]
    %v2152 = vld [vmem:[%s597 + $0x21] sm:$0xff]
    %v2153 = vld [vmem:[%s597 + $0x31] sm:$0xff]
    %v2154 = vld [vmem:[%s597 + $0x41] sm:$0xff]
    %v2155 = vld [vmem:[%s597 + $0x51] sm:$0xff]
    %v2156 = vld [vmem:[%s597 + $0x61] sm:$0xff]
    %v2157 = vld [vmem:[%s597 + $0x71] sm:$0xff]
    %v2158 = vld [vmem:[%s597 + $0xa1] sm:$0xff]
    %v2159 = vld [vmem:[%s597 + $0xb1] sm:$0xff]
    %v2160 = vld [vmem:[%s597 + $0xc1] sm:$0xff]
    %v2161 = vld [vmem:[%s597 + $0xd1] sm:$0xff]
    %v2162 = vld [vmem:[%s597 + $0xe1] sm:$0xff]
    %v2163 = vld [vmem:[%s597 + $0xf1] sm:$0xff]
    %v2164 = vld [vmem:[%s597 + $0x101] sm:$0xff]
    %v2165 = vld [vmem:[%s597 + $0x111] sm:$0xff]
    %v2166 = vld [vmem:[%s1953 + $0x4] sm:$0x1]
    %v2167 = vlaneseq
    %v2168 = vshrl.u32 %v2167, 7
    %v2169 = vsub.s32 0, %v2168
    %v2170 = vrot.slane %v2166, %v2169
    %v2171 = vmul.f32 %v2150, %v2170
    %v2172 = vmul.f32 %v2151, %v2170
    %v2173 = vmul.f32 %v2152, %v2170
    %v2174 = vmul.f32 %v2153, %v2170
    %v2175 = vmul.f32 %v2154, %v2170
    %v2176 = vmul.f32 %v2155, %v2170
    %v2177 = vmul.f32 %v2156, %v2170
    %v2178 = vmul.f32 %v2157, %v2170
    %v2179 = vmul.f32 %v2158, %v2170
    %v2180 = vmul.f32 %v2159, %v2170
    %v2181 = vmul.f32 %v2160, %v2170
    %v2182 = vmul.f32 %v2161, %v2170
    %v2183 = vmul.f32 %v2162, %v2170
    %v2184 = vmul.f32 %v2163, %v2170
    %v2185 = vmul.f32 %v2164, %v2170
    %v2186 = vmul.f32 %v2165, %v2170
    %v2187 = vadd.f32 %v2134, %v2171
    %v2188 = vadd.f32 %v2135, %v2172
    %v2189 = vadd.f32 %v2136, %v2173
    %v2190 = vadd.f32 %v2137, %v2174
    %v2191 = vadd.f32 %v2138, %v2175
    %v2192 = vadd.f32 %v2139, %v2176
    %v2193 = vadd.f32 %v2140, %v2177
    %v2194 = vadd.f32 %v2141, %v2178
    %v2195 = vadd.f32 %v2142, %v2179
    %v2196 = vadd.f32 %v2143, %v2180
    %v2197 = vadd.f32 %v2144, %v2181
    %v2198 = vadd.f32 %v2145, %v2182
    %v2199 = vadd.f32 %v2146, %v2183
    %v2200 = vadd.f32 %v2147, %v2184
    %v2201 = vadd.f32 %v2148, %v2185
    %v2202 = vadd.f32 %v2149, %v2186
    %v2203 = vld [vmem:[%s597 + $0x2] sm:$0xff]
    %v2204 = vld [vmem:[%s597 + $0x12] sm:$0xff]
    %v2205 = vld [vmem:[%s597 + $0x22] sm:$0xff]
    %v2206 = vld [vmem:[%s597 + $0x32] sm:$0xff]
    %v2207 = vld [vmem:[%s597 + $0x42] sm:$0xff]
    %v2208 = vld [vmem:[%s597 + $0x52] sm:$0xff]
    %v2209 = vld [vmem:[%s597 + $0x62] sm:$0xff]
    %v2210 = vld [vmem:[%s597 + $0x72] sm:$0xff]
    %v2211 = vld [vmem:[%s597 + $0xa2] sm:$0xff]
    %v2212 = vld [vmem:[%s597 + $0xb2] sm:$0xff]
    %v2213 = vld [vmem:[%s597 + $0xc2] sm:$0xff]
    %v2214 = vld [vmem:[%s597 + $0xd2] sm:$0xff]
    %v2215 = vld [vmem:[%s597 + $0xe2] sm:$0xff]
    %v2216 = vld [vmem:[%s597 + $0xf2] sm:$0xff]
    %v2217 = vld [vmem:[%s597 + $0x102] sm:$0xff]
    %v2218 = vld [vmem:[%s597 + $0x112] sm:$0xff]
    %v2219 = vld [vmem:[%s1953 + $0x5] sm:$0x1]
    %v2220 = vlaneseq
    %v2221 = vshrl.u32 %v2220, 7
    %v2222 = vsub.s32 0, %v2221
    %v2223 = vrot.slane %v2219, %v2222
    %v2224 = vmul.f32 %v2203, %v2223
    %v2225 = vmul.f32 %v2204, %v2223
    %v2226 = vmul.f32 %v2205, %v2223
    %v2227 = vmul.f32 %v2206, %v2223
    %v2228 = vmul.f32 %v2207, %v2223
    %v2229 = vmul.f32 %v2208, %v2223
    %v2230 = vmul.f32 %v2209, %v2223
    %v2231 = vmul.f32 %v2210, %v2223
    %v2232 = vmul.f32 %v2211, %v2223
    %v2233 = vmul.f32 %v2212, %v2223
    %v2234 = vmul.f32 %v2213, %v2223
    %v2235 = vmul.f32 %v2214, %v2223
    %v2236 = vmul.f32 %v2215, %v2223
    %v2237 = vmul.f32 %v2216, %v2223
    %v2238 = vmul.f32 %v2217, %v2223
    %v2239 = vmul.f32 %v2218, %v2223
    %v2240 = vadd.f32 %v2187, %v2224
    %v2241 = vadd.f32 %v2188, %v2225
    %v2242 = vadd.f32 %v2189, %v2226
    %v2243 = vadd.f32 %v2190, %v2227
    %v2244 = vadd.f32 %v2191, %v2228
    %v2245 = vadd.f32 %v2192, %v2229
    %v2246 = vadd.f32 %v2193, %v2230
    %v2247 = vadd.f32 %v2194, %v2231
    %v2248 = vadd.f32 %v2195, %v2232
    %v2249 = vadd.f32 %v2196, %v2233
    %v2250 = vadd.f32 %v2197, %v2234
    %v2251 = vadd.f32 %v2198, %v2235
    %v2252 = vadd.f32 %v2199, %v2236
    %v2253 = vadd.f32 %v2200, %v2237
    %v2254 = vadd.f32 %v2201, %v2238
    %v2255 = vadd.f32 %v2202, %v2239
    %v2256 = vld [vmem:[%s964] sm:$0xff]
    %v2257 = vld [vmem:[%s964 + $0x10] sm:$0xff]
    %v2258 = vld [vmem:[%s964 + $0x20] sm:$0xff]
    %v2259 = vld [vmem:[%s964 + $0x30] sm:$0xff]
    %v2260 = vld [vmem:[%s964 + $0x40] sm:$0xff]
    %v2261 = vld [vmem:[%s964 + $0x50] sm:$0xff]
    %v2262 = vld [vmem:[%s964 + $0x60] sm:$0xff]
    %v2263 = vld [vmem:[%s964 + $0x70] sm:$0xff]
    %v2264 = vld [vmem:[%s964 + $0xa0] sm:$0xff]
    %v2265 = vld [vmem:[%s964 + $0xb0] sm:$0xff]
    %v2266 = vld [vmem:[%s964 + $0xc0] sm:$0xff]
    %v2267 = vld [vmem:[%s964 + $0xd0] sm:$0xff]
    %v2268 = vld [vmem:[%s964 + $0xe0] sm:$0xff]
    %v2269 = vld [vmem:[%s964 + $0xf0] sm:$0xff]
    %v2270 = vld [vmem:[%s964 + $0x100] sm:$0xff]
    %v2271 = vld [vmem:[%s964 + $0x110] sm:$0xff]
    %v2272 = vld [vmem:[%s1953 + $0x6] sm:$0x1]
    %v2273 = vlaneseq
    %v2274 = vshrl.u32 %v2273, 7
    %v2275 = vsub.s32 0, %v2274
    %v2276 = vrot.slane %v2272, %v2275
    %v2277 = vmul.f32 %v2256, %v2276
    %v2278 = vmul.f32 %v2257, %v2276
    %v2279 = vmul.f32 %v2258, %v2276
    %v2280 = vmul.f32 %v2259, %v2276
    %v2281 = vmul.f32 %v2260, %v2276
    %v2282 = vmul.f32 %v2261, %v2276
    %v2283 = vmul.f32 %v2262, %v2276
    %v2284 = vmul.f32 %v2263, %v2276
    %v2285 = vmul.f32 %v2264, %v2276
    %v2286 = vmul.f32 %v2265, %v2276
    %v2287 = vmul.f32 %v2266, %v2276
    %v2288 = vmul.f32 %v2267, %v2276
    %v2289 = vmul.f32 %v2268, %v2276
    %v2290 = vmul.f32 %v2269, %v2276
    %v2291 = vmul.f32 %v2270, %v2276
    %v2292 = vmul.f32 %v2271, %v2276
    %v2293 = vadd.f32 %v2240, %v2277
    %v2294 = vadd.f32 %v2241, %v2278
    %v2295 = vadd.f32 %v2242, %v2279
    %v2296 = vadd.f32 %v2243, %v2280
    %v2297 = vadd.f32 %v2244, %v2281
    %v2298 = vadd.f32 %v2245, %v2282
    %v2299 = vadd.f32 %v2246, %v2283
    %v2300 = vadd.f32 %v2247, %v2284
    %v2301 = vadd.f32 %v2248, %v2285
    %v2302 = vadd.f32 %v2249, %v2286
    %v2303 = vadd.f32 %v2250, %v2287
    %v2304 = vadd.f32 %v2251, %v2288
    %v2305 = vadd.f32 %v2252, %v2289
    %v2306 = vadd.f32 %v2253, %v2290
    %v2307 = vadd.f32 %v2254, %v2291
    %v2308 = vadd.f32 %v2255, %v2292
    %v2309 = vld [vmem:[%s964 + $0x1] sm:$0xff]
    %v2310 = vld [vmem:[%s964 + $0x11] sm:$0xff]
    %v2311 = vld [vmem:[%s964 + $0x21] sm:$0xff]
    %v2312 = vld [vmem:[%s964 + $0x31] sm:$0xff]
    %v2313 = vld [vmem:[%s964 + $0x41] sm:$0xff]
    %v2314 = vld [vmem:[%s964 + $0x51] sm:$0xff]
    %v2315 = vld [vmem:[%s964 + $0x61] sm:$0xff]
    %v2316 = vld [vmem:[%s964 + $0x71] sm:$0xff]
    %v2317 = vld [vmem:[%s964 + $0xa1] sm:$0xff]
    %v2318 = vld [vmem:[%s964 + $0xb1] sm:$0xff]
    %v2319 = vld [vmem:[%s964 + $0xc1] sm:$0xff]
    %v2320 = vld [vmem:[%s964 + $0xd1] sm:$0xff]
    %v2321 = vld [vmem:[%s964 + $0xe1] sm:$0xff]
    %v2322 = vld [vmem:[%s964 + $0xf1] sm:$0xff]
    %v2323 = vld [vmem:[%s964 + $0x101] sm:$0xff]
    %v2324 = vld [vmem:[%s964 + $0x111] sm:$0xff]
    %v2325 = vld [vmem:[%s1953 + $0x7] sm:$0x1]
    %v2326 = vlaneseq
    %v2327 = vshrl.u32 %v2326, 7
    %v2328 = vsub.s32 0, %v2327
    %v2329 = vrot.slane %v2325, %v2328
    %v2330 = vmul.f32 %v2309, %v2329
    %v2331 = vmul.f32 %v2310, %v2329
    %v2332 = vmul.f32 %v2311, %v2329
    %v2333 = vmul.f32 %v2312, %v2329
    %v2334 = vmul.f32 %v2313, %v2329
    %v2335 = vmul.f32 %v2314, %v2329
    %v2336 = vmul.f32 %v2315, %v2329
    %v2337 = vmul.f32 %v2316, %v2329
    %v2338 = vmul.f32 %v2317, %v2329
    %v2339 = vmul.f32 %v2318, %v2329
    %v2340 = vmul.f32 %v2319, %v2329
    %v2341 = vmul.f32 %v2320, %v2329
    %v2342 = vmul.f32 %v2321, %v2329
    %v2343 = vmul.f32 %v2322, %v2329
    %v2344 = vmul.f32 %v2323, %v2329
    %v2345 = vmul.f32 %v2324, %v2329
    %v2346 = vadd.f32 %v2293, %v2330
    %v2347 = vadd.f32 %v2294, %v2331
    %v2348 = vadd.f32 %v2295, %v2332
    %v2349 = vadd.f32 %v2296, %v2333
    %v2350 = vadd.f32 %v2297, %v2334
    %v2351 = vadd.f32 %v2298, %v2335
    %v2352 = vadd.f32 %v2299, %v2336
    %v2353 = vadd.f32 %v2300, %v2337
    %v2354 = vadd.f32 %v2301, %v2338
    %v2355 = vadd.f32 %v2302, %v2339
    %v2356 = vadd.f32 %v2303, %v2340
    %v2357 = vadd.f32 %v2304, %v2341
    %v2358 = vadd.f32 %v2305, %v2342
    %v2359 = vadd.f32 %v2306, %v2343
    %v2360 = vadd.f32 %v2307, %v2344
    %v2361 = vadd.f32 %v2308, %v2345
    %v2362 = vld [vmem:[%s964 + $0x2] sm:$0xff]
    %v2363 = vld [vmem:[%s964 + $0x12] sm:$0xff]
    %v2364 = vld [vmem:[%s964 + $0x22] sm:$0xff]
    %v2365 = vld [vmem:[%s964 + $0x32] sm:$0xff]
    %v2366 = vld [vmem:[%s964 + $0x42] sm:$0xff]
    %v2367 = vld [vmem:[%s964 + $0x52] sm:$0xff]
    %v2368 = vld [vmem:[%s964 + $0x62] sm:$0xff]
    %v2369 = vld [vmem:[%s964 + $0x72] sm:$0xff]
    %v2370 = vld [vmem:[%s964 + $0xa2] sm:$0xff]
    %v2371 = vld [vmem:[%s964 + $0xb2] sm:$0xff]
    %v2372 = vld [vmem:[%s964 + $0xc2] sm:$0xff]
    %v2373 = vld [vmem:[%s964 + $0xd2] sm:$0xff]
    %v2374 = vld [vmem:[%s964 + $0xe2] sm:$0xff]
    %v2375 = vld [vmem:[%s964 + $0xf2] sm:$0xff]
    %v2376 = vld [vmem:[%s964 + $0x102] sm:$0xff]
    %v2377 = vld [vmem:[%s964 + $0x112] sm:$0xff]
    %v2378 = vld [vmem:[%s1953 + $0x8] sm:$0x1]
    %v2379 = vlaneseq
    %v2380 = vshrl.u32 %v2379, 7
    %v2381 = vsub.s32 0, %v2380
    %v2382 = vrot.slane %v2378, %v2381
    %v2383 = vmul.f32 %v2362, %v2382
    %v2384 = vmul.f32 %v2363, %v2382
    %v2385 = vmul.f32 %v2364, %v2382
    %v2386 = vmul.f32 %v2365, %v2382
    %v2387 = vmul.f32 %v2366, %v2382
    %v2388 = vmul.f32 %v2367, %v2382
    %v2389 = vmul.f32 %v2368, %v2382
    %v2390 = vmul.f32 %v2369, %v2382
    %v2391 = vmul.f32 %v2370, %v2382
    %v2392 = vmul.f32 %v2371, %v2382
    %v2393 = vmul.f32 %v2372, %v2382
    %v2394 = vmul.f32 %v2373, %v2382
    %v2395 = vmul.f32 %v2374, %v2382
    %v2396 = vmul.f32 %v2375, %v2382
    %v2397 = vmul.f32 %v2376, %v2382
    %v2398 = vmul.f32 %v2377, %v2382
    %v2399 = vadd.f32 %v2346, %v2383
    %v2400 = vadd.f32 %v2347, %v2384
    %v2401 = vadd.f32 %v2348, %v2385
    %v2402 = vadd.f32 %v2349, %v2386
    %v2403 = vadd.f32 %v2350, %v2387
    %v2404 = vadd.f32 %v2351, %v2388
    %v2405 = vadd.f32 %v2352, %v2389
    %v2406 = vadd.f32 %v2353, %v2390
    %v2407 = vadd.f32 %v2354, %v2391
    %v2408 = vadd.f32 %v2355, %v2392
    %v2409 = vadd.f32 %v2356, %v2393
    %v2410 = vadd.f32 %v2357, %v2394
    %v2411 = vadd.f32 %v2358, %v2395
    %v2412 = vadd.f32 %v2359, %v2396
    %v2413 = vadd.f32 %v2360, %v2397
    %v2414 = vadd.f32 %v2361, %v2398
    %v2415 = vld [vmem:[%s2 + $0x7] sm:$0x1]
    %v2416 = vlaneseq
    %v2417 = vshrl.u32 %v2416, 7
    %v2418 = vsub.s32 0, %v2417
    %v2419 = vrot.slane %v2415, %v2418
    %v2420 = vadd.f32 %v2399, %v2419
    %v2421 = vadd.f32 %v2400, %v2419
    %v2422 = vadd.f32 %v2401, %v2419
    %v2423 = vadd.f32 %v2402, %v2419
    %v2424 = vadd.f32 %v2403, %v2419
    %v2425 = vadd.f32 %v2404, %v2419
    %v2426 = vadd.f32 %v2405, %v2419
    %v2427 = vadd.f32 %v2406, %v2419
    %v2428 = vadd.f32 %v2407, %v2419
    %v2429 = vadd.f32 %v2408, %v2419
    %v2430 = vadd.f32 %v2409, %v2419
    %v2431 = vadd.f32 %v2410, %v2419
    %v2432 = vadd.f32 %v2411, %v2419
    %v2433 = vadd.f32 %v2412, %v2419
    %v2434 = vadd.f32 %v2413, %v2419
    %v2435 = vadd.f32 %v2414, %v2419
    %v2436 = vmax.f32 %v2420, 0.0
    %v2437 = vmax.f32 %v2421, 0.0
    %v2438 = vmax.f32 %v2422, 0.0
    %v2439 = vmax.f32 %v2423, 0.0
    %v2440 = vmax.f32 %v2424, 0.0
    %v2441 = vmax.f32 %v2425, 0.0
    %v2442 = vmax.f32 %v2426, 0.0
    %v2443 = vmax.f32 %v2427, 0.0
    %v2444 = vmax.f32 %v2428, 0.0
    %v2445 = vmax.f32 %v2429, 0.0
    %v2446 = vmax.f32 %v2430, 0.0
    %v2447 = vmax.f32 %v2431, 0.0
    %v2448 = vmax.f32 %v2432, 0.0
    %v2449 = vmax.f32 %v2433, 0.0
    %v2450 = vmax.f32 %v2434, 0.0
    %v2451 = vmax.f32 %v2435, 0.0
    %v2452 = vld [vmem:[%s4] sm:$0xff]
    %v2453 = vld [vmem:[%s4 + $0x8] sm:$0xff]
    %v2454 = vld [vmem:[%s4 + $0x10] sm:$0xff]
    %v2455 = vld [vmem:[%s4 + $0x18] sm:$0xff]
    %2456 = vmatprep.subr.mxu0 0.0
    %2457 = vmatpush1.msra.mxu0 %v2436
    %2458 = vmatprep.subr.mxu0 0.0
    %2459 = vmatpush1.msra.mxu0 %v2437
    %2460 = vmatprep.subr.mxu0 0.0
    %2461 = vmatpush1.msra.mxu0 %v2438
    %2462 = vmatprep.subr.mxu0 0.0
    %2463 = vmatpush1.msra.mxu0 %v2439
    %2464 = vmatprep.subr.mxu0 0.0
    %2465 = vmatpush1.msra.mxu0 %v2440
    %2466 = vmatprep.subr.mxu0 0.0
    %2467 = vmatpush1.msra.mxu0 %v2441
    %2468 = vmatprep.subr.mxu0 0.0
    %2469 = vmatpush1.msra.mxu0 %v2442
    %2470 = vmatprep.subr.mxu0 0.0
    %2471 = vmatpush1.msra.mxu0 %v2443
    %2472 = vmatprep.subr.mxu0 0.0
    %2473 = vmatpush1.msra.mxu0 %v2444
    %2474 = vmatprep.subr.mxu0 0.0
    %2475 = vmatpush1.msra.mxu0 %v2445
    %2476 = vmatprep.subr.mxu0 0.0
    %2477 = vmatpush1.msra.mxu0 %v2446
    %2478 = vmatprep.subr.mxu0 0.0
    %2479 = vmatpush1.msra.mxu0 %v2447
    %2480 = vmatprep.subr.mxu0 0.0
    %2481 = vmatpush1.msra.mxu0 %v2448
    %2482 = vmatprep.subr.mxu0 0.0
    %2483 = vmatpush1.msra.mxu0 %v2449
    %2484 = vmatprep.subr.mxu0 0.0
    %2485 = vmatpush1.msra.mxu0 %v2450
    %2486 = vmatprep.subr.mxu0 0.0
    %2487 = vmatpush1.msra.mxu0 %v2451
    %2488 = vmatprep.subr.mxu0 0.0
    %2489 = vmatpush1.msra.mxu0 0.0
    %2490 = vmatprep.subr.mxu0 0.0
    %2491 = vmatpush1.msra.mxu0 0.0
    %2492 = vmatprep.subr.mxu0 0.0
    %2493 = vmatpush1.msra.mxu0 0.0
    %2494 = vmatprep.subr.mxu0 0.0
    %2495 = vmatpush1.msra.mxu0 0.0
    %2496 = vmatprep.subr.mxu0 0.0
    %2497 = vmatpush1.msra.mxu0 0.0
    %2498 = vmatprep.subr.mxu0 0.0
    %2499 = vmatpush1.msra.mxu0 0.0
    %2500 = vmatprep.subr.mxu0 0.0
    %2501 = vmatpush1.msra.mxu0 0.0
    %2502 = vmatprep.subr.mxu0 0.0
    %2503 = vmatpush1.msra.mxu0 0.0
    %2504 = vmatprep.subr.mxu0 0.0
    %2505 = vmatpush1.msra.mxu0 0.0
    %2506 = vmatprep.subr.mxu0 0.0
    %2507 = vmatpush1.msra.mxu0 0.0
    %2508 = vmatprep.subr.mxu0 0.0
    %2509 = vmatpush1.msra.mxu0 0.0
    %2510 = vmatprep.subr.mxu0 0.0
    %2511 = vmatpush1.msra.mxu0 0.0
    %2512 = vmatprep.subr.mxu0 0.0
    %2513 = vmatpush1.msra.mxu0 0.0
    %2514 = vmatprep.subr.mxu0 0.0
    %2515 = vmatpush1.msra.mxu0 0.0
    %2516 = vmatprep.subr.mxu0 0.0
    %2517 = vmatpush1.msra.mxu0 0.0
    %2518 = vmatprep.subr.mxu0 0.0
    %2519 = vmatpush1.msra.mxu0 0.0
    %2520 = vmatprep.mubr.f32.mxu0 0.0
    %2521 = vmatmul.mubr.f32.gmra.mrb[0].mxu0 %v2452
    %v2522 = vpop.f32.mrb[0].mxu0
    %v2523 = vadd.f32 0.0, %v2522
    %v2524 = vpop.f32.mrb[0].mxu0
    %2525 = vmatprep.mubr.f32.mxu0 0.0
    %2526 = vmatmul.mubr.f32.gmra.mrb[0].mxu0 %v2453
    %v2527 = vpop.f32.mrb[0].mxu0
    %v2528 = vadd.f32 0.0, %v2527
    %v2529 = vpop.f32.mrb[0].mxu0
    %2530 = vmatprep.mubr.f32.mxu0 0.0
    %2531 = vmatmul.mubr.f32.gmra.mrb[0].mxu0 %v2454
    %v2532 = vpop.f32.mrb[0].mxu0
    %v2533 = vadd.f32 0.0, %v2532
    %v2534 = vpop.f32.mrb[0].mxu0
    %2535 = vmatprep.mubr.f32.mxu0 0.0
    %2536 = vmatmul.mubr.f32.gmra.mrb[0].mxu0 %v2455
    %v2537 = vpop.f32.mrb[0].mxu0
    %v2538 = vadd.f32 0.0, %v2537
    %v2539 = vpop.f32.mrb[0].mxu0
    %2540 = vdwg.mxu0
    %s2541 = scalar_lea.vmem %s1, 384
    %v2542 = vld [vmem:[%s2541] sm:$0xf]
    %v2543 = vld [vmem:[%s2541 + $0x4] sm:$0xf]
    %v2544 = vld [vmem:[%s2541 + $0x8] sm:$0xf]
    %v2545 = vld [vmem:[%s2541 + $0xc] sm:$0xf]
    %v2546 = vld [vmem:[%s2541 + $0x10] sm:$0xf]
    %v2547 = vld [vmem:[%s2541 + $0x14] sm:$0xf]
    %v2548 = vld [vmem:[%s2541 + $0x18] sm:$0xf]
    %v2549 = vld [vmem:[%s2541 + $0x1c] sm:$0xf]
    %v2550 = vld [vmem:[%s2541 + $0x20] sm:$0xf]
    %v2551 = vld [vmem:[%s2541 + $0x24] sm:$0xf]
    %v2552 = vld [vmem:[%s2541 + $0x28] sm:$0xf]
    %v2553 = vld [vmem:[%s2541 + $0x2c] sm:$0xf]
    %v2554 = vld [vmem:[%s2541 + $0x30] sm:$0xf]
    %v2555 = vld [vmem:[%s2541 + $0x34] sm:$0xf]
    %v2556 = vld [vmem:[%s2541 + $0x38] sm:$0xf]
    %v2557 = vld [vmem:[%s2541 + $0x3c] sm:$0xf]
    %v2558 = vpack.c.bf16 %v2528, %v2523
    %v2559 = vpack.c.bf16 %v2538, %v2533
    %v2560 = vld [vmem:[%s2 + $0x8] sm:$0x1]
    %v2561 = vlaneseq
    %v2562 = vshrl.u32 %v2561, 7
    %v2563 = vsub.s32 0, %v2562
    %v2564 = vrot.slane %v2560, %v2563
    %v2581 = vunpack.c.l.b16 %v2542
    %v2582 = vunpack.c.l.b16 %v2543
    %v2583 = vunpack.c.l.b16 %v2544
    %v2584 = vunpack.c.l.b16 %v2545
    %v2585 = vunpack.c.l.b16 %v2546
    %v2586 = vunpack.c.l.b16 %v2547
    %v2587 = vunpack.c.l.b16 %v2548
    %v2588 = vunpack.c.l.b16 %v2549
    %v2589 = vunpack.c.l.b16 %v2550
    %v2590 = vunpack.c.l.b16 %v2551
    %v2591 = vunpack.c.l.b16 %v2552
    %v2592 = vunpack.c.l.b16 %v2553
    %v2593 = vunpack.c.l.b16 %v2554
    %v2594 = vunpack.c.l.b16 %v2555
    %v2595 = vunpack.c.l.b16 %v2556
    %v2596 = vunpack.c.l.b16 %v2557
    %v2597 = vpack.c.b16 %v2582, %v2581
    %v2598 = vpack.c.b16 %v2584, %v2583
    %v2599 = vpack.c.b16 %v2586, %v2585
    %v2600 = vpack.c.b16 %v2588, %v2587
    %v2601 = vpack.c.b16 %v2590, %v2589
    %v2602 = vpack.c.b16 %v2592, %v2591
    %v2603 = vpack.c.b16 %v2594, %v2593
    %v2604 = vpack.c.b16 %v2596, %v2595
    %2613 = vmatprep.subr.bf16.mxu0 0
    %2614 = vmatpush1.bf16.msra.mxu0 %v2597
    %2615 = vmatprep.subr.bf16.mxu0 0
    %2616 = vmatpush1.bf16.msra.mxu0 %v2598
    %2617 = vmatprep.subr.bf16.mxu0 0
    %2618 = vmatpush1.bf16.msra.mxu0 %v2599
    %2619 = vmatprep.subr.bf16.mxu0 0
    %2620 = vmatpush1.bf16.msra.mxu0 %v2600
    %2621 = vmatprep.subr.bf16.mxu0 0
    %2622 = vmatpush1.bf16.msra.mxu0 %v2601
    %2623 = vmatprep.subr.bf16.mxu0 0
    %2624 = vmatpush1.bf16.msra.mxu0 %v2602
    %2625 = vmatprep.subr.bf16.mxu0 0
    %2626 = vmatpush1.bf16.msra.mxu0 %v2603
    %2627 = vmatprep.subr.bf16.mxu0 0
    %2628 = vmatpush1.bf16.msra.mxu0 %v2604
    %2629 = vmatprep.subr.bf16.mxu0 0
    %2630 = vmatpush1.bf16.msra.mxu0 0
    %2631 = vmatprep.subr.bf16.mxu0 0
    %2632 = vmatpush1.bf16.msra.mxu0 0
    %2633 = vmatprep.subr.bf16.mxu0 0
    %2634 = vmatpush1.bf16.msra.mxu0 0
    %2635 = vmatprep.subr.bf16.mxu0 0
    %2636 = vmatpush1.bf16.msra.mxu0 0
    %2637 = vmatprep.subr.bf16.mxu0 0
    %2638 = vmatpush1.bf16.msra.mxu0 0
    %2639 = vmatprep.subr.bf16.mxu0 0
    %2640 = vmatpush1.bf16.msra.mxu0 0
    %2641 = vmatprep.subr.bf16.mxu0 0
    %2642 = vmatpush1.bf16.msra.mxu0 0
    %2643 = vmatprep.subr.bf16.mxu0 0
    %2644 = vmatpush1.bf16.msra.mxu0 0
    %2645 = vmatprep.mubr.bf16.mxu0 0
    %2646 = vmatmul.mubr.bf16.gmra.mrb[0].mxu0 %v2558
    %v2647 = vpop.f32.mrb[0].mxu0
    %v2648 = vadd.f32 %v2564, %v2647
    %v2649 = vpop.f32.mrb[0].mxu0
    %v2650 = vpop.f32.mrb[0].mxu0
    %v2651 = vadd.f32 %v2564, %v2650
    %v2652 = vpop.f32.mrb[0].mxu0
    %2653 = vmatprep.mubr.bf16.mxu0 0
    %2654 = vmatmul.mubr.bf16.gmra.mrb[0].mxu0 %v2559
    %v2655 = vpop.f32.mrb[0].mxu0
    %v2656 = vadd.f32 %v2564, %v2655
    %v2657 = vpop.f32.mrb[0].mxu0
    %v2658 = vpop.f32.mrb[0].mxu0
    %v2659 = vadd.f32 %v2564, %v2658
    %v2660 = vpop.f32.mrb[0].mxu0
    %2661 = vdwg.mxu0
    %s2662 = scalar_lea.vmem %s1, 448
    %v2663 = vld [vmem:[%s2662] sm:$0xf]
    %v2664 = vld [vmem:[%s2662 + $0x4] sm:$0xf]
    %v2665 = vld [vmem:[%s2662 + $0x8] sm:$0xf]
    %v2666 = vld [vmem:[%s2662 + $0xc] sm:$0xf]
    %v2667 = vld [vmem:[%s2662 + $0x10] sm:$0xf]
    %v2668 = vld [vmem:[%s2662 + $0x14] sm:$0xf]
    %v2669 = vld [vmem:[%s2662 + $0x18] sm:$0xf]
    %v2670 = vld [vmem:[%s2662 + $0x1c] sm:$0xf]
    %v2671 = vld [vmem:[%s2662 + $0x20] sm:$0xf]
    %v2672 = vld [vmem:[%s2662 + $0x24] sm:$0xf]
    %v2673 = vld [vmem:[%s2662 + $0x28] sm:$0xf]
    %v2674 = vld [vmem:[%s2662 + $0x2c] sm:$0xf]
    %v2675 = vld [vmem:[%s2662 + $0x30] sm:$0xf]
    %v2676 = vld [vmem:[%s2662 + $0x34] sm:$0xf]
    %v2677 = vld [vmem:[%s2662 + $0x38] sm:$0xf]
    %v2678 = vld [vmem:[%s2662 + $0x3c] sm:$0xf]
    %v2679 = vpack.c.bf16 %v2651, %v2648
    %v2680 = vpack.c.bf16 %v2659, %v2656
    %v2681 = vld [vmem:[%s2 + $0x9] sm:$0x1]
    %v2682 = vlaneseq
    %v2683 = vshrl.u32 %v2682, 7
    %v2684 = vsub.s32 0, %v2683
    %v2685 = vrot.slane %v2681, %v2684
    %v2702 = vunpack.c.l.b16 %v2663
    %v2703 = vunpack.c.l.b16 %v2664
    %v2704 = vunpack.c.l.b16 %v2665
    %v2705 = vunpack.c.l.b16 %v2666
    %v2706 = vunpack.c.l.b16 %v2667
    %v2707 = vunpack.c.l.b16 %v2668
    %v2708 = vunpack.c.l.b16 %v2669
    %v2709 = vunpack.c.l.b16 %v2670
    %v2710 = vunpack.c.l.b16 %v2671
    %v2711 = vunpack.c.l.b16 %v2672
    %v2712 = vunpack.c.l.b16 %v2673
    %v2713 = vunpack.c.l.b16 %v2674
    %v2714 = vunpack.c.l.b16 %v2675
    %v2715 = vunpack.c.l.b16 %v2676
    %v2716 = vunpack.c.l.b16 %v2677
    %v2717 = vunpack.c.l.b16 %v2678
    %v2718 = vpack.c.b16 %v2703, %v2702
    %v2719 = vpack.c.b16 %v2705, %v2704
    %v2720 = vpack.c.b16 %v2707, %v2706
    %v2721 = vpack.c.b16 %v2709, %v2708
    %v2722 = vpack.c.b16 %v2711, %v2710
    %v2723 = vpack.c.b16 %v2713, %v2712
    %v2724 = vpack.c.b16 %v2715, %v2714
    %v2725 = vpack.c.b16 %v2717, %v2716
    %2734 = vmatprep.subr.bf16.mxu0 0
    %2735 = vmatpush1.bf16.msra.mxu0 %v2718
    %2736 = vmatprep.subr.bf16.mxu0 0
    %2737 = vmatpush1.bf16.msra.mxu0 %v2719
    %2738 = vmatprep.subr.bf16.mxu0 0
    %2739 = vmatpush1.bf16.msra.mxu0 %v2720
    %2740 = vmatprep.subr.bf16.mxu0 0
    %2741 = vmatpush1.bf16.msra.mxu0 %v2721
    %2742 = vmatprep.subr.bf16.mxu0 0
    %2743 = vmatpush1.bf16.msra.mxu0 %v2722
    %2744 = vmatprep.subr.bf16.mxu0 0
    %2745 = vmatpush1.bf16.msra.mxu0 %v2723
    %2746 = vmatprep.subr.bf16.mxu0 0
    %2747 = vmatpush1.bf16.msra.mxu0 %v2724
    %2748 = vmatprep.subr.bf16.mxu0 0
    %2749 = vmatpush1.bf16.msra.mxu0 %v2725
    %2750 = vmatprep.subr.bf16.mxu0 0
    %2751 = vmatpush1.bf16.msra.mxu0 0
    %2752 = vmatprep.subr.bf16.mxu0 0
    %2753 = vmatpush1.bf16.msra.mxu0 0
    %2754 = vmatprep.subr.bf16.mxu0 0
    %2755 = vmatpush1.bf16.msra.mxu0 0
    %2756 = vmatprep.subr.bf16.mxu0 0
    %2757 = vmatpush1.bf16.msra.mxu0 0
    %2758 = vmatprep.subr.bf16.mxu0 0
    %2759 = vmatpush1.bf16.msra.mxu0 0
    %2760 = vmatprep.subr.bf16.mxu0 0
    %2761 = vmatpush1.bf16.msra.mxu0 0
    %2762 = vmatprep.subr.bf16.mxu0 0
    %2763 = vmatpush1.bf16.msra.mxu0 0
    %2764 = vmatprep.subr.bf16.mxu0 0
    %2765 = vmatpush1.bf16.msra.mxu0 0
    %2766 = vmatprep.mubr.bf16.mxu0 0
    %2767 = vmatmul.mubr.bf16.gmra.mrb[0].mxu0 %v2679
    %v2768 = vpop.f32.mrb[0].mxu0
    %v2769 = vadd.f32 %v2685, %v2768
    %v2770 = vpop.f32.mrb[0].mxu0
    %v2771 = vpop.f32.mrb[0].mxu0
    %v2772 = vadd.f32 %v2685, %v2771
    %v2773 = vpop.f32.mrb[0].mxu0
    %2774 = vmatprep.mubr.bf16.mxu0 0
    %2775 = vmatmul.mubr.bf16.gmra.mrb[0].mxu0 %v2680
    %v2776 = vpop.f32.mrb[0].mxu0
    %v2777 = vadd.f32 %v2685, %v2776
    %v2778 = vpop.f32.mrb[0].mxu0
    %v2779 = vpop.f32.mrb[0].mxu0
    %v2780 = vadd.f32 %v2685, %v2779
    %v2781 = vpop.f32.mrb[0].mxu0
    %2782 = vdwg.mxu0
    %v2783 = vmul.f32 %v2769, %v252
    %v2784 = vmul.f32 %v2772, %v252
    %v2785 = vmul.f32 %v2777, %v252
    %v2786 = vmul.f32 %v2780, %v252
    %v2787 = vadd.f32 %v2783, 0.5
    %v2788 = vadd.f32 %v2784, 0.5
    %v2789 = vadd.f32 %v2785, 0.5
    %v2790 = vadd.f32 %v2786, 0.5
    %v2791 = vmax.f32 %v2787, 0.0
    %v2792 = vmax.f32 %v2788, 0.0
    %v2793 = vmax.f32 %v2789, 0.0
    %v2794 = vmax.f32 %v2790, 0.0
    %v2795 = vmin.f32 %v2791, 1.0
    %v2796 = vmin.f32 %v2792, 1.0
    %v2797 = vmin.f32 %v2793, 1.0
    %v2798 = vmin.f32 %v2794, 1.0
    %v2799 = vmul.f32 %v2769, %v2795
    %v2800 = vmul.f32 %v2772, %v2796
    %v2801 = vmul.f32 %v2777, %v2797
    %v2802 = vmul.f32 %v2780, %v2798
    %v2807 = vcombine.high %v2799, %v2799
    %v2808 = vcombine.high %v2800, %v2800
    %v2809 = vcombine.high %v2801, %v2801
    %v2810 = vcombine.high %v2802, %v2802
    %vm2815 = vcmask 1043456
    %v2816 = vsel %vm2815, %v2799, 0.0
    %v2817 = vsel %vm2815, %v2807, 0.0
    %v2818 = vadd.f32 %v2816, %v2817
    %v2819 = vsel %vm2815, %v2800, 0.0
    %v2820 = vadd.f32 %v2818, %v2819
    %v2821 = vsel %vm2815, %v2808, 0.0
    %v2822 = vadd.f32 %v2820, %v2821
    %v2823 = vsel %vm2815, %v2801, 0.0
    %v2824 = vsel %vm2815, %v2809, 0.0
    %v2825 = vadd.f32 %v2823, %v2824
    %v2826 = vsel %vm2815, %v2802, 0.0
    %v2827 = vadd.f32 %v2825, %v2826
    %v2828 = vsel %vm2815, %v2810, 0.0
    %v2829 = vadd.f32 %v2827, %v2828
    %v2830 = vrcp.pop 4.0
    %v2831 = vmul.f32 %v2822, %v2830
    %v2832 = vmul.f32 %v2829, %v2830
    %v2833 = vsel %vm2815, %v2831, -inf
    %v2834 = vrot.slane %v2833, 4
    %v2835 = vmax.f32 %v2833, %v2834
    %v2836 = vrot.slane %v2835, 2
    %v2837 = vmax.f32 %v2835, %v2836
    %v2838 = vrot.slane %v2837, 1
    %v2839 = vmax.f32 %v2837, %v2838
    %v2840 = vsel %vm2815, %v2832, -inf
    %v2841 = vrot.slane %v2840, 4
    %v2842 = vmax.f32 %v2840, %v2841
    %v2843 = vrot.slane %v2842, 2
    %v2844 = vmax.f32 %v2842, %v2843
    %v2845 = vrot.slane %v2844, 1
    %v2846 = vmax.f32 %v2844, %v2845
    %v2847 = vsel %vm2815, %v2831, 0.0
    %v2848 = vrot.slane %v2847, 4
    %v2849 = vadd.f32 %v2847, %v2848
    %v2850 = vrot.slane %v2849, 2
    %v2851 = vadd.f32 %v2849, %v2850
    %v2852 = vrot.slane %v2851, 1
    %v2853 = vadd.f32 %v2851, %v2852
    %v2854 = vsel %vm2815, %v2832, 0.0
    %v2855 = vrot.slane %v2854, 4
    %v2856 = vadd.f32 %v2854, %v2855
    %v2857 = vrot.slane %v2856, 2
    %v2858 = vadd.f32 %v2856, %v2857
    %v2859 = vrot.slane %v2858, 1
    %v2860 = vadd.f32 %v2858, %v2859
    %v2861 = vmul.f32 %v2853, %v2830
    %v2862 = vmul.f32 %v2860, %v2830
    %v2863 = vadd.f32 %v2839, %v2861
    %v2864 = vadd.f32 %v2846, %v2862
    %v2867 = vsel %vm1282, %v2864, %v2863
    %2869 = vst [vmem:[#allocation3] sm:$0x3] %v2867
    // Predicated region
    $region22: #{mobilenetv3_forward.1} parent=1 // pred_check
      _
    $region23: #{mobilenetv3_forward.1} parent=1 // pred_check_branch
      %2871 = sbr.rel (0) target = $region25
    $region24: #{mobilenetv3_forward.1} parent=1 // pred_region
      %s2873 = ssub.s32 32, 32
      %2874 = vsyncadd [#allocation4], %s2873
      %s2876 = sshll.u32 [#allocation3], 4
      %s2877 = int_to_ptr.vmem [resolvable:$true] %s2876
      %2879 = dma.vmem_to_hbm [thread:$0]  %s2877, 32, %s5, [#allocation4]
    $region25: #{mobilenetv3_forward.1} parent=1 // pred_fallthru
      _
    // Predicated region
    $region26: #{mobilenetv3_forward.1} parent=1 // pred_check
      _
    $region27: #{mobilenetv3_forward.1} parent=1 // pred_check_branch
      %2881 = sbr.rel (0) target = $region29
    $region28: #{mobilenetv3_forward.1} parent=1 // pred_region
      %2882 = dma.done [#allocation4], 32
    $region29: #{mobilenetv3_forward.1} parent=1 // pred_fallthru
      _
    %2883 = vsyncpa [#allocation4], 1

</llo_original>
